<compile_context>
chip_gen: v5e
topology: v5e:2x2
jax: 0.10.0
libtpu: 0.0.40
codegen_flags: <defaults>
</compile_context>

<pallas_src>
import functools

import jax
import jax.numpy as jnp
from jax.experimental import pallas as pl
from jax.experimental.pallas import tpu as pltpu

# --- architecture constants (consistent with the module, small emb for the demo) ---
EMB = 96                       # emb_size, divisible by nhead=6
NHEAD = 6
HEAD_DIM = EMB // NHEAD        # 16
FF = 512                       # dim_feedforward
HIDDEN = 128                   # hidden_nodes
NUM_FRAMES = 7                 # num_frames -> sequence length 8 with cls token
TASK = "sum"
OUT_SIZE = {"all": 2, "sum": 3, "blue": 1, "yellow": 1, "or": 1}[TASK]
LN_EPS = 1e-5


def _layernorm(x, w, b):
    mu = jnp.mean(x, axis=-1, keepdims=True)
    xc = x - mu
    var = jnp.mean(xc * xc, axis=-1, keepdims=True)
    return xc * jax.lax.rsqrt(var + LN_EPS) * w + b


def vivit_kernel(x_ref, pos_ref,
                 g_ref, gt_ref,
                 wq_ref, bq_ref, wk_ref, bk_ref, wv_ref, bv_ref,
                 wo_ref, bo_ref,
                 ln1w_ref, ln1b_ref,
                 w1_ref, b1_ref, w2_ref, b2_ref,
                 ln2w_ref, ln2b_ref,
                 h1w_ref, h1b_ref, h2w_ref, h2b_ref, h3w_ref, h3b_ref,
                 out_ref, *, BB, S):
    D = EMB
    rows = BB * S
    f32 = jnp.float32
    bf16 = jnp.bfloat16

    # tokens + positional embedding (pos broadcast over the batch block), f32
    xf = x_ref[...] + pos_ref[...]                                   # (BB, S, D)
    xf_flat = xf.reshape(rows, D)
    x_cls = xf[:, 0, :]                                              # (BB, D) residual for CLS rows

    x_mm = xf_flat.astype(bf16)
    xcls_mm = x_cls.astype(bf16)

    # ----- projections: K/V over all tokens, Q only over the CLS row of each sequence -----
    # (weights pre-transposed on the host, attention scale folded into wq/bq)
    k = jnp.dot(x_mm, wk_ref[...], preferred_element_type=f32) + bk_ref[...]       # (rows, D)
    v = jnp.dot(x_mm, wv_ref[...], preferred_element_type=f32) + bv_ref[...]       # (rows, D)
    q = jnp.dot(xcls_mm, wq_ref[...], preferred_element_type=f32) + bq_ref[...]    # (BB, D)

    # ----- single-query multi-head attention, no per-head loop -----
    # per-head score  = blockwise lane reduction of q*k via indicator matmul G (D, NHEAD)
    # per-head weight = lane expansion of softmax probs via GT (NHEAD, D)
    k3 = k.reshape(BB, S, D)
    qk = (q[:, None, :] * k3).reshape(rows, D)                                      # (rows, D)
    s_h = jnp.dot(qk, g_ref[...], preferred_element_type=f32).reshape(BB, S, NHEAD)
    s_h = s_h - jnp.max(s_h, axis=1, keepdims=True)
    p = jnp.exp(s_h)
    # approx reciprocal: EUP slot, intentional small precision trade (within tolerance)
    p = p * pl.reciprocal(jnp.sum(p, axis=1, keepdims=True), approx=True)           # (BB, S, NHEAD)
    p_exp = jnp.dot(p.reshape(rows, NHEAD), gt_ref[...], preferred_element_type=f32)  # (rows, D)
    ctx = jnp.sum((p_exp * v).reshape(BB, S, D), axis=1)                            # (BB, D)
    attn = jnp.dot(ctx.astype(bf16), wo_ref[...], preferred_element_type=f32) + bo_ref[...]

    # residual + LayerNorm1 (post-norm, PyTorch default norm_first=False), CLS rows only
    h1 = _layernorm(x_cls + attn, ln1w_ref[...], ln1b_ref[...])                     # (BB, D)

    # ----- feed-forward block, CLS rows only -----
    ff = jnp.dot(h1.astype(bf16), w1_ref[...], preferred_element_type=f32) + b1_ref[...]
    ff = jnp.maximum(ff, 0.0)
    ff = jnp.dot(ff.astype(bf16), w2_ref[...], preferred_element_type=f32) + b2_ref[...]
    h2 = _layernorm(h1 + ff, ln2w_ref[...], ln2b_ref[...])                          # (BB, D)

    # ----- MLP head on the CLS rows -----
    z = jnp.dot(h2.astype(bf16), h1w_ref[...], preferred_element_type=f32) + h1b_ref[...]
    z = jnp.maximum(z, 0.0)
    z = jnp.dot(z, h2w_ref[...], preferred_element_type=f32) + h2b_ref[...]
    z = jnp.maximum(z, 0.0)
    z = jnp.dot(z, h3w_ref[...], preferred_element_type=f32) + h3b_ref[...]
    out_ref[...] = z                                                                # (BB, OUT)


def prepare_weights(p):
    """Host-side prep: pre-transpose, fold the attention scale, cast big matmul weights
    to bf16 (f32 accumulation in-kernel), and build the head block-indicator matrix."""
    scale = 1.0 / (HEAD_DIM ** 0.5)
    bf = lambda w: w.astype(jnp.bfloat16)
    lane = jnp.arange(EMB)[:, None] // HEAD_DIM                     # (D, 1)
    head = jnp.arange(NHEAD)[None, :]                               # (1, NHEAD)
    g = (lane == head).astype(jnp.float32)                          # (D, NHEAD) block indicator
    return [
        g, g.T,                                                     # (D, NHEAD), (NHEAD, D)
        bf(p["wq"].T * scale), p["bq"] * scale,                     # (D, D), (1, D)
        bf(p["wk"].T), p["bk"],
        bf(p["wv"].T), p["bv"],
        bf(p["wo"].T), p["bo"],
        p["ln1w"], p["ln1b"],
        bf(p["w1"].T), p["b1"],                                     # (D, FF), (1, FF)
        bf(p["w2"].T), p["b2"],                                     # (FF, D), (1, D)
        p["ln2w"], p["ln2b"],
        bf(p["h1w"].T), p["h1b"],                                   # (D, H)
        p["h2w"].T, p["h2b"],                                       # (H, H//4)   tiny, keep f32
        p["h3w"].T, p["h3b"],                                       # (H//4, OUT) tiny, keep f32
    ]


def vivit_forward(x, params, batch_block=32):
    """x: (B, T, D) float32.  Returns (B, OUT_SIZE) logits == head(transformer(x)[:, 0])."""
    B, T, D = x.shape
    assert D == EMB and T == NUM_FRAMES
    S = T + 1
    bb = max(1, min(batch_block, B))
    pad = (-B) % bb
    Bp = B + pad

    # glue: prepend cls token (everything else is done in-kernel), pad the batch if needed
    cls = jnp.broadcast_to(params["cls_token"], (B, 1, D)).astype(jnp.float32)
    xt = jnp.concatenate([cls, x.astype(jnp.float32)], axis=1)              # (B, S, D)
    if pad:
        xt = jnp.concatenate([xt, jnp.zeros((pad, S, D), jnp.float32)], axis=0)
    pos = params["pos_embed"][0, :S, :].astype(jnp.float32)                 # (S, D)

    weights = prepare_weights(params)

    vmem = pl.BlockSpec(memory_space=pltpu.MemorySpace.VMEM)   # whole array, VMEM-resident
    grid = (Bp // bb,)

    out = pl.pallas_call(
        functools.partial(vivit_kernel, BB=bb, S=S),
        grid=grid,
        in_specs=[pl.BlockSpec((bb, S, D), lambda i: (i, 0, 0)),            # x tile
                  vmem]                                                     # pos
                 + [vmem] * len(weights),                                   # weights / indicators
        out_specs=pl.BlockSpec((bb, OUT_SIZE), lambda i: (i, 0)),
        out_shape=jax.ShapeDtypeStruct((Bp, OUT_SIZE), jnp.float32),
        compiler_params=pltpu.CompilerParams(
            dimension_semantics=("parallel",)),  # batch tiles shard across v7x's 2 TCs
    )(xt, pos, *weights)
    return out[:B]


# ---------------- pure-JAX reference (mirrors PyTorch eval-mode forward) ----------------
def vivit_reference(x, params):
    B, T, D = x.shape
    S = T + 1
    cls = jnp.broadcast_to(params["cls_token"], (B, 1, D))
    h = jnp.concatenate([cls, x], axis=1) + params["pos_embed"][:, :S, :]
    q = h @ params["wq"].T + params["bq"]
    k = h @ params["wk"].T + params["bk"]
    v = h @ params["wv"].T + params["bv"]

    def split(t):
        return t.reshape(B, S, NHEAD, HEAD_DIM).transpose(0, 2, 1, 3)

    q, k, v = split(q), split(k), split(v)
    s = jnp.einsum('bhqd,bhkd->bhqk', q, k) / (HEAD_DIM ** 0.5)
    p = jax.nn.softmax(s, axis=-1)
    o = jnp.einsum('bhqk,bhkd->bhqd', p, v).transpose(0, 2, 1, 3).reshape(B, S, D)
    o = o @ params["wo"].T + params["bo"]
    h1 = _layernorm(h + o, params["ln1w"], params["ln1b"])
    ff = jax.nn.relu(h1 @ params["w1"].T + params["b1"]) @ params["w2"].T + params["b2"]
    h2 = _layernorm(h1 + ff, params["ln2w"], params["ln2b"])
    z = jax.nn.relu(h2[:, 0, :] @ params["h1w"].T + params["h1b"])
    z = jax.nn.relu(z @ params["h2w"].T + params["h2b"])
    return z @ params["h3w"].T + params["h3b"]


def _xavier(key, shape):
    fan_out, fan_in = shape
    limit = (6.0 / (fan_in + fan_out)) ** 0.5
    return jax.random.uniform(key, shape, jnp.float32, -limit, limit)


def make_params(key):
    ks = jax.random.split(key, 12)
    D, H = EMB, HIDDEN
    z = lambda *s: jnp.zeros(s, jnp.float32)
    return {
        "cls_token": jax.random.normal(ks[0], (1, 1, D), jnp.float32),
        "pos_embed": jax.random.normal(ks[1], (1, NUM_FRAMES + 1, D), jnp.float32),
        # self_attn in_proj split into q/k/v; biases zero (matches constant_(0.0) init)
        "wq": _xavier(ks[2], (D, D)), "wk": _xavier(ks[3], (D, D)), "wv": _xavier(ks[4], (D, D)),
        "bq": z(1, D), "bk": z(1, D), "bv": z(1, D),
        "wo": _xavier(ks[5], (D, D)), "bo": z(1, D),
        "ln1w": jnp.ones((1, D), jnp.float32), "ln1b": z(1, D),
        "w1": _xavier(ks[6], (FF, D)), "b1": z(1, FF),
        "w2": _xavier(ks[7], (D, FF)), "b2": z(1, D),
        "ln2w": jnp.ones((1, D), jnp.float32), "ln2b": z(1, D),
        # head: Linear(D,128) -> ReLU -> Linear(128,32) -> ReLU -> Linear(32,OUT_SIZE)
        "h1w": _xavier(ks[8], (H, D)), "h1b": z(1, H),
        "h2w": _xavier(ks[9], (H // 4, H)), "h2b": z(1, H // 4),
        "h3w": _xavier(ks[10], (OUT_SIZE, H // 4)), "h3b": z(1, OUT_SIZE),
    }


if __name__ == "__main__":
    key = jax.random.PRNGKey(0)
    pkey, xkey = jax.random.split(key)
    params = make_params(pkey)

    B = 128                                   # 4 grid steps of 32 sequences each
    x = jax.random.normal(xkey, (B, NUM_FRAMES, EMB), jnp.float32)   # (B, T, D)

    out = vivit_forward(x, params, batch_block=32)
    jax.block_until_ready(out)
    assert out.shape == (B, OUT_SIZE)

    ref = vivit_reference(x, params)
    err = float(jnp.max(jnp.abs(out - ref)))
    assert jnp.allclose(out, ref, atol=5e-2, rtol=5e-2), f"max abs err {err}"
    print("KERNEL_OK")
</pallas_src>

<mosaic_0001>
module attributes {stable_mosaic.version = 11 : i64} {
  func.func @vivit_kernel(%arg0: i32, %arg1: memref<32x8x96xf32, #tpu.memory_space<vmem>>, %arg2: memref<8x96xf32, #tpu.memory_space<vmem>>, %arg3: memref<96x6xf32, #tpu.memory_space<vmem>>, %arg4: memref<6x96xf32, #tpu.memory_space<vmem>>, %arg5: memref<96x96xbf16, #tpu.memory_space<vmem>>, %arg6: memref<1x96xf32, #tpu.memory_space<vmem>>, %arg7: memref<96x96xbf16, #tpu.memory_space<vmem>>, %arg8: memref<1x96xf32, #tpu.memory_space<vmem>>, %arg9: memref<96x96xbf16, #tpu.memory_space<vmem>>, %arg10: memref<1x96xf32, #tpu.memory_space<vmem>>, %arg11: memref<96x96xbf16, #tpu.memory_space<vmem>>, %arg12: memref<1x96xf32, #tpu.memory_space<vmem>>, %arg13: memref<1x96xf32, #tpu.memory_space<vmem>>, %arg14: memref<1x96xf32, #tpu.memory_space<vmem>>, %arg15: memref<96x512xbf16, #tpu.memory_space<vmem>>, %arg16: memref<1x512xf32, #tpu.memory_space<vmem>>, %arg17: memref<512x96xbf16, #tpu.memory_space<vmem>>, %arg18: memref<1x96xf32, #tpu.memory_space<vmem>>, %arg19: memref<1x96xf32, #tpu.memory_space<vmem>>, %arg20: memref<1x96xf32, #tpu.memory_space<vmem>>, %arg21: memref<96x128xbf16, #tpu.memory_space<vmem>>, %arg22: memref<1x128xf32, #tpu.memory_space<vmem>>, %arg23: memref<128x32xf32, #tpu.memory_space<vmem>>, %arg24: memref<1x32xf32, #tpu.memory_space<vmem>>, %arg25: memref<32x3xf32, #tpu.memory_space<vmem>>, %arg26: memref<1x3xf32, #tpu.memory_space<vmem>>, %arg27: memref<32x3xf32, #tpu.memory_space<vmem>>) attributes {dimension_semantics = [#tpu.dimension_semantics<parallel>], iteration_bounds = array<i64: 4>, scalar_prefetch = 0 : i64, scratch_operands = 0 : i64, tpu.core_type = #tpu.core_type<tc>, window_params = [{transform_indices = @transform_0, window_bounds = array<i64: 32, 8, 96>}, {pipeline_mode = #tpu.pipeline_mode<synchronous>, transform_indices = @transform_1, window_bounds = array<i64: 8, 96>}, {pipeline_mode = #tpu.pipeline_mode<synchronous>, transform_indices = @transform_2, window_bounds = array<i64: 96, 6>}, {pipeline_mode = #tpu.pipeline_mode<synchronous>, transform_indices = @transform_3, window_bounds = array<i64: 6, 96>}, {pipeline_mode = #tpu.pipeline_mode<synchronous>, transform_indices = @transform_4, window_bounds = array<i64: 96, 96>}, {pipeline_mode = #tpu.pipeline_mode<synchronous>, transform_indices = @transform_5, window_bounds = array<i64: 1, 96>}, {pipeline_mode = #tpu.pipeline_mode<synchronous>, transform_indices = @transform_6, window_bounds = array<i64: 96, 96>}, {pipeline_mode = #tpu.pipeline_mode<synchronous>, transform_indices = @transform_7, window_bounds = array<i64: 1, 96>}, {pipeline_mode = #tpu.pipeline_mode<synchronous>, transform_indices = @transform_8, window_bounds = array<i64: 96, 96>}, {pipeline_mode = #tpu.pipeline_mode<synchronous>, transform_indices = @transform_9, window_bounds = array<i64: 1, 96>}, {pipeline_mode = #tpu.pipeline_mode<synchronous>, transform_indices = @transform_10, window_bounds = array<i64: 96, 96>}, {pipeline_mode = #tpu.pipeline_mode<synchronous>, transform_indices = @transform_11, window_bounds = array<i64: 1, 96>}, {pipeline_mode = #tpu.pipeline_mode<synchronous>, transform_indices = @transform_12, window_bounds = array<i64: 1, 96>}, {pipeline_mode = #tpu.pipeline_mode<synchronous>, transform_indices = @transform_13, window_bounds = array<i64: 1, 96>}, {pipeline_mode = #tpu.pipeline_mode<synchronous>, transform_indices = @transform_14, window_bounds = array<i64: 96, 512>}, {pipeline_mode = #tpu.pipeline_mode<synchronous>, transform_indices = @transform_15, window_bounds = array<i64: 1, 512>}, {pipeline_mode = #tpu.pipeline_mode<synchronous>, transform_indices = @transform_16, window_bounds = array<i64: 512, 96>}, {pipeline_mode = #tpu.pipeline_mode<synchronous>, transform_indices = @transform_17, window_bounds = array<i64: 1, 96>}, {pipeline_mode = #tpu.pipeline_mode<synchronous>, transform_indices = @transform_18, window_bounds = array<i64: 1, 96>}, {pipeline_mode = #tpu.pipeline_mode<synchronous>, transform_indices = @transform_19, window_bounds = array<i64: 1, 96>}, {pipeline_mode = #tpu.pipeline_mode<synchronous>, transform_indices = @transform_20, window_bounds = array<i64: 96, 128>}, {pipeline_mode = #tpu.pipeline_mode<synchronous>, transform_indices = @transform_21, window_bounds = array<i64: 1, 128>}, {pipeline_mode = #tpu.pipeline_mode<synchronous>, transform_indices = @transform_22, window_bounds = array<i64: 128, 32>}, {pipeline_mode = #tpu.pipeline_mode<synchronous>, transform_indices = @transform_23, window_bounds = array<i64: 1, 32>}, {pipeline_mode = #tpu.pipeline_mode<synchronous>, transform_indices = @transform_24, window_bounds = array<i64: 32, 3>}, {pipeline_mode = #tpu.pipeline_mode<synchronous>, transform_indices = @transform_25, window_bounds = array<i64: 1, 3>}, {transform_indices = @transform_26, window_bounds = array<i64: 32, 3>}]} {
    %c0 = arith.constant 0 : index
    %c0_0 = arith.constant 0 : index
    %c0_1 = arith.constant 0 : index
    %0 = vector.load %arg1[%c0, %c0_0, %c0_1] : memref<32x8x96xf32, #tpu.memory_space<vmem>>, vector<32x8x96xf32>
    %c0_2 = arith.constant 0 : index
    %c0_3 = arith.constant 0 : index
    %1 = vector.load %arg2[%c0_2, %c0_3] : memref<8x96xf32, #tpu.memory_space<vmem>>, vector<8x96xf32>
    %2 = vector.shape_cast %1 : vector<8x96xf32> to vector<1x8x96xf32>
    %3 = vector.broadcast %2 : vector<1x8x96xf32> to vector<32x8x96xf32>
    %4 = arith.addf %0, %3 : vector<32x8x96xf32>
    %5 = vector.shape_cast %4 : vector<32x8x96xf32> to vector<256x96xf32>
    %6 = vector.extract_strided_slice %4 {offsets = [0, 0, 0], sizes = [32, 1, 96], strides = [1, 1, 1]} : vector<32x8x96xf32> to vector<32x1x96xf32>
    %7 = vector.shape_cast %6 : vector<32x1x96xf32> to vector<32x96xf32>
    %8 = arith.truncf %5 : vector<256x96xf32> to vector<256x96xbf16>
    %9 = arith.truncf %7 : vector<32x96xf32> to vector<32x96xbf16>
    %c0_4 = arith.constant 0 : index
    %c0_5 = arith.constant 0 : index
    %10 = vector.load %arg7[%c0_4, %c0_5] : memref<96x96xbf16, #tpu.memory_space<vmem>>, vector<96x96xbf16>
    %cst = arith.constant dense<0.000000e+00> : vector<256x96xf32>
    %11 = tpu.matmul %8, %10, %cst {dimension_numbers = #tpu.dot_dimension_numbers<[1], [0], [0], [1], [0, 0, 1, 1], [], []>} : vector<256x96xbf16>, vector<96x96xbf16>, vector<256x96xf32> -> vector<256x96xf32>
    %c0_6 = arith.constant 0 : index
    %c0_7 = arith.constant 0 : index
    %12 = vector.load %arg8[%c0_6, %c0_7] : memref<1x96xf32, #tpu.memory_space<vmem>>, vector<1x96xf32>
    %13 = vector.broadcast %12 : vector<1x96xf32> to vector<256x96xf32>
    %14 = arith.addf %11, %13 : vector<256x96xf32>
    %c0_8 = arith.constant 0 : index
    %c0_9 = arith.constant 0 : index
    %15 = vector.load %arg9[%c0_8, %c0_9] : memref<96x96xbf16, #tpu.memory_space<vmem>>, vector<96x96xbf16>
    %cst_10 = arith.constant dense<0.000000e+00> : vector<256x96xf32>
    %16 = tpu.matmul %8, %15, %cst_10 {dimension_numbers = #tpu.dot_dimension_numbers<[1], [0], [0], [1], [0, 0, 1, 1], [], []>} : vector<256x96xbf16>, vector<96x96xbf16>, vector<256x96xf32> -> vector<256x96xf32>
    %c0_11 = arith.constant 0 : index
    %c0_12 = arith.constant 0 : index
    %17 = vector.load %arg10[%c0_11, %c0_12] : memref<1x96xf32, #tpu.memory_space<vmem>>, vector<1x96xf32>
    %18 = vector.broadcast %17 : vector<1x96xf32> to vector<256x96xf32>
    %19 = arith.addf %16, %18 : vector<256x96xf32>
    %c0_13 = arith.constant 0 : index
    %c0_14 = arith.constant 0 : index
    %20 = vector.load %arg5[%c0_13, %c0_14] : memref<96x96xbf16, #tpu.memory_space<vmem>>, vector<96x96xbf16>
    %cst_15 = arith.constant dense<0.000000e+00> : vector<32x96xf32>
    %21 = tpu.matmul %9, %20, %cst_15 {dimension_numbers = #tpu.dot_dimension_numbers<[1], [0], [0], [1], [0, 0, 1, 1], [], []>} : vector<32x96xbf16>, vector<96x96xbf16>, vector<32x96xf32> -> vector<32x96xf32>
    %c0_16 = arith.constant 0 : index
    %c0_17 = arith.constant 0 : index
    %22 = vector.load %arg6[%c0_16, %c0_17] : memref<1x96xf32, #tpu.memory_space<vmem>>, vector<1x96xf32>
    %23 = vector.broadcast %22 : vector<1x96xf32> to vector<32x96xf32>
    %24 = arith.addf %21, %23 : vector<32x96xf32>
    %25 = vector.shape_cast %14 : vector<256x96xf32> to vector<32x8x96xf32>
    %26 = vector.shape_cast %24 : vector<32x96xf32> to vector<32x1x96xf32>
    %27 = vector.broadcast %26 : vector<32x1x96xf32> to vector<32x8x96xf32>
    %28 = arith.mulf %27, %25 : vector<32x8x96xf32>
    %29 = vector.shape_cast %28 : vector<32x8x96xf32> to vector<256x96xf32>
    %c0_18 = arith.constant 0 : index
    %c0_19 = arith.constant 0 : index
    %30 = vector.load %arg3[%c0_18, %c0_19] : memref<96x6xf32, #tpu.memory_space<vmem>>, vector<96x6xf32>
    %cst_20 = arith.constant dense<0.000000e+00> : vector<256x6xf32>
    %31 = tpu.matmul %29, %30, %cst_20 {dimension_numbers = #tpu.dot_dimension_numbers<[1], [0], [0], [1], [0, 0, 1, 1], [], []>} : vector<256x96xf32>, vector<96x6xf32>, vector<256x6xf32> -> vector<256x6xf32>
    %32 = vector.shape_cast %31 : vector<256x6xf32> to vector<32x8x6xf32>
    %cst_21 = arith.constant dense<0xFF800000> : vector<32x6xf32>
    %33 = vector.multi_reduction <maximumf>, %32, %cst_21 [1] : vector<32x8x6xf32> to vector<32x6xf32>
    %34 = vector.shape_cast %33 : vector<32x6xf32> to vector<32x1x6xf32>
    %35 = vector.broadcast %34 : vector<32x1x6xf32> to vector<32x8x6xf32>
    %36 = arith.subf %32, %35 : vector<32x8x6xf32>
    %37 = math.exp %36 : vector<32x8x6xf32>
    %cst_22 = arith.constant dense<0.000000e+00> : vector<32x6xf32>
    %38 = vector.multi_reduction <add>, %37, %cst_22 [1] : vector<32x8x6xf32> to vector<32x6xf32>
    %39 = vector.shape_cast %38 : vector<32x6xf32> to vector<32x1x6xf32>
    %40 = tpu.reciprocal %39 {approx = true} : vector<32x1x6xf32> -> vector<32x1x6xf32>
    %41 = vector.broadcast %40 : vector<32x1x6xf32> to vector<32x8x6xf32>
    %42 = arith.mulf %37, %41 : vector<32x8x6xf32>
    %43 = vector.shape_cast %42 : vector<32x8x6xf32> to vector<256x6xf32>
    %c0_23 = arith.constant 0 : index
    %c0_24 = arith.constant 0 : index
    %44 = vector.load %arg4[%c0_23, %c0_24] : memref<6x96xf32, #tpu.memory_space<vmem>>, vector<6x96xf32>
    %cst_25 = arith.constant dense<0.000000e+00> : vector<256x96xf32>
    %45 = tpu.matmul %43, %44, %cst_25 {dimension_numbers = #tpu.dot_dimension_numbers<[1], [0], [0], [1], [0, 0, 1, 1], [], []>} : vector<256x6xf32>, vector<6x96xf32>, vector<256x96xf32> -> vector<256x96xf32>
    %46 = arith.mulf %45, %19 : vector<256x96xf32>
    %47 = vector.shape_cast %46 : vector<256x96xf32> to vector<32x8x96xf32>
    %cst_26 = arith.constant dense<0.000000e+00> : vector<32x96xf32>
    %48 = vector.multi_reduction <add>, %47, %cst_26 [1] : vector<32x8x96xf32> to vector<32x96xf32>
    %49 = arith.truncf %48 : vector<32x96xf32> to vector<32x96xbf16>
    %c0_27 = arith.constant 0 : index
    %c0_28 = arith.constant 0 : index
    %50 = vector.load %arg11[%c0_27, %c0_28] : memref<96x96xbf16, #tpu.memory_space<vmem>>, vector<96x96xbf16>
    %cst_29 = arith.constant dense<0.000000e+00> : vector<32x96xf32>
    %51 = tpu.matmul %49, %50, %cst_29 {dimension_numbers = #tpu.dot_dimension_numbers<[1], [0], [0], [1], [0, 0, 1, 1], [], []>} : vector<32x96xbf16>, vector<96x96xbf16>, vector<32x96xf32> -> vector<32x96xf32>
    %c0_30 = arith.constant 0 : index
    %c0_31 = arith.constant 0 : index
    %52 = vector.load %arg12[%c0_30, %c0_31] : memref<1x96xf32, #tpu.memory_space<vmem>>, vector<1x96xf32>
    %53 = vector.broadcast %52 : vector<1x96xf32> to vector<32x96xf32>
    %54 = arith.addf %51, %53 : vector<32x96xf32>
    %55 = arith.addf %7, %54 : vector<32x96xf32>
    %c0_32 = arith.constant 0 : index
    %c0_33 = arith.constant 0 : index
    %56 = vector.load %arg13[%c0_32, %c0_33] : memref<1x96xf32, #tpu.memory_space<vmem>>, vector<1x96xf32>
    %c0_34 = arith.constant 0 : index
    %c0_35 = arith.constant 0 : index
    %57 = vector.load %arg14[%c0_34, %c0_35] : memref<1x96xf32, #tpu.memory_space<vmem>>, vector<1x96xf32>
    %cst_36 = arith.constant dense<0.000000e+00> : vector<32xf32>
    %58 = vector.multi_reduction <add>, %55, %cst_36 [1] : vector<32x96xf32> to vector<32xf32>
    %59 = vector.shape_cast %58 : vector<32xf32> to vector<32x1xf32>
    %cst_37 = arith.constant 9.600000e+01 : f32
    %60 = vector.broadcast %cst_37 : f32 to vector<32x1xf32>
    %61 = arith.divf %59, %60 : vector<32x1xf32>
    %62 = vector.broadcast %61 : vector<32x1xf32> to vector<32x96xf32>
    %63 = arith.subf %55, %62 : vector<32x96xf32>
    %64 = arith.mulf %63, %63 : vector<32x96xf32>
    %cst_38 = arith.constant dense<0.000000e+00> : vector<32xf32>
    %65 = vector.multi_reduction <add>, %64, %cst_38 [1] : vector<32x96xf32> to vector<32xf32>
    %66 = vector.shape_cast %65 : vector<32xf32> to vector<32x1xf32>
    %cst_39 = arith.constant 9.600000e+01 : f32
    %67 = vector.broadcast %cst_39 : f32 to vector<32x1xf32>
    %68 = arith.divf %66, %67 : vector<32x1xf32>
    %cst_40 = arith.constant 9.99999974E-6 : f32
    %69 = vector.broadcast %cst_40 : f32 to vector<32x1xf32>
    %70 = arith.addf %68, %69 : vector<32x1xf32>
    %71 = math.rsqrt %70 : vector<32x1xf32>
    %72 = vector.broadcast %71 : vector<32x1xf32> to vector<32x96xf32>
    %73 = arith.mulf %63, %72 : vector<32x96xf32>
    %74 = vector.broadcast %56 : vector<1x96xf32> to vector<32x96xf32>
    %75 = arith.mulf %73, %74 : vector<32x96xf32>
    %76 = vector.broadcast %57 : vector<1x96xf32> to vector<32x96xf32>
    %77 = arith.addf %75, %76 : vector<32x96xf32>
    %78 = arith.truncf %77 : vector<32x96xf32> to vector<32x96xbf16>
    %c0_41 = arith.constant 0 : index
    %c0_42 = arith.constant 0 : index
    %79 = vector.load %arg15[%c0_41, %c0_42] : memref<96x512xbf16, #tpu.memory_space<vmem>>, vector<96x512xbf16>
    %cst_43 = arith.constant dense<0.000000e+00> : vector<32x512xf32>
    %80 = tpu.matmul %78, %79, %cst_43 {dimension_numbers = #tpu.dot_dimension_numbers<[1], [0], [0], [1], [0, 0, 1, 1], [], []>} : vector<32x96xbf16>, vector<96x512xbf16>, vector<32x512xf32> -> vector<32x512xf32>
    %c0_44 = arith.constant 0 : index
    %c0_45 = arith.constant 0 : index
    %81 = vector.load %arg16[%c0_44, %c0_45] : memref<1x512xf32, #tpu.memory_space<vmem>>, vector<1x512xf32>
    %82 = vector.broadcast %81 : vector<1x512xf32> to vector<32x512xf32>
    %83 = arith.addf %80, %82 : vector<32x512xf32>
    %cst_46 = arith.constant 0.000000e+00 : f32
    %84 = vector.broadcast %cst_46 : f32 to vector<32x512xf32>
    %85 = arith.maximumf %83, %84 : vector<32x512xf32>
    %86 = arith.truncf %85 : vector<32x512xf32> to vector<32x512xbf16>
    %c0_47 = arith.constant 0 : index
    %c0_48 = arith.constant 0 : index
    %87 = vector.load %arg17[%c0_47, %c0_48] : memref<512x96xbf16, #tpu.memory_space<vmem>>, vector<512x96xbf16>
    %cst_49 = arith.constant dense<0.000000e+00> : vector<32x96xf32>
    %88 = tpu.matmul %86, %87, %cst_49 {dimension_numbers = #tpu.dot_dimension_numbers<[1], [0], [0], [1], [0, 0, 1, 1], [], []>} : vector<32x512xbf16>, vector<512x96xbf16>, vector<32x96xf32> -> vector<32x96xf32>
    %c0_50 = arith.constant 0 : index
    %c0_51 = arith.constant 0 : index
    %89 = vector.load %arg18[%c0_50, %c0_51] : memref<1x96xf32, #tpu.memory_space<vmem>>, vector<1x96xf32>
    %90 = vector.broadcast %89 : vector<1x96xf32> to vector<32x96xf32>
    %91 = arith.addf %88, %90 : vector<32x96xf32>
    %92 = arith.addf %77, %91 : vector<32x96xf32>
    %c0_52 = arith.constant 0 : index
    %c0_53 = arith.constant 0 : index
    %93 = vector.load %arg19[%c0_52, %c0_53] : memref<1x96xf32, #tpu.memory_space<vmem>>, vector<1x96xf32>
    %c0_54 = arith.constant 0 : index
    %c0_55 = arith.constant 0 : index
    %94 = vector.load %arg20[%c0_54, %c0_55] : memref<1x96xf32, #tpu.memory_space<vmem>>, vector<1x96xf32>
    %cst_56 = arith.constant dense<0.000000e+00> : vector<32xf32>
    %95 = vector.multi_reduction <add>, %92, %cst_56 [1] : vector<32x96xf32> to vector<32xf32>
    %96 = vector.shape_cast %95 : vector<32xf32> to vector<32x1xf32>
    %cst_57 = arith.constant 9.600000e+01 : f32
    %97 = vector.broadcast %cst_57 : f32 to vector<32x1xf32>
    %98 = arith.divf %96, %97 : vector<32x1xf32>
    %99 = vector.broadcast %98 : vector<32x1xf32> to vector<32x96xf32>
    %100 = arith.subf %92, %99 : vector<32x96xf32>
    %101 = arith.mulf %100, %100 : vector<32x96xf32>
    %cst_58 = arith.constant dense<0.000000e+00> : vector<32xf32>
    %102 = vector.multi_reduction <add>, %101, %cst_58 [1] : vector<32x96xf32> to vector<32xf32>
    %103 = vector.shape_cast %102 : vector<32xf32> to vector<32x1xf32>
    %cst_59 = arith.constant 9.600000e+01 : f32
    %104 = vector.broadcast %cst_59 : f32 to vector<32x1xf32>
    %105 = arith.divf %103, %104 : vector<32x1xf32>
    %cst_60 = arith.constant 9.99999974E-6 : f32
    %106 = vector.broadcast %cst_60 : f32 to vector<32x1xf32>
    %107 = arith.addf %105, %106 : vector<32x1xf32>
    %108 = math.rsqrt %107 : vector<32x1xf32>
    %109 = vector.broadcast %108 : vector<32x1xf32> to vector<32x96xf32>
    %110 = arith.mulf %100, %109 : vector<32x96xf32>
    %111 = vector.broadcast %93 : vector<1x96xf32> to vector<32x96xf32>
    %112 = arith.mulf %110, %111 : vector<32x96xf32>
    %113 = vector.broadcast %94 : vector<1x96xf32> to vector<32x96xf32>
    %114 = arith.addf %112, %113 : vector<32x96xf32>
    %115 = arith.truncf %114 : vector<32x96xf32> to vector<32x96xbf16>
    %c0_61 = arith.constant 0 : index
    %c0_62 = arith.constant 0 : index
    %116 = vector.load %arg21[%c0_61, %c0_62] : memref<96x128xbf16, #tpu.memory_space<vmem>>, vector<96x128xbf16>
    %cst_63 = arith.constant dense<0.000000e+00> : vector<32x128xf32>
    %117 = tpu.matmul %115, %116, %cst_63 {dimension_numbers = #tpu.dot_dimension_numbers<[1], [0], [0], [1], [0, 0, 1, 1], [], []>} : vector<32x96xbf16>, vector<96x128xbf16>, vector<32x128xf32> -> vector<32x128xf32>
    %c0_64 = arith.constant 0 : index
    %c0_65 = arith.constant 0 : index
    %118 = vector.load %arg22[%c0_64, %c0_65] : memref<1x128xf32, #tpu.memory_space<vmem>>, vector<1x128xf32>
    %119 = vector.broadcast %118 : vector<1x128xf32> to vector<32x128xf32>
    %120 = arith.addf %117, %119 : vector<32x128xf32>
    %cst_66 = arith.constant 0.000000e+00 : f32
    %121 = vector.broadcast %cst_66 : f32 to vector<32x128xf32>
    %122 = arith.maximumf %120, %121 : vector<32x128xf32>
    %c0_67 = arith.constant 0 : index
    %c0_68 = arith.constant 0 : index
    %123 = vector.load %arg23[%c0_67, %c0_68] : memref<128x32xf32, #tpu.memory_space<vmem>>, vector<128x32xf32>
    %cst_69 = arith.constant dense<0.000000e+00> : vector<32x32xf32>
    %124 = tpu.matmul %122, %123, %cst_69 {dimension_numbers = #tpu.dot_dimension_numbers<[1], [0], [0], [1], [0, 0, 1, 1], [], []>} : vector<32x128xf32>, vector<128x32xf32>, vector<32x32xf32> -> vector<32x32xf32>
    %c0_70 = arith.constant 0 : index
    %c0_71 = arith.constant 0 : index
    %125 = vector.load %arg24[%c0_70, %c0_71] : memref<1x32xf32, #tpu.memory_space<vmem>>, vector<1x32xf32>
    %126 = vector.broadcast %125 : vector<1x32xf32> to vector<32x32xf32>
    %127 = arith.addf %124, %126 : vector<32x32xf32>
    %cst_72 = arith.constant 0.000000e+00 : f32
    %128 = vector.broadcast %cst_72 : f32 to vector<32x32xf32>
    %129 = arith.maximumf %127, %128 : vector<32x32xf32>
    %c0_73 = arith.constant 0 : index
    %c0_74 = arith.constant 0 : index
    %130 = vector.load %arg25[%c0_73, %c0_74] : memref<32x3xf32, #tpu.memory_space<vmem>>, vector<32x3xf32>
    %cst_75 = arith.constant dense<0.000000e+00> : vector<32x3xf32>
    %131 = tpu.matmul %129, %130, %cst_75 {dimension_numbers = #tpu.dot_dimension_numbers<[1], [0], [0], [1], [0, 0, 1, 1], [], []>} : vector<32x32xf32>, vector<32x3xf32>, vector<32x3xf32> -> vector<32x3xf32>
    %c0_76 = arith.constant 0 : index
    %c0_77 = arith.constant 0 : index
    %132 = vector.load %arg26[%c0_76, %c0_77] : memref<1x3xf32, #tpu.memory_space<vmem>>, vector<1x3xf32>
    %133 = vector.broadcast %132 : vector<1x3xf32> to vector<32x3xf32>
    %134 = arith.addf %131, %133 : vector<32x3xf32>
    %c0_78 = arith.constant 0 : index
    %c0_79 = arith.constant 0 : index
    %135 = vector.load %arg27[%c0_78, %c0_79] : memref<32x3xf32, #tpu.memory_space<vmem>>, vector<32x3xf32>
    tpu.vector_store %arg27[%c0_78, %c0_79], %134 {strides = array<i32>} : memref<32x3xf32, #tpu.memory_space<vmem>>, vector<32x3xf32>,
    return
  }
  func.func @transform_0(%arg0: i32) -> (i32, i32, i32) {
    %c0_i32 = arith.constant 0 : i32
    %c0_i32_0 = arith.constant 0 : i32
    %c0_i32_1 = arith.constant 0 : i32
    return %arg0, %c0_i32, %c0_i32_0 : i32, i32, i32
  }
  func.func @transform_1(%arg0: i32) -> (i32, i32) {
    %c0_i32 = arith.constant 0 : i32
    %c0_i32_0 = arith.constant 0 : i32
    %c0_i32_1 = arith.constant 0 : i32
    return %c0_i32, %c0_i32_0 : i32, i32
  }
  func.func @transform_2(%arg0: i32) -> (i32, i32) {
    %c0_i32 = arith.constant 0 : i32
    %c0_i32_0 = arith.constant 0 : i32
    %c0_i32_1 = arith.constant 0 : i32
    return %c0_i32, %c0_i32_0 : i32, i32
  }
  func.func @transform_3(%arg0: i32) -> (i32, i32) {
    %c0_i32 = arith.constant 0 : i32
    %c0_i32_0 = arith.constant 0 : i32
    %c0_i32_1 = arith.constant 0 : i32
    return %c0_i32, %c0_i32_0 : i32, i32
  }
  func.func @transform_4(%arg0: i32) -> (i32, i32) {
    %c0_i32 = arith.constant 0 : i32
    %c0_i32_0 = arith.constant 0 : i32
    %c0_i32_1 = arith.constant 0 : i32
    return %c0_i32, %c0_i32_0 : i32, i32
  }
  func.func @transform_5(%arg0: i32) -> (i32, i32) {
    %c0_i32 = arith.constant 0 : i32
    %c0_i32_0 = arith.constant 0 : i32
    %c0_i32_1 = arith.constant 0 : i32
    return %c0_i32, %c0_i32_0 : i32, i32
  }
  func.func @transform_6(%arg0: i32) -> (i32, i32) {
    %c0_i32 = arith.constant 0 : i32
    %c0_i32_0 = arith.constant 0 : i32
    %c0_i32_1 = arith.constant 0 : i32
    return %c0_i32, %c0_i32_0 : i32, i32
  }
  func.func @transform_7(%arg0: i32) -> (i32, i32) {
    %c0_i32 = arith.constant 0 : i32
    %c0_i32_0 = arith.constant 0 : i32
    %c0_i32_1 = arith.constant 0 : i32
    return %c0_i32, %c0_i32_0 : i32, i32
  }
  func.func @transform_8(%arg0: i32) -> (i32, i32) {
    %c0_i32 = arith.constant 0 : i32
    %c0_i32_0 = arith.constant 0 : i32
    %c0_i32_1 = arith.constant 0 : i32
    return %c0_i32, %c0_i32_0 : i32, i32
  }
  func.func @transform_9(%arg0: i32) -> (i32, i32) {
    %c0_i32 = arith.constant 0 : i32
    %c0_i32_0 = arith.constant 0 : i32
    %c0_i32_1 = arith.constant 0 : i32
    return %c0_i32, %c0_i32_0 : i32, i32
  }
  func.func @transform_10(%arg0: i32) -> (i32, i32) {
    %c0_i32 = arith.constant 0 : i32
    %c0_i32_0 = arith.constant 0 : i32
    %c0_i32_1 = arith.constant 0 : i32
    return %c0_i32, %c0_i32_0 : i32, i32
  }
  func.func @transform_11(%arg0: i32) -> (i32, i32) {
    %c0_i32 = arith.constant 0 : i32
    %c0_i32_0 = arith.constant 0 : i32
    %c0_i32_1 = arith.constant 0 : i32
    return %c0_i32, %c0_i32_0 : i32, i32
  }
  func.func @transform_12(%arg0: i32) -> (i32, i32) {
    %c0_i32 = arith.constant 0 : i32
    %c0_i32_0 = arith.constant 0 : i32
    %c0_i32_1 = arith.constant 0 : i32
    return %c0_i32, %c0_i32_0 : i32, i32
  }
  func.func @transform_13(%arg0: i32) -> (i32, i32) {
    %c0_i32 = arith.constant 0 : i32
    %c0_i32_0 = arith.constant 0 : i32
    %c0_i32_1 = arith.constant 0 : i32
    return %c0_i32, %c0_i32_0 : i32, i32
  }
  func.func @transform_14(%arg0: i32) -> (i32, i32) {
    %c0_i32 = arith.constant 0 : i32
    %c0_i32_0 = arith.constant 0 : i32
    %c0_i32_1 = arith.constant 0 : i32
    return %c0_i32, %c0_i32_0 : i32, i32
  }
  func.func @transform_15(%arg0: i32) -> (i32, i32) {
    %c0_i32 = arith.constant 0 : i32
    %c0_i32_0 = arith.constant 0 : i32
    %c0_i32_1 = arith.constant 0 : i32
    return %c0_i32, %c0_i32_0 : i32, i32
  }
  func.func @transform_16(%arg0: i32) -> (i32, i32) {
    %c0_i32 = arith.constant 0 : i32
    %c0_i32_0 = arith.constant 0 : i32
    %c0_i32_1 = arith.constant 0 : i32
    return %c0_i32, %c0_i32_0 : i32, i32
  }
  func.func @transform_17(%arg0: i32) -> (i32, i32) {
    %c0_i32 = arith.constant 0 : i32
    %c0_i32_0 = arith.constant 0 : i32
    %c0_i32_1 = arith.constant 0 : i32
    return %c0_i32, %c0_i32_0 : i32, i32
  }
  func.func @transform_18(%arg0: i32) -> (i32, i32) {
    %c0_i32 = arith.constant 0 : i32
    %c0_i32_0 = arith.constant 0 : i32
    %c0_i32_1 = arith.constant 0 : i32
    return %c0_i32, %c0_i32_0 : i32, i32
  }
  func.func @transform_19(%arg0: i32) -> (i32, i32) {
    %c0_i32 = arith.constant 0 : i32
    %c0_i32_0 = arith.constant 0 : i32
    %c0_i32_1 = arith.constant 0 : i32
    return %c0_i32, %c0_i32_0 : i32, i32
  }
  func.func @transform_20(%arg0: i32) -> (i32, i32) {
    %c0_i32 = arith.constant 0 : i32
    %c0_i32_0 = arith.constant 0 : i32
    %c0_i32_1 = arith.constant 0 : i32
    return %c0_i32, %c0_i32_0 : i32, i32
  }
  func.func @transform_21(%arg0: i32) -> (i32, i32) {
    %c0_i32 = arith.constant 0 : i32
    %c0_i32_0 = arith.constant 0 : i32
    %c0_i32_1 = arith.constant 0 : i32
    return %c0_i32, %c0_i32_0 : i32, i32
  }
  func.func @transform_22(%arg0: i32) -> (i32, i32) {
    %c0_i32 = arith.constant 0 : i32
    %c0_i32_0 = arith.constant 0 : i32
    %c0_i32_1 = arith.constant 0 : i32
    return %c0_i32, %c0_i32_0 : i32, i32
  }
  func.func @transform_23(%arg0: i32) -> (i32, i32) {
    %c0_i32 = arith.constant 0 : i32
    %c0_i32_0 = arith.constant 0 : i32
    %c0_i32_1 = arith.constant 0 : i32
    return %c0_i32, %c0_i32_0 : i32, i32
  }
  func.func @transform_24(%arg0: i32) -> (i32, i32) {
    %c0_i32 = arith.constant 0 : i32
    %c0_i32_0 = arith.constant 0 : i32
    %c0_i32_1 = arith.constant 0 : i32
    return %c0_i32, %c0_i32_0 : i32, i32
  }
  func.func @transform_25(%arg0: i32) -> (i32, i32) {
    %c0_i32 = arith.constant 0 : i32
    %c0_i32_0 = arith.constant 0 : i32
    %c0_i32_1 = arith.constant 0 : i32
    return %c0_i32, %c0_i32_0 : i32, i32
  }
  func.func @transform_26(%arg0: i32) -> (i32, i32) {
    %c0_i32 = arith.constant 0 : i32
    %c0_i32_0 = arith.constant 0 : i32
    return %arg0, %c0_i32 : i32, i32
  }
}

</mosaic_0001>

<llo_original>
// kernel: tpu_custom_call.1
$region0: #{tpu_custom_call.1}
  #allocation0 [shape = 'u32[]', space=smem, size = 0x4, offset = 0x4, fixed_abs, tag = 'smem constant byte address 0x4 - core index']
  #allocation1 [shape = 'u32[72,128]{1,0:T(1,128)}', space=vmem, size = 0x9000, scoped, tag = 'internal scratch']
  %s0 = inlined_call_operand.vmem [shape: f32[128,8,96], index: 0, kind: input, shape index: {}]
  %s1 = inlined_call_operand.vmem [shape: f32[8,96], index: 1, kind: input, shape index: {}]
  %s2 = inlined_call_operand.vmem [shape: f32[96,6], index: 2, kind: input, shape index: {}]
  %s3 = inlined_call_operand.vmem [shape: f32[6,96], index: 3, kind: input, shape index: {}]
  %s4 = inlined_call_operand.vmem [shape: bf16[96,96], index: 4, kind: input, shape index: {}]
  %s5 = inlined_call_operand.vmem [shape: f32[1,96], index: 5, kind: input, shape index: {}]
  %s6 = inlined_call_operand.vmem [shape: bf16[96,96], index: 6, kind: input, shape index: {}]
  %s7 = inlined_call_operand.vmem [shape: f32[1,96], index: 7, kind: input, shape index: {}]
  %s8 = inlined_call_operand.vmem [shape: bf16[96,96], index: 8, kind: input, shape index: {}]
  %s9 = inlined_call_operand.vmem [shape: f32[1,96], index: 9, kind: input, shape index: {}]
  %s10 = inlined_call_operand.vmem [shape: bf16[96,96], index: 10, kind: input, shape index: {}]
  %s11 = inlined_call_operand.vmem [shape: f32[1,96], index: 11, kind: input, shape index: {}]
  %s12 = inlined_call_operand.vmem [shape: f32[1,96], index: 12, kind: input, shape index: {}]
  %s13 = inlined_call_operand.vmem [shape: f32[1,96], index: 13, kind: input, shape index: {}]
  %s14 = inlined_call_operand.vmem [shape: bf16[96,512], index: 14, kind: input, shape index: {}]
  %s15 = inlined_call_operand.vmem [shape: f32[1,512], index: 15, kind: input, shape index: {}]
  %s16 = inlined_call_operand.vmem [shape: bf16[512,96], index: 16, kind: input, shape index: {}]
  %s17 = inlined_call_operand.vmem [shape: f32[1,96], index: 17, kind: input, shape index: {}]
  %s18 = inlined_call_operand.vmem [shape: f32[1,96], index: 18, kind: input, shape index: {}]
  %s19 = inlined_call_operand.vmem [shape: f32[1,96], index: 19, kind: input, shape index: {}]
  %s20 = inlined_call_operand.vmem [shape: bf16[96,128], index: 20, kind: input, shape index: {}]
  %s21 = inlined_call_operand.vmem [shape: f32[1,128], index: 21, kind: input, shape index: {}]
  %s22 = inlined_call_operand.vmem [shape: f32[128,32], index: 22, kind: input, shape index: {}]
  %s23 = inlined_call_operand.vmem [shape: f32[1,32], index: 23, kind: input, shape index: {}]
  %s24 = inlined_call_operand.vmem [shape: f32[32,3], index: 24, kind: input, shape index: {}]
  %s25 = inlined_call_operand.vmem [shape: f32[1,3], index: 25, kind: input, shape index: {}]
  %s26 = inlined_call_operand.vmem [shape: f32[128,3], index: 26, kind: output, shape index: {}]
  %s27 = sld [smem:[#allocation0]]
  $region137: #{tpu_custom_call.1} parent=0
    _
  %s29 = ssub.s32 1, %s27
  %s30 = scalar_select 0, %s29, %s27
  loop: start=0, step=1, limit=6
  $region2: #{tpu_custom_call.1} parent=0 // loop_pre_header
    _
  $region3: #{tpu_custom_call.1} parent=0 // loop_header
    %s32 = sphi 0, %s36
    %p33 = scmp.ge.s32.totalorder %s32, 6
    %s42 = sphi 0, %s44
    %s45 = sphi 0, %s42
    %s46 = sphi 0, %s45
    %s62 = sphi 0, %s46
    %s66 = sphi 0, %s66
    %s68 = sphi 0, %s66
    %s69 = sphi 0, %s68
    %s83 = sphi 0, %s69
    %s87 = sphi 0, %s87
    %s89 = sphi 0, %s87
    %s90 = sphi 0, %s89
    %s104 = sphi 0, %s90
    %s108 = sphi 0, %s108
    %s110 = sphi 0, %s108
    %s111 = sphi 0, %s110
    %s125 = sphi 0, %s111
    %s129 = sphi 0, %s129
    %s131 = sphi 0, %s129
    %s132 = sphi 0, %s131
    %s146 = sphi 0, %s132
    %s150 = sphi 0, %s150
    %s152 = sphi 0, %s150
    %s153 = sphi 0, %s152
    %s167 = sphi 0, %s153
    %s171 = sphi 0, %s171
    %s173 = sphi 0, %s171
    %s174 = sphi 0, %s173
    %s188 = sphi 0, %s174
    %s192 = sphi 0, %s192
    %s194 = sphi 0, %s192
    %s195 = sphi 0, %s194
    %s209 = sphi 0, %s195
    %s213 = sphi 0, %s213
    %s215 = sphi 0, %s213
    %s216 = sphi 0, %s215
    %s230 = sphi 0, %s216
    %s234 = sphi 0, %s234
    %s236 = sphi 0, %s234
    %s237 = sphi 0, %s236
    %s251 = sphi 0, %s237
    %s255 = sphi 0, %s255
    %s257 = sphi 0, %s255
    %s258 = sphi 0, %s257
    %s272 = sphi 0, %s258
    %s276 = sphi 0, %s276
    %s278 = sphi 0, %s276
    %s279 = sphi 0, %s278
    %s293 = sphi 0, %s279
    %s297 = sphi 0, %s297
    %s299 = sphi 0, %s297
    %s300 = sphi 0, %s299
    %s314 = sphi 0, %s300
    %s318 = sphi 0, %s318
    %s320 = sphi 0, %s318
    %s321 = sphi 0, %s320
    %s335 = sphi 0, %s321
    %s339 = sphi 0, %s339
    %s341 = sphi 0, %s339
    %s342 = sphi 0, %s341
    %s356 = sphi 0, %s342
    %s360 = sphi 0, %s360
    %s362 = sphi 0, %s360
    %s363 = sphi 0, %s362
    %s377 = sphi 0, %s363
    %s381 = sphi 0, %s381
    %s383 = sphi 0, %s381
    %s384 = sphi 0, %s383
    %s398 = sphi 0, %s384
    %s402 = sphi 0, %s402
    %s404 = sphi 0, %s402
    %s405 = sphi 0, %s404
    %s419 = sphi 0, %s405
    %s423 = sphi 0, %s423
    %s425 = sphi 0, %s423
    %s426 = sphi 0, %s425
    %s440 = sphi 0, %s426
    %s444 = sphi 0, %s444
    %s446 = sphi 0, %s444
    %s447 = sphi 0, %s446
    %s461 = sphi 0, %s447
    %s465 = sphi 0, %s465
    %s467 = sphi 0, %s465
    %s468 = sphi 0, %s467
    %s482 = sphi 0, %s468
    %s486 = sphi 0, %s486
    %s488 = sphi 0, %s486
    %s489 = sphi 0, %s488
    %s503 = sphi 0, %s489
    %s507 = sphi 0, %s507
    %s509 = sphi 0, %s507
    %s510 = sphi 0, %s509
    %s524 = sphi 0, %s510
    %s528 = sphi 0, %s528
    %s530 = sphi 0, %s528
    %s531 = sphi 0, %s530
    %s545 = sphi 0, %s531
    %s549 = sphi 0, %s549
    %s551 = sphi 0, %s549
    %s552 = sphi 0, %s551
    %s566 = sphi 0, %s552
    %s570 = sphi 0, %s570
    %s572 = sphi 0, %s570
    %s573 = sphi 0, %s572
    %s587 = sphi 0, %s573
    %s593 = sphi 0, %s595
    %s596 = sphi 0, %s593
    %s597 = sphi 0, %s596
    %s613 = sphi 0, %s597
  $region4: #{tpu_custom_call.1} parent=0 // loop_header_branch
    %35 = sbr.rel (%p33) target = $region8
  $region5: #{tpu_custom_call.1} parent=0 // loop_body
    %s37 = ssub.s32 %s32, 1
    %s38 = ssub.s32 %s32, 2
    %s39 = sadd.s32 %s32, 1
    %s40 = ssub.s32 %s32, %s39
    %p41 = scmp.eq.s32.totalorder %s40, 0
    %s43 = sadd.s32 %s42, 1
    %s44 = scalar_select %p41, %s42, %s43
    %p47 = pneg %p41
    %p48 = scmp.eq.s32.totalorder %s32, 3
    %p49 = por %p47, %p48
    %p50 = scmp.ne.s32.totalorder %s42, %s45
    %p51 = scmp.eq.s32.totalorder %s32, 0
    %p52 = por %p50, %p51
    %p53 = scmp.ne.s32.totalorder %s42, %s45
    %p54 = scmp.eq.s32.totalorder %s37, 3
    %p55 = por %p53, %p54
    %p56 = scmp.ne.s32.totalorder %s45, %s46
    %p57 = scmp.eq.s32.totalorder %s37, 0
    %p58 = por %p56, %p57
    %p59 = scmp.ne.s32.totalorder %s45, %s46
    %p60 = scmp.eq.s32.totalorder %s38, 3
    %p61 = por %p59, %p60
    %p63 = scmp.ne.s32.totalorder %s46, %s62
    %p64 = scmp.eq.s32.totalorder %s38, 0
    %p65 = por %p63, %p64
    %s67 = sadd.s32 %s66, 1
    %p70 = scmp.eq.s32.totalorder %s32, 3
    %p71 = scmp.ne.s32.totalorder %s66, %s68
    %p72 = scmp.eq.s32.totalorder %s32, 0
    %p73 = por %p71, %p72
    %p74 = scmp.ne.s32.totalorder %s66, %s68
    %p75 = scmp.eq.s32.totalorder %s37, 3
    %p76 = por %p74, %p75
    %p77 = scmp.ne.s32.totalorder %s68, %s69
    %p78 = scmp.eq.s32.totalorder %s37, 0
    %p79 = por %p77, %p78
    %p80 = scmp.ne.s32.totalorder %s68, %s69
    %p81 = scmp.eq.s32.totalorder %s38, 3
    %p82 = por %p80, %p81
    %p84 = scmp.ne.s32.totalorder %s69, %s83
    %p85 = scmp.eq.s32.totalorder %s38, 0
    %p86 = por %p84, %p85
    %s88 = sadd.s32 %s87, 1
    %p91 = scmp.eq.s32.totalorder %s32, 3
    %p92 = scmp.ne.s32.totalorder %s87, %s89
    %p93 = scmp.eq.s32.totalorder %s32, 0
    %p94 = por %p92, %p93
    %p95 = scmp.ne.s32.totalorder %s87, %s89
    %p96 = scmp.eq.s32.totalorder %s37, 3
    %p97 = por %p95, %p96
    %p98 = scmp.ne.s32.totalorder %s89, %s90
    %p99 = scmp.eq.s32.totalorder %s37, 0
    %p100 = por %p98, %p99
    %p101 = scmp.ne.s32.totalorder %s89, %s90
    %p102 = scmp.eq.s32.totalorder %s38, 3
    %p103 = por %p101, %p102
    %p105 = scmp.ne.s32.totalorder %s90, %s104
    %p106 = scmp.eq.s32.totalorder %s38, 0
    %p107 = por %p105, %p106
    %s109 = sadd.s32 %s108, 1
    %p112 = scmp.eq.s32.totalorder %s32, 3
    %p113 = scmp.ne.s32.totalorder %s108, %s110
    %p114 = scmp.eq.s32.totalorder %s32, 0
    %p115 = por %p113, %p114
    %p116 = scmp.ne.s32.totalorder %s108, %s110
    %p117 = scmp.eq.s32.totalorder %s37, 3
    %p118 = por %p116, %p117
    %p119 = scmp.ne.s32.totalorder %s110, %s111
    %p120 = scmp.eq.s32.totalorder %s37, 0
    %p121 = por %p119, %p120
    %p122 = scmp.ne.s32.totalorder %s110, %s111
    %p123 = scmp.eq.s32.totalorder %s38, 3
    %p124 = por %p122, %p123
    %p126 = scmp.ne.s32.totalorder %s111, %s125
    %p127 = scmp.eq.s32.totalorder %s38, 0
    %p128 = por %p126, %p127
    %s130 = sadd.s32 %s129, 1
    %p133 = scmp.eq.s32.totalorder %s32, 3
    %p134 = scmp.ne.s32.totalorder %s129, %s131
    %p135 = scmp.eq.s32.totalorder %s32, 0
    %p136 = por %p134, %p135
    %p137 = scmp.ne.s32.totalorder %s129, %s131
    %p138 = scmp.eq.s32.totalorder %s37, 3
    %p139 = por %p137, %p138
    %p140 = scmp.ne.s32.totalorder %s131, %s132
    %p141 = scmp.eq.s32.totalorder %s37, 0
    %p142 = por %p140, %p141
    %p143 = scmp.ne.s32.totalorder %s131, %s132
    %p144 = scmp.eq.s32.totalorder %s38, 3
    %p145 = por %p143, %p144
    %p147 = scmp.ne.s32.totalorder %s132, %s146
    %p148 = scmp.eq.s32.totalorder %s38, 0
    %p149 = por %p147, %p148
    %s151 = sadd.s32 %s150, 1
    %p154 = scmp.eq.s32.totalorder %s32, 3
    %p155 = scmp.ne.s32.totalorder %s150, %s152
    %p156 = scmp.eq.s32.totalorder %s32, 0
    %p157 = por %p155, %p156
    %p158 = scmp.ne.s32.totalorder %s150, %s152
    %p159 = scmp.eq.s32.totalorder %s37, 3
    %p160 = por %p158, %p159
    %p161 = scmp.ne.s32.totalorder %s152, %s153
    %p162 = scmp.eq.s32.totalorder %s37, 0
    %p163 = por %p161, %p162
    %p164 = scmp.ne.s32.totalorder %s152, %s153
    %p165 = scmp.eq.s32.totalorder %s38, 3
    %p166 = por %p164, %p165
    %p168 = scmp.ne.s32.totalorder %s153, %s167
    %p169 = scmp.eq.s32.totalorder %s38, 0
    %p170 = por %p168, %p169
    %s172 = sadd.s32 %s171, 1
    %p175 = scmp.eq.s32.totalorder %s32, 3
    %p176 = scmp.ne.s32.totalorder %s171, %s173
    %p177 = scmp.eq.s32.totalorder %s32, 0
    %p178 = por %p176, %p177
    %p179 = scmp.ne.s32.totalorder %s171, %s173
    %p180 = scmp.eq.s32.totalorder %s37, 3
    %p181 = por %p179, %p180
    %p182 = scmp.ne.s32.totalorder %s173, %s174
    %p183 = scmp.eq.s32.totalorder %s37, 0
    %p184 = por %p182, %p183
    %p185 = scmp.ne.s32.totalorder %s173, %s174
    %p186 = scmp.eq.s32.totalorder %s38, 3
    %p187 = por %p185, %p186
    %p189 = scmp.ne.s32.totalorder %s174, %s188
    %p190 = scmp.eq.s32.totalorder %s38, 0
    %p191 = por %p189, %p190
    %s193 = sadd.s32 %s192, 1
    %p196 = scmp.eq.s32.totalorder %s32, 3
    %p197 = scmp.ne.s32.totalorder %s192, %s194
    %p198 = scmp.eq.s32.totalorder %s32, 0
    %p199 = por %p197, %p198
    %p200 = scmp.ne.s32.totalorder %s192, %s194
    %p201 = scmp.eq.s32.totalorder %s37, 3
    %p202 = por %p200, %p201
    %p203 = scmp.ne.s32.totalorder %s194, %s195
    %p204 = scmp.eq.s32.totalorder %s37, 0
    %p205 = por %p203, %p204
    %p206 = scmp.ne.s32.totalorder %s194, %s195
    %p207 = scmp.eq.s32.totalorder %s38, 3
    %p208 = por %p206, %p207
    %p210 = scmp.ne.s32.totalorder %s195, %s209
    %p211 = scmp.eq.s32.totalorder %s38, 0
    %p212 = por %p210, %p211
    %s214 = sadd.s32 %s213, 1
    %p217 = scmp.eq.s32.totalorder %s32, 3
    %p218 = scmp.ne.s32.totalorder %s213, %s215
    %p219 = scmp.eq.s32.totalorder %s32, 0
    %p220 = por %p218, %p219
    %p221 = scmp.ne.s32.totalorder %s213, %s215
    %p222 = scmp.eq.s32.totalorder %s37, 3
    %p223 = por %p221, %p222
    %p224 = scmp.ne.s32.totalorder %s215, %s216
    %p225 = scmp.eq.s32.totalorder %s37, 0
    %p226 = por %p224, %p225
    %p227 = scmp.ne.s32.totalorder %s215, %s216
    %p228 = scmp.eq.s32.totalorder %s38, 3
    %p229 = por %p227, %p228
    %p231 = scmp.ne.s32.totalorder %s216, %s230
    %p232 = scmp.eq.s32.totalorder %s38, 0
    %p233 = por %p231, %p232
    %s235 = sadd.s32 %s234, 1
    %p238 = scmp.eq.s32.totalorder %s32, 3
    %p239 = scmp.ne.s32.totalorder %s234, %s236
    %p240 = scmp.eq.s32.totalorder %s32, 0
    %p241 = por %p239, %p240
    %p242 = scmp.ne.s32.totalorder %s234, %s236
    %p243 = scmp.eq.s32.totalorder %s37, 3
    %p244 = por %p242, %p243
    %p245 = scmp.ne.s32.totalorder %s236, %s237
    %p246 = scmp.eq.s32.totalorder %s37, 0
    %p247 = por %p245, %p246
    %p248 = scmp.ne.s32.totalorder %s236, %s237
    %p249 = scmp.eq.s32.totalorder %s38, 3
    %p250 = por %p248, %p249
    %p252 = scmp.ne.s32.totalorder %s237, %s251
    %p253 = scmp.eq.s32.totalorder %s38, 0
    %p254 = por %p252, %p253
    %s256 = sadd.s32 %s255, 1
    %p259 = scmp.eq.s32.totalorder %s32, 3
    %p260 = scmp.ne.s32.totalorder %s255, %s257
    %p261 = scmp.eq.s32.totalorder %s32, 0
    %p262 = por %p260, %p261
    %p263 = scmp.ne.s32.totalorder %s255, %s257
    %p264 = scmp.eq.s32.totalorder %s37, 3
    %p265 = por %p263, %p264
    %p266 = scmp.ne.s32.totalorder %s257, %s258
    %p267 = scmp.eq.s32.totalorder %s37, 0
    %p268 = por %p266, %p267
    %p269 = scmp.ne.s32.totalorder %s257, %s258
    %p270 = scmp.eq.s32.totalorder %s38, 3
    %p271 = por %p269, %p270
    %p273 = scmp.ne.s32.totalorder %s258, %s272
    %p274 = scmp.eq.s32.totalorder %s38, 0
    %p275 = por %p273, %p274
    %s277 = sadd.s32 %s276, 1
    %p280 = scmp.eq.s32.totalorder %s32, 3
    %p281 = scmp.ne.s32.totalorder %s276, %s278
    %p282 = scmp.eq.s32.totalorder %s32, 0
    %p283 = por %p281, %p282
    %p284 = scmp.ne.s32.totalorder %s276, %s278
    %p285 = scmp.eq.s32.totalorder %s37, 3
    %p286 = por %p284, %p285
    %p287 = scmp.ne.s32.totalorder %s278, %s279
    %p288 = scmp.eq.s32.totalorder %s37, 0
    %p289 = por %p287, %p288
    %p290 = scmp.ne.s32.totalorder %s278, %s279
    %p291 = scmp.eq.s32.totalorder %s38, 3
    %p292 = por %p290, %p291
    %p294 = scmp.ne.s32.totalorder %s279, %s293
    %p295 = scmp.eq.s32.totalorder %s38, 0
    %p296 = por %p294, %p295
    %s298 = sadd.s32 %s297, 1
    %p301 = scmp.eq.s32.totalorder %s32, 3
    %p302 = scmp.ne.s32.totalorder %s297, %s299
    %p303 = scmp.eq.s32.totalorder %s32, 0
    %p304 = por %p302, %p303
    %p305 = scmp.ne.s32.totalorder %s297, %s299
    %p306 = scmp.eq.s32.totalorder %s37, 3
    %p307 = por %p305, %p306
    %p308 = scmp.ne.s32.totalorder %s299, %s300
    %p309 = scmp.eq.s32.totalorder %s37, 0
    %p310 = por %p308, %p309
    %p311 = scmp.ne.s32.totalorder %s299, %s300
    %p312 = scmp.eq.s32.totalorder %s38, 3
    %p313 = por %p311, %p312
    %p315 = scmp.ne.s32.totalorder %s300, %s314
    %p316 = scmp.eq.s32.totalorder %s38, 0
    %p317 = por %p315, %p316
    %s319 = sadd.s32 %s318, 1
    %p322 = scmp.eq.s32.totalorder %s32, 3
    %p323 = scmp.ne.s32.totalorder %s318, %s320
    %p324 = scmp.eq.s32.totalorder %s32, 0
    %p325 = por %p323, %p324
    %p326 = scmp.ne.s32.totalorder %s318, %s320
    %p327 = scmp.eq.s32.totalorder %s37, 3
    %p328 = por %p326, %p327
    %p329 = scmp.ne.s32.totalorder %s320, %s321
    %p330 = scmp.eq.s32.totalorder %s37, 0
    %p331 = por %p329, %p330
    %p332 = scmp.ne.s32.totalorder %s320, %s321
    %p333 = scmp.eq.s32.totalorder %s38, 3
    %p334 = por %p332, %p333
    %p336 = scmp.ne.s32.totalorder %s321, %s335
    %p337 = scmp.eq.s32.totalorder %s38, 0
    %p338 = por %p336, %p337
    %s340 = sadd.s32 %s339, 1
    %p343 = scmp.eq.s32.totalorder %s32, 3
    %p344 = scmp.ne.s32.totalorder %s339, %s341
    %p345 = scmp.eq.s32.totalorder %s32, 0
    %p346 = por %p344, %p345
    %p347 = scmp.ne.s32.totalorder %s339, %s341
    %p348 = scmp.eq.s32.totalorder %s37, 3
    %p349 = por %p347, %p348
    %p350 = scmp.ne.s32.totalorder %s341, %s342
    %p351 = scmp.eq.s32.totalorder %s37, 0
    %p352 = por %p350, %p351
    %p353 = scmp.ne.s32.totalorder %s341, %s342
    %p354 = scmp.eq.s32.totalorder %s38, 3
    %p355 = por %p353, %p354
    %p357 = scmp.ne.s32.totalorder %s342, %s356
    %p358 = scmp.eq.s32.totalorder %s38, 0
    %p359 = por %p357, %p358
    %s361 = sadd.s32 %s360, 1
    %p364 = scmp.eq.s32.totalorder %s32, 3
    %p365 = scmp.ne.s32.totalorder %s360, %s362
    %p366 = scmp.eq.s32.totalorder %s32, 0
    %p367 = por %p365, %p366
    %p368 = scmp.ne.s32.totalorder %s360, %s362
    %p369 = scmp.eq.s32.totalorder %s37, 3
    %p370 = por %p368, %p369
    %p371 = scmp.ne.s32.totalorder %s362, %s363
    %p372 = scmp.eq.s32.totalorder %s37, 0
    %p373 = por %p371, %p372
    %p374 = scmp.ne.s32.totalorder %s362, %s363
    %p375 = scmp.eq.s32.totalorder %s38, 3
    %p376 = por %p374, %p375
    %p378 = scmp.ne.s32.totalorder %s363, %s377
    %p379 = scmp.eq.s32.totalorder %s38, 0
    %p380 = por %p378, %p379
    %s382 = sadd.s32 %s381, 1
    %p385 = scmp.eq.s32.totalorder %s32, 3
    %p386 = scmp.ne.s32.totalorder %s381, %s383
    %p387 = scmp.eq.s32.totalorder %s32, 0
    %p388 = por %p386, %p387
    %p389 = scmp.ne.s32.totalorder %s381, %s383
    %p390 = scmp.eq.s32.totalorder %s37, 3
    %p391 = por %p389, %p390
    %p392 = scmp.ne.s32.totalorder %s383, %s384
    %p393 = scmp.eq.s32.totalorder %s37, 0
    %p394 = por %p392, %p393
    %p395 = scmp.ne.s32.totalorder %s383, %s384
    %p396 = scmp.eq.s32.totalorder %s38, 3
    %p397 = por %p395, %p396
    %p399 = scmp.ne.s32.totalorder %s384, %s398
    %p400 = scmp.eq.s32.totalorder %s38, 0
    %p401 = por %p399, %p400
    %s403 = sadd.s32 %s402, 1
    %p406 = scmp.eq.s32.totalorder %s32, 3
    %p407 = scmp.ne.s32.totalorder %s402, %s404
    %p408 = scmp.eq.s32.totalorder %s32, 0
    %p409 = por %p407, %p408
    %p410 = scmp.ne.s32.totalorder %s402, %s404
    %p411 = scmp.eq.s32.totalorder %s37, 3
    %p412 = por %p410, %p411
    %p413 = scmp.ne.s32.totalorder %s404, %s405
    %p414 = scmp.eq.s32.totalorder %s37, 0
    %p415 = por %p413, %p414
    %p416 = scmp.ne.s32.totalorder %s404, %s405
    %p417 = scmp.eq.s32.totalorder %s38, 3
    %p418 = por %p416, %p417
    %p420 = scmp.ne.s32.totalorder %s405, %s419
    %p421 = scmp.eq.s32.totalorder %s38, 0
    %p422 = por %p420, %p421
    %s424 = sadd.s32 %s423, 1
    %p427 = scmp.eq.s32.totalorder %s32, 3
    %p428 = scmp.ne.s32.totalorder %s423, %s425
    %p429 = scmp.eq.s32.totalorder %s32, 0
    %p430 = por %p428, %p429
    %p431 = scmp.ne.s32.totalorder %s423, %s425
    %p432 = scmp.eq.s32.totalorder %s37, 3
    %p433 = por %p431, %p432
    %p434 = scmp.ne.s32.totalorder %s425, %s426
    %p435 = scmp.eq.s32.totalorder %s37, 0
    %p436 = por %p434, %p435
    %p437 = scmp.ne.s32.totalorder %s425, %s426
    %p438 = scmp.eq.s32.totalorder %s38, 3
    %p439 = por %p437, %p438
    %p441 = scmp.ne.s32.totalorder %s426, %s440
    %p442 = scmp.eq.s32.totalorder %s38, 0
    %p443 = por %p441, %p442
    %s445 = sadd.s32 %s444, 1
    %p448 = scmp.eq.s32.totalorder %s32, 3
    %p449 = scmp.ne.s32.totalorder %s444, %s446
    %p450 = scmp.eq.s32.totalorder %s32, 0
    %p451 = por %p449, %p450
    %p452 = scmp.ne.s32.totalorder %s444, %s446
    %p453 = scmp.eq.s32.totalorder %s37, 3
    %p454 = por %p452, %p453
    %p455 = scmp.ne.s32.totalorder %s446, %s447
    %p456 = scmp.eq.s32.totalorder %s37, 0
    %p457 = por %p455, %p456
    %p458 = scmp.ne.s32.totalorder %s446, %s447
    %p459 = scmp.eq.s32.totalorder %s38, 3
    %p460 = por %p458, %p459
    %p462 = scmp.ne.s32.totalorder %s447, %s461
    %p463 = scmp.eq.s32.totalorder %s38, 0
    %p464 = por %p462, %p463
    %s466 = sadd.s32 %s465, 1
    %p469 = scmp.eq.s32.totalorder %s32, 3
    %p470 = scmp.ne.s32.totalorder %s465, %s467
    %p471 = scmp.eq.s32.totalorder %s32, 0
    %p472 = por %p470, %p471
    %p473 = scmp.ne.s32.totalorder %s465, %s467
    %p474 = scmp.eq.s32.totalorder %s37, 3
    %p475 = por %p473, %p474
    %p476 = scmp.ne.s32.totalorder %s467, %s468
    %p477 = scmp.eq.s32.totalorder %s37, 0
    %p478 = por %p476, %p477
    %p479 = scmp.ne.s32.totalorder %s467, %s468
    %p480 = scmp.eq.s32.totalorder %s38, 3
    %p481 = por %p479, %p480
    %p483 = scmp.ne.s32.totalorder %s468, %s482
    %p484 = scmp.eq.s32.totalorder %s38, 0
    %p485 = por %p483, %p484
    %s487 = sadd.s32 %s486, 1
    %p490 = scmp.eq.s32.totalorder %s32, 3
    %p491 = scmp.ne.s32.totalorder %s486, %s488
    %p492 = scmp.eq.s32.totalorder %s32, 0
    %p493 = por %p491, %p492
    %p494 = scmp.ne.s32.totalorder %s486, %s488
    %p495 = scmp.eq.s32.totalorder %s37, 3
    %p496 = por %p494, %p495
    %p497 = scmp.ne.s32.totalorder %s488, %s489
    %p498 = scmp.eq.s32.totalorder %s37, 0
    %p499 = por %p497, %p498
    %p500 = scmp.ne.s32.totalorder %s488, %s489
    %p501 = scmp.eq.s32.totalorder %s38, 3
    %p502 = por %p500, %p501
    %p504 = scmp.ne.s32.totalorder %s489, %s503
    %p505 = scmp.eq.s32.totalorder %s38, 0
    %p506 = por %p504, %p505
    %s508 = sadd.s32 %s507, 1
    %p511 = scmp.eq.s32.totalorder %s32, 3
    %p512 = scmp.ne.s32.totalorder %s507, %s509
    %p513 = scmp.eq.s32.totalorder %s32, 0
    %p514 = por %p512, %p513
    %p515 = scmp.ne.s32.totalorder %s507, %s509
    %p516 = scmp.eq.s32.totalorder %s37, 3
    %p517 = por %p515, %p516
    %p518 = scmp.ne.s32.totalorder %s509, %s510
    %p519 = scmp.eq.s32.totalorder %s37, 0
    %p520 = por %p518, %p519
    %p521 = scmp.ne.s32.totalorder %s509, %s510
    %p522 = scmp.eq.s32.totalorder %s38, 3
    %p523 = por %p521, %p522
    %p525 = scmp.ne.s32.totalorder %s510, %s524
    %p526 = scmp.eq.s32.totalorder %s38, 0
    %p527 = por %p525, %p526
    %s529 = sadd.s32 %s528, 1
    %p532 = scmp.eq.s32.totalorder %s32, 3
    %p533 = scmp.ne.s32.totalorder %s528, %s530
    %p534 = scmp.eq.s32.totalorder %s32, 0
    %p535 = por %p533, %p534
    %p536 = scmp.ne.s32.totalorder %s528, %s530
    %p537 = scmp.eq.s32.totalorder %s37, 3
    %p538 = por %p536, %p537
    %p539 = scmp.ne.s32.totalorder %s530, %s531
    %p540 = scmp.eq.s32.totalorder %s37, 0
    %p541 = por %p539, %p540
    %p542 = scmp.ne.s32.totalorder %s530, %s531
    %p543 = scmp.eq.s32.totalorder %s38, 3
    %p544 = por %p542, %p543
    %p546 = scmp.ne.s32.totalorder %s531, %s545
    %p547 = scmp.eq.s32.totalorder %s38, 0
    %p548 = por %p546, %p547
    %s550 = sadd.s32 %s549, 1
    %p553 = scmp.eq.s32.totalorder %s32, 3
    %p554 = scmp.ne.s32.totalorder %s549, %s551
    %p555 = scmp.eq.s32.totalorder %s32, 0
    %p556 = por %p554, %p555
    %p557 = scmp.ne.s32.totalorder %s549, %s551
    %p558 = scmp.eq.s32.totalorder %s37, 3
    %p559 = por %p557, %p558
    %p560 = scmp.ne.s32.totalorder %s551, %s552
    %p561 = scmp.eq.s32.totalorder %s37, 0
    %p562 = por %p560, %p561
    %p563 = scmp.ne.s32.totalorder %s551, %s552
    %p564 = scmp.eq.s32.totalorder %s38, 3
    %p565 = por %p563, %p564
    %p567 = scmp.ne.s32.totalorder %s552, %s566
    %p568 = scmp.eq.s32.totalorder %s38, 0
    %p569 = por %p567, %p568
    %s571 = sadd.s32 %s570, 1
    %p574 = scmp.eq.s32.totalorder %s32, 3
    %p575 = scmp.ne.s32.totalorder %s570, %s572
    %p576 = scmp.eq.s32.totalorder %s32, 0
    %p577 = por %p575, %p576
    %p578 = scmp.ne.s32.totalorder %s570, %s572
    %p579 = scmp.eq.s32.totalorder %s37, 3
    %p580 = por %p578, %p579
    %p581 = scmp.ne.s32.totalorder %s572, %s573
    %p582 = scmp.eq.s32.totalorder %s37, 0
    %p583 = por %p581, %p582
    %p584 = scmp.ne.s32.totalorder %s572, %s573
    %p585 = scmp.eq.s32.totalorder %s38, 3
    %p586 = por %p584, %p585
    %p588 = scmp.ne.s32.totalorder %s573, %s587
    %p589 = scmp.eq.s32.totalorder %s38, 0
    %p590 = por %p588, %p589
    %s591 = ssub.s32 %s32, %s39
    %p592 = scmp.eq.s32.totalorder %s591, 0
    %s594 = sadd.s32 %s593, 1
    %s595 = scalar_select %p592, %s593, %s594
    %p598 = pneg %p592
    %p599 = scmp.eq.s32.totalorder %s32, 3
    %p600 = por %p598, %p599
    %p601 = scmp.ne.s32.totalorder %s593, %s596
    %p602 = scmp.eq.s32.totalorder %s32, 0
    %p603 = por %p601, %p602
    %p604 = scmp.ne.s32.totalorder %s593, %s596
    %p605 = scmp.eq.s32.totalorder %s37, 3
    %p606 = por %p604, %p605
    %p607 = scmp.ne.s32.totalorder %s596, %s597
    %p608 = scmp.eq.s32.totalorder %s37, 0
    %p609 = por %p607, %p608
    %p610 = scmp.ne.s32.totalorder %s596, %s597
    %p611 = scmp.eq.s32.totalorder %s38, 3
    %p612 = por %p610, %p611
    %p614 = scmp.ne.s32.totalorder %s597, %s613
    %p615 = scmp.eq.s32.totalorder %s38, 0
    %p616 = por %p614, %p615
    %p617 = scmp.le.s32.totalorder 1, %s32
    %p618 = scmp.lt.s32.totalorder %s32, 5
    %p619 = pnand %p617, %p618
    %p620 = pneg %p619
    // Predicated region
    $region9: #{tpu_custom_call.1} parent=5 // pred_check
      _
    $region10: #{tpu_custom_call.1} parent=5 // pred_check_branch
      %622 = sbr.rel (%p619) target = $region12
    $region11: #{tpu_custom_call.1} parent=5 // pred_region
      %s623 = ssub.s32 %s32, 1
      // Predicated region
      $region13: #{tpu_custom_call.1} parent=11 // pred_check
        %p624 = pneg %p79
      $region14: #{tpu_custom_call.1} parent=11 // pred_check_branch
        %626 = sbr.rel (%p624) target = $region16
      $region15: #{tpu_custom_call.1} parent=11 // pred_region
        _
      $region16: #{tpu_custom_call.1} parent=11 // pred_fallthru
        _
      // Predicated region
      $region17: #{tpu_custom_call.1} parent=11 // pred_check
        %p627 = pneg %p100
      $region18: #{tpu_custom_call.1} parent=11 // pred_check_branch
        %629 = sbr.rel (%p627) target = $region20
      $region19: #{tpu_custom_call.1} parent=11 // pred_region
        _
      $region20: #{tpu_custom_call.1} parent=11 // pred_fallthru
        _
      // Predicated region
      $region21: #{tpu_custom_call.1} parent=11 // pred_check
        %p630 = pneg %p121
      $region22: #{tpu_custom_call.1} parent=11 // pred_check_branch
        %632 = sbr.rel (%p630) target = $region24
      $region23: #{tpu_custom_call.1} parent=11 // pred_region
        _
      $region24: #{tpu_custom_call.1} parent=11 // pred_fallthru
        _
      // Predicated region
      $region25: #{tpu_custom_call.1} parent=11 // pred_check
        %p633 = pneg %p142
      $region26: #{tpu_custom_call.1} parent=11 // pred_check_branch
        %635 = sbr.rel (%p633) target = $region28
      $region27: #{tpu_custom_call.1} parent=11 // pred_region
        _
      $region28: #{tpu_custom_call.1} parent=11 // pred_fallthru
        _
      // Predicated region
      $region29: #{tpu_custom_call.1} parent=11 // pred_check
        %p636 = pneg %p163
      $region30: #{tpu_custom_call.1} parent=11 // pred_check_branch
        %638 = sbr.rel (%p636) target = $region32
      $region31: #{tpu_custom_call.1} parent=11 // pred_region
        _
      $region32: #{tpu_custom_call.1} parent=11 // pred_fallthru
        _
      // Predicated region
      $region33: #{tpu_custom_call.1} parent=11 // pred_check
        %p639 = pneg %p184
      $region34: #{tpu_custom_call.1} parent=11 // pred_check_branch
        %641 = sbr.rel (%p639) target = $region36
      $region35: #{tpu_custom_call.1} parent=11 // pred_region
        _
      $region36: #{tpu_custom_call.1} parent=11 // pred_fallthru
        _
      // Predicated region
      $region37: #{tpu_custom_call.1} parent=11 // pred_check
        %p642 = pneg %p205
      $region38: #{tpu_custom_call.1} parent=11 // pred_check_branch
        %644 = sbr.rel (%p642) target = $region40
      $region39: #{tpu_custom_call.1} parent=11 // pred_region
        _
      $region40: #{tpu_custom_call.1} parent=11 // pred_fallthru
        _
      // Predicated region
      $region41: #{tpu_custom_call.1} parent=11 // pred_check
        %p645 = pneg %p226
      $region42: #{tpu_custom_call.1} parent=11 // pred_check_branch
        %647 = sbr.rel (%p645) target = $region44
      $region43: #{tpu_custom_call.1} parent=11 // pred_region
        _
      $region44: #{tpu_custom_call.1} parent=11 // pred_fallthru
        _
      // Predicated region
      $region45: #{tpu_custom_call.1} parent=11 // pred_check
        %p648 = pneg %p247
      $region46: #{tpu_custom_call.1} parent=11 // pred_check_branch
        %650 = sbr.rel (%p648) target = $region48
      $region47: #{tpu_custom_call.1} parent=11 // pred_region
        _
      $region48: #{tpu_custom_call.1} parent=11 // pred_fallthru
        _
      // Predicated region
      $region49: #{tpu_custom_call.1} parent=11 // pred_check
        %p651 = pneg %p268
      $region50: #{tpu_custom_call.1} parent=11 // pred_check_branch
        %653 = sbr.rel (%p651) target = $region52
      $region51: #{tpu_custom_call.1} parent=11 // pred_region
        _
      $region52: #{tpu_custom_call.1} parent=11 // pred_fallthru
        _
      // Predicated region
      $region53: #{tpu_custom_call.1} parent=11 // pred_check
        %p654 = pneg %p289
      $region54: #{tpu_custom_call.1} parent=11 // pred_check_branch
        %656 = sbr.rel (%p654) target = $region56
      $region55: #{tpu_custom_call.1} parent=11 // pred_region
        _
      $region56: #{tpu_custom_call.1} parent=11 // pred_fallthru
        _
      // Predicated region
      $region57: #{tpu_custom_call.1} parent=11 // pred_check
        %p657 = pneg %p310
      $region58: #{tpu_custom_call.1} parent=11 // pred_check_branch
        %659 = sbr.rel (%p657) target = $region60
      $region59: #{tpu_custom_call.1} parent=11 // pred_region
        _
      $region60: #{tpu_custom_call.1} parent=11 // pred_fallthru
        _
      // Predicated region
      $region61: #{tpu_custom_call.1} parent=11 // pred_check
        %p660 = pneg %p331
      $region62: #{tpu_custom_call.1} parent=11 // pred_check_branch
        %662 = sbr.rel (%p660) target = $region64
      $region63: #{tpu_custom_call.1} parent=11 // pred_region
        _
      $region64: #{tpu_custom_call.1} parent=11 // pred_fallthru
        _
      // Predicated region
      $region65: #{tpu_custom_call.1} parent=11 // pred_check
        %p663 = pneg %p352
      $region66: #{tpu_custom_call.1} parent=11 // pred_check_branch
        %665 = sbr.rel (%p663) target = $region68
      $region67: #{tpu_custom_call.1} parent=11 // pred_region
        _
      $region68: #{tpu_custom_call.1} parent=11 // pred_fallthru
        _
      // Predicated region
      $region69: #{tpu_custom_call.1} parent=11 // pred_check
        %p666 = pneg %p373
      $region70: #{tpu_custom_call.1} parent=11 // pred_check_branch
        %668 = sbr.rel (%p666) target = $region72
      $region71: #{tpu_custom_call.1} parent=11 // pred_region
        _
      $region72: #{tpu_custom_call.1} parent=11 // pred_fallthru
        _
      // Predicated region
      $region73: #{tpu_custom_call.1} parent=11 // pred_check
        %p669 = pneg %p394
      $region74: #{tpu_custom_call.1} parent=11 // pred_check_branch
        %671 = sbr.rel (%p669) target = $region76
      $region75: #{tpu_custom_call.1} parent=11 // pred_region
        _
      $region76: #{tpu_custom_call.1} parent=11 // pred_fallthru
        _
      // Predicated region
      $region77: #{tpu_custom_call.1} parent=11 // pred_check
        %p672 = pneg %p415
      $region78: #{tpu_custom_call.1} parent=11 // pred_check_branch
        %674 = sbr.rel (%p672) target = $region80
      $region79: #{tpu_custom_call.1} parent=11 // pred_region
        _
      $region80: #{tpu_custom_call.1} parent=11 // pred_fallthru
        _
      // Predicated region
      $region81: #{tpu_custom_call.1} parent=11 // pred_check
        %p675 = pneg %p436
      $region82: #{tpu_custom_call.1} parent=11 // pred_check_branch
        %677 = sbr.rel (%p675) target = $region84
      $region83: #{tpu_custom_call.1} parent=11 // pred_region
        _
      $region84: #{tpu_custom_call.1} parent=11 // pred_fallthru
        _
      // Predicated region
      $region85: #{tpu_custom_call.1} parent=11 // pred_check
        %p678 = pneg %p457
      $region86: #{tpu_custom_call.1} parent=11 // pred_check_branch
        %680 = sbr.rel (%p678) target = $region88
      $region87: #{tpu_custom_call.1} parent=11 // pred_region
        _
      $region88: #{tpu_custom_call.1} parent=11 // pred_fallthru
        _
      // Predicated region
      $region89: #{tpu_custom_call.1} parent=11 // pred_check
        %p681 = pneg %p478
      $region90: #{tpu_custom_call.1} parent=11 // pred_check_branch
        %683 = sbr.rel (%p681) target = $region92
      $region91: #{tpu_custom_call.1} parent=11 // pred_region
        _
      $region92: #{tpu_custom_call.1} parent=11 // pred_fallthru
        _
      // Predicated region
      $region93: #{tpu_custom_call.1} parent=11 // pred_check
        %p684 = pneg %p499
      $region94: #{tpu_custom_call.1} parent=11 // pred_check_branch
        %686 = sbr.rel (%p684) target = $region96
      $region95: #{tpu_custom_call.1} parent=11 // pred_region
        _
      $region96: #{tpu_custom_call.1} parent=11 // pred_fallthru
        _
      // Predicated region
      $region97: #{tpu_custom_call.1} parent=11 // pred_check
        %p687 = pneg %p520
      $region98: #{tpu_custom_call.1} parent=11 // pred_check_branch
        %689 = sbr.rel (%p687) target = $region100
      $region99: #{tpu_custom_call.1} parent=11 // pred_region
        _
      $region100: #{tpu_custom_call.1} parent=11 // pred_fallthru
        _
      // Predicated region
      $region101: #{tpu_custom_call.1} parent=11 // pred_check
        %p690 = pneg %p541
      $region102: #{tpu_custom_call.1} parent=11 // pred_check_branch
        %692 = sbr.rel (%p690) target = $region104
      $region103: #{tpu_custom_call.1} parent=11 // pred_region
        _
      $region104: #{tpu_custom_call.1} parent=11 // pred_fallthru
        _
      // Predicated region
      $region105: #{tpu_custom_call.1} parent=11 // pred_check
        %p693 = pneg %p562
      $region106: #{tpu_custom_call.1} parent=11 // pred_check_branch
        %695 = sbr.rel (%p693) target = $region108
      $region107: #{tpu_custom_call.1} parent=11 // pred_region
        _
      $region108: #{tpu_custom_call.1} parent=11 // pred_fallthru
        _
      // Predicated region
      $region109: #{tpu_custom_call.1} parent=11 // pred_check
        %p696 = pneg %p583
      $region110: #{tpu_custom_call.1} parent=11 // pred_check_branch
        %698 = sbr.rel (%p696) target = $region112
      $region111: #{tpu_custom_call.1} parent=11 // pred_region
        _
      $region112: #{tpu_custom_call.1} parent=11 // pred_fallthru
        _
    $region12: #{tpu_custom_call.1} parent=5 // pred_fallthru
      _
    %p699 = scmp.lt.s32.totalorder %s32, 4
    // Predicated region
    $region113: #{tpu_custom_call.1} parent=5 // pred_check
      %p700 = pneg %p699
    $region114: #{tpu_custom_call.1} parent=5 // pred_check_branch
      %702 = sbr.rel (%p700) target = $region116
    $region115: #{tpu_custom_call.1} parent=5 // pred_region
      // Predicated region
      $region117: #{tpu_custom_call.1} parent=115 // pred_check
        %p703 = pneg %p52
      $region118: #{tpu_custom_call.1} parent=115 // pred_check_branch
        %705 = sbr.rel (%p703) target = $region120
      $region119: #{tpu_custom_call.1} parent=115 // pred_region
        %s706 = smul.u32 32, %s32
        %p707 = scmp.lt.s32.totalorder %s706, 127
        %s708 = scalar_select %p707, %s706, 127
        %s709 = smul.addr %s708, 8
        %s710 = scalar_lea.vmem %s0, %s709
        %s711 = smul.u32 32, %s32
      $region120: #{tpu_custom_call.1} parent=115 // pred_fallthru
        _
    $region116: #{tpu_custom_call.1} parent=5 // pred_fallthru
      _
    %p712 = scmp.le.s32.totalorder 1, %s32
    %p713 = scmp.lt.s32.totalorder %s32, 5
    %p714 = pnand %p712, %p713
    %p715 = pneg %p714
    // Predicated region
    $region121: #{tpu_custom_call.1} parent=5 // pred_check
      _
    $region122: #{tpu_custom_call.1} parent=5 // pred_check_branch
      %717 = sbr.rel (%p714) target = $region124
    $region123: #{tpu_custom_call.1} parent=5 // pred_region
      %s718 = ssub.s32 %s32, 1
      %s719 = smul.u32 32, %s37
      %p720 = scmp.lt.s32.totalorder %s719, 127
      %s721 = scalar_select %p720, %s719, 127
      %s722 = smul.addr %s721, 8
      %s723 = scalar_lea.vmem %s0, %s722
      %p724 = pneg %p58
      %p725 = pneg %p55
      %p726 = pneg %p79
      %p727 = pneg %p76
      %p728 = pneg %p100
      %p729 = pneg %p97
      %p730 = pneg %p121
      %p731 = pneg %p118
      %p732 = pneg %p142
      %p733 = pneg %p139
      %p734 = pneg %p163
      %p735 = pneg %p160
      %p736 = pneg %p184
      %p737 = pneg %p181
      %p738 = pneg %p205
      %p739 = pneg %p202
      %p740 = pneg %p226
      %p741 = pneg %p223
      %p742 = pneg %p247
      %p743 = pneg %p244
      %p744 = pneg %p268
      %p745 = pneg %p265
      %p746 = pneg %p289
      %p747 = pneg %p286
      %p748 = pneg %p310
      %p749 = pneg %p307
      %p750 = pneg %p331
      %p751 = pneg %p328
      %p752 = pneg %p352
      %p753 = pneg %p349
      %p754 = pneg %p373
      %p755 = pneg %p370
      %p756 = pneg %p394
      %p757 = pneg %p391
      %p758 = pneg %p415
      %p759 = pneg %p412
      %p760 = pneg %p436
      %p761 = pneg %p433
      %p762 = pneg %p457
      %p763 = pneg %p454
      %p764 = pneg %p478
      %p765 = pneg %p475
      %p766 = pneg %p499
      %p767 = pneg %p496
      %p768 = pneg %p520
      %p769 = pneg %p517
      %p770 = pneg %p541
      %p771 = pneg %p538
      %p772 = pneg %p562
      %p773 = pneg %p559
      %p774 = pneg %p583
      %p775 = pneg %p580
      %p776 = pneg %p609
      %p777 = pneg %p606
      %s778 = smul.u32 4, %s37
      %p779 = scmp.lt.s32.totalorder %s778, 15
      %s780 = scalar_select %p779, %s778, 15
      %s781 = smul.addr %s780, 8
      %s782 = scalar_lea.vmem %s26, %s781
      %s783 = smul.u32 32, %s37
      %p784 = scmp.lt.s32.totalorder %s783, 127
      %s785 = scalar_select %p784, %s783, 127
      %s786 = smul.addr %s785, 8
      %s787 = scalar_lea.vmem %s0, %s786
      %s788 = smul.u32 32, %s37
      %s789 = smul.u32 4, %s37
      %p790 = scmp.lt.s32.totalorder %s789, 15
      %s791 = scalar_select %p790, %s789, 15
      %s792 = smul.addr %s791, 8
      %s793 = scalar_lea.vmem %s26, %s792
      %s794 = smul.u32 4, %s37
      %v796 = vld [vmem:[%s787] sm:$0xff]
      %v797 = vld [vmem:[%s787 + $0x8] sm:$0xff]
      %v798 = vld [vmem:[%s787 + $0x10] sm:$0xff]
      %v799 = vld [vmem:[%s787 + $0x18] sm:$0xff]
      %v800 = vld [vmem:[%s787 + $0x20] sm:$0xff]
      %v801 = vld [vmem:[%s787 + $0x28] sm:$0xff]
      %v802 = vld [vmem:[%s787 + $0x30] sm:$0xff]
      %v803 = vld [vmem:[%s787 + $0x38] sm:$0xff]
      %v804 = vld [vmem:[%s787 + $0x40] sm:$0xff]
      %v805 = vld [vmem:[%s787 + $0x48] sm:$0xff]
      %v806 = vld [vmem:[%s787 + $0x50] sm:$0xff]
      %v807 = vld [vmem:[%s787 + $0x58] sm:$0xff]
      %v808 = vld [vmem:[%s787 + $0x60] sm:$0xff]
      %v809 = vld [vmem:[%s787 + $0x68] sm:$0xff]
      %v810 = vld [vmem:[%s787 + $0x70] sm:$0xff]
      %v811 = vld [vmem:[%s787 + $0x78] sm:$0xff]
      %v812 = vld [vmem:[%s787 + $0x80] sm:$0xff]
      %v813 = vld [vmem:[%s787 + $0x88] sm:$0xff]
      %v814 = vld [vmem:[%s787 + $0x90] sm:$0xff]
      %v815 = vld [vmem:[%s787 + $0x98] sm:$0xff]
      %v816 = vld [vmem:[%s787 + $0xa0] sm:$0xff]
      %v817 = vld [vmem:[%s787 + $0xa8] sm:$0xff]
      %v818 = vld [vmem:[%s787 + $0xb0] sm:$0xff]
      %v819 = vld [vmem:[%s787 + $0xb8] sm:$0xff]
      %v820 = vld [vmem:[%s787 + $0xc0] sm:$0xff]
      %v821 = vld [vmem:[%s787 + $0xc8] sm:$0xff]
      %v822 = vld [vmem:[%s787 + $0xd0] sm:$0xff]
      %v823 = vld [vmem:[%s787 + $0xd8] sm:$0xff]
      %v824 = vld [vmem:[%s787 + $0xe0] sm:$0xff]
      %v825 = vld [vmem:[%s787 + $0xe8] sm:$0xff]
      %v826 = vld [vmem:[%s787 + $0xf0] sm:$0xff]
      %v827 = vld [vmem:[%s787 + $0xf8] sm:$0xff]
      %v828 = vld [vmem:[%s1] sm:$0xff]
      %v829 = vadd.f32 %v796, %v828
      %v830 = vadd.f32 %v797, %v828
      %v831 = vadd.f32 %v798, %v828
      %v832 = vadd.f32 %v799, %v828
      %v833 = vadd.f32 %v800, %v828
      %v834 = vadd.f32 %v801, %v828
      %v835 = vadd.f32 %v802, %v828
      %v836 = vadd.f32 %v803, %v828
      %v837 = vadd.f32 %v804, %v828
      %v838 = vadd.f32 %v805, %v828
      %v839 = vadd.f32 %v806, %v828
      %v840 = vadd.f32 %v807, %v828
      %v841 = vadd.f32 %v808, %v828
      %v842 = vadd.f32 %v809, %v828
      %v843 = vadd.f32 %v810, %v828
      %v844 = vadd.f32 %v811, %v828
      %v845 = vadd.f32 %v812, %v828
      %v846 = vadd.f32 %v813, %v828
      %v847 = vadd.f32 %v814, %v828
      %v848 = vadd.f32 %v815, %v828
      %v849 = vadd.f32 %v816, %v828
      %v850 = vadd.f32 %v817, %v828
      %v851 = vadd.f32 %v818, %v828
      %v852 = vadd.f32 %v819, %v828
      %v853 = vadd.f32 %v820, %v828
      %v854 = vadd.f32 %v821, %v828
      %v855 = vadd.f32 %v822, %v828
      %v856 = vadd.f32 %v823, %v828
      %v857 = vadd.f32 %v824, %v828
      %v858 = vadd.f32 %v825, %v828
      %v859 = vadd.f32 %v826, %v828
      %v860 = vadd.f32 %v827, %v828
      %v861 = vpack.c.bf16 %v830, %v829
      %v862 = vpack.c.bf16 %v832, %v831
      %v863 = vpack.c.bf16 %v834, %v833
      %v864 = vpack.c.bf16 %v836, %v835
      %v865 = vpack.c.bf16 %v838, %v837
      %v866 = vpack.c.bf16 %v840, %v839
      %v867 = vpack.c.bf16 %v842, %v841
      %v868 = vpack.c.bf16 %v844, %v843
      %v869 = vpack.c.bf16 %v846, %v845
      %v870 = vpack.c.bf16 %v848, %v847
      %v871 = vpack.c.bf16 %v850, %v849
      %v872 = vpack.c.bf16 %v852, %v851
      %v873 = vpack.c.bf16 %v854, %v853
      %v874 = vpack.c.bf16 %v856, %v855
      %v875 = vpack.c.bf16 %v858, %v857
      %v876 = vpack.c.bf16 %v860, %v859
      %v877 = vpack.c.bf16 %v829, %v829
      %v878 = vpack.c.bf16 %v830, %v830
      %v879 = vpack.c.bf16 %v831, %v831
      %v880 = vpack.c.bf16 %v832, %v832
      %v881 = vpack.c.bf16 %v833, %v833
      %v882 = vpack.c.bf16 %v834, %v834
      %v883 = vpack.c.bf16 %v835, %v835
      %v884 = vpack.c.bf16 %v836, %v836
      %v885 = vpack.c.bf16 %v837, %v837
      %v886 = vpack.c.bf16 %v838, %v838
      %v887 = vpack.c.bf16 %v839, %v839
      %v888 = vpack.c.bf16 %v840, %v840
      %v889 = vpack.c.bf16 %v841, %v841
      %v890 = vpack.c.bf16 %v842, %v842
      %v891 = vpack.c.bf16 %v843, %v843
      %v892 = vpack.c.bf16 %v844, %v844
      %v893 = vpack.c.bf16 %v845, %v845
      %v894 = vpack.c.bf16 %v846, %v846
      %v895 = vpack.c.bf16 %v847, %v847
      %v896 = vpack.c.bf16 %v848, %v848
      %v897 = vpack.c.bf16 %v849, %v849
      %v898 = vpack.c.bf16 %v850, %v850
      %v899 = vpack.c.bf16 %v851, %v851
      %v900 = vpack.c.bf16 %v852, %v852
      %v901 = vpack.c.bf16 %v853, %v853
      %v902 = vpack.c.bf16 %v854, %v854
      %v903 = vpack.c.bf16 %v855, %v855
      %v904 = vpack.c.bf16 %v856, %v856
      %v905 = vpack.c.bf16 %v857, %v857
      %v906 = vpack.c.bf16 %v858, %v858
      %v907 = vpack.c.bf16 %v859, %v859
      %v908 = vpack.c.bf16 %v860, %v860
      %v909 = vld [vmem:[%s6] sm:$0xf]
      %v910 = vld [vmem:[%s6 + $0x4] sm:$0xf]
      %v911 = vld [vmem:[%s6 + $0x8] sm:$0xf]
      %v912 = vld [vmem:[%s6 + $0xc] sm:$0xf]
      %v913 = vld [vmem:[%s6 + $0x10] sm:$0xf]
      %v914 = vld [vmem:[%s6 + $0x14] sm:$0xf]
      %v915 = vld [vmem:[%s6 + $0x18] sm:$0xf]
      %v916 = vld [vmem:[%s6 + $0x1c] sm:$0xf]
      %v917 = vld [vmem:[%s6 + $0x20] sm:$0xf]
      %v918 = vld [vmem:[%s6 + $0x24] sm:$0xf]
      %v919 = vld [vmem:[%s6 + $0x28] sm:$0xf]
      %v920 = vld [vmem:[%s6 + $0x2c] sm:$0xf]
      %v921 = vld [vmem:[%s7] sm:$0x1]
      %v923 = vperm.slane %v921, 0
      %v937 = vunpack.c.l.b16 %v909
      %v938 = vunpack.c.l.b16 %v910
      %v939 = vunpack.c.l.b16 %v911
      %v940 = vunpack.c.l.b16 %v912
      %v941 = vunpack.c.l.b16 %v913
      %v942 = vunpack.c.l.b16 %v914
      %v943 = vunpack.c.l.b16 %v915
      %v944 = vunpack.c.l.b16 %v916
      %v945 = vunpack.c.l.b16 %v917
      %v946 = vunpack.c.l.b16 %v918
      %v947 = vunpack.c.l.b16 %v919
      %v948 = vunpack.c.l.b16 %v920
      %v949 = vpack.c.b16 %v938, %v937
      %v950 = vpack.c.b16 %v940, %v939
      %v951 = vpack.c.b16 %v942, %v941
      %v952 = vpack.c.b16 %v944, %v943
      %v953 = vpack.c.b16 %v946, %v945
      %v954 = vpack.c.b16 %v948, %v947
      %vm961 = vcmask 785408
      %v963 = vsel %vm961, %v861, 0
      %v966 = vsel %vm961, %v862, 0
      %v969 = vsel %vm961, %v863, 0
      %v972 = vsel %vm961, %v864, 0
      %v975 = vsel %vm961, %v865, 0
      %v978 = vsel %vm961, %v866, 0
      %v981 = vsel %vm961, %v867, 0
      %v984 = vsel %vm961, %v868, 0
      %v987 = vsel %vm961, %v869, 0
      %v990 = vsel %vm961, %v870, 0
      %v993 = vsel %vm961, %v871, 0
      %v996 = vsel %vm961, %v872, 0
      %v999 = vsel %vm961, %v873, 0
      %v1002 = vsel %vm961, %v874, 0
      %v1005 = vsel %vm961, %v875, 0
      %v1008 = vsel %vm961, %v876, 0
      %1010 = vmatpush.bf16.msra.mxu0 0
      %1011 = vmatpush.bf16.msra.mxu0 0
      %1012 = vmatpush.bf16.msra.mxu0 %v954
      %1013 = vmatpush.bf16.msra.mxu0 %v953
      %1014 = vmatpush.bf16.msra.mxu0 %v952
      %1015 = vmatpush.bf16.msra.mxu0 %v951
      %1016 = vmatpush.bf16.msra.mxu0 %v950
      %1017 = vmatpush.bf16.msra.mxu0 %v949
      %1018 = vmatmul.bf16.gmra.mxu0 %v963
      %v1019 = vpop.f32.mrf.mxu0
      %v1020 = vadd.f32 %v923, %v1019
      %v1021 = vpop.f32.mrf.mxu0
      %v1022 = vadd.f32 %v923, %v1021
      %1023 = vmatmul.bf16.gmra.mxu0 %v966
      %v1024 = vpop.f32.mrf.mxu0
      %v1025 = vadd.f32 %v923, %v1024
      %v1026 = vpop.f32.mrf.mxu0
      %v1027 = vadd.f32 %v923, %v1026
      %1028 = vmatmul.bf16.gmra.mxu0 %v969
      %v1029 = vpop.f32.mrf.mxu0
      %v1030 = vadd.f32 %v923, %v1029
      %v1031 = vpop.f32.mrf.mxu0
      %v1032 = vadd.f32 %v923, %v1031
      %1033 = vmatmul.bf16.gmra.mxu0 %v972
      %v1034 = vpop.f32.mrf.mxu0
      %v1035 = vadd.f32 %v923, %v1034
      %v1036 = vpop.f32.mrf.mxu0
      %v1037 = vadd.f32 %v923, %v1036
      %1038 = vmatmul.bf16.gmra.mxu0 %v975
      %v1039 = vpop.f32.mrf.mxu0
      %v1040 = vadd.f32 %v923, %v1039
      %v1041 = vpop.f32.mrf.mxu0
      %v1042 = vadd.f32 %v923, %v1041
      %1043 = vmatmul.bf16.gmra.mxu0 %v978
      %v1044 = vpop.f32.mrf.mxu0
      %v1045 = vadd.f32 %v923, %v1044
      %v1046 = vpop.f32.mrf.mxu0
      %v1047 = vadd.f32 %v923, %v1046
      %1048 = vmatmul.bf16.gmra.mxu0 %v981
      %v1049 = vpop.f32.mrf.mxu0
      %v1050 = vadd.f32 %v923, %v1049
      %v1051 = vpop.f32.mrf.mxu0
      %v1052 = vadd.f32 %v923, %v1051
      %1053 = vmatmul.bf16.gmra.mxu0 %v984
      %v1054 = vpop.f32.mrf.mxu0
      %v1055 = vadd.f32 %v923, %v1054
      %v1056 = vpop.f32.mrf.mxu0
      %v1057 = vadd.f32 %v923, %v1056
      %1058 = vmatmul.bf16.gmra.mxu0 %v987
      %v1059 = vpop.f32.mrf.mxu0
      %v1060 = vadd.f32 %v923, %v1059
      %v1061 = vpop.f32.mrf.mxu0
      %v1062 = vadd.f32 %v923, %v1061
      %1063 = vmatmul.bf16.gmra.mxu0 %v990
      %v1064 = vpop.f32.mrf.mxu0
      %v1065 = vadd.f32 %v923, %v1064
      %v1066 = vpop.f32.mrf.mxu0
      %v1067 = vadd.f32 %v923, %v1066
      %1068 = vmatmul.bf16.gmra.mxu0 %v993
      %v1069 = vpop.f32.mrf.mxu0
      %v1070 = vadd.f32 %v923, %v1069
      %v1071 = vpop.f32.mrf.mxu0
      %v1072 = vadd.f32 %v923, %v1071
      %1073 = vmatmul.bf16.gmra.mxu0 %v996
      %v1074 = vpop.f32.mrf.mxu0
      %v1075 = vadd.f32 %v923, %v1074
      %v1076 = vpop.f32.mrf.mxu0
      %v1077 = vadd.f32 %v923, %v1076
      %1078 = vmatmul.bf16.gmra.mxu0 %v999
      %v1079 = vpop.f32.mrf.mxu0
      %v1080 = vadd.f32 %v923, %v1079
      %v1081 = vpop.f32.mrf.mxu0
      %v1082 = vadd.f32 %v923, %v1081
      %1083 = vmatmul.bf16.gmra.mxu0 %v1002
      %v1084 = vpop.f32.mrf.mxu0
      %v1085 = vadd.f32 %v923, %v1084
      %v1086 = vpop.f32.mrf.mxu0
      %v1087 = vadd.f32 %v923, %v1086
      %1088 = vmatmul.bf16.gmra.mxu0 %v1005
      %v1089 = vpop.f32.mrf.mxu0
      %v1090 = vadd.f32 %v923, %v1089
      %v1091 = vpop.f32.mrf.mxu0
      %v1092 = vadd.f32 %v923, %v1091
      %1093 = vmatmul.bf16.gmra.mxu0 %v1008
      %v1094 = vpop.f32.mrf.mxu0
      %v1095 = vadd.f32 %v923, %v1094
      %v1096 = vpop.f32.mrf.mxu0
      %v1097 = vadd.f32 %v923, %v1096
      %1098 = vdwg.mxu0
      %v1099 = vld [vmem:[%s8] sm:$0xf]
      %v1100 = vld [vmem:[%s8 + $0x4] sm:$0xf]
      %v1101 = vld [vmem:[%s8 + $0x8] sm:$0xf]
      %v1102 = vld [vmem:[%s8 + $0xc] sm:$0xf]
      %v1103 = vld [vmem:[%s8 + $0x10] sm:$0xf]
      %v1104 = vld [vmem:[%s8 + $0x14] sm:$0xf]
      %v1105 = vld [vmem:[%s8 + $0x18] sm:$0xf]
      %v1106 = vld [vmem:[%s8 + $0x1c] sm:$0xf]
      %v1107 = vld [vmem:[%s8 + $0x20] sm:$0xf]
      %v1108 = vld [vmem:[%s8 + $0x24] sm:$0xf]
      %v1109 = vld [vmem:[%s8 + $0x28] sm:$0xf]
      %v1110 = vld [vmem:[%s8 + $0x2c] sm:$0xf]
      %v1111 = vld [vmem:[%s9] sm:$0x1]
      %v1113 = vperm.slane %v1111, 0
      %v1127 = vunpack.c.l.b16 %v1099
      %v1128 = vunpack.c.l.b16 %v1100
      %v1129 = vunpack.c.l.b16 %v1101
      %v1130 = vunpack.c.l.b16 %v1102
      %v1131 = vunpack.c.l.b16 %v1103
      %v1132 = vunpack.c.l.b16 %v1104
      %v1133 = vunpack.c.l.b16 %v1105
      %v1134 = vunpack.c.l.b16 %v1106
      %v1135 = vunpack.c.l.b16 %v1107
      %v1136 = vunpack.c.l.b16 %v1108
      %v1137 = vunpack.c.l.b16 %v1109
      %v1138 = vunpack.c.l.b16 %v1110
      %v1139 = vpack.c.b16 %v1128, %v1127
      %v1140 = vpack.c.b16 %v1130, %v1129
      %v1141 = vpack.c.b16 %v1132, %v1131
      %v1142 = vpack.c.b16 %v1134, %v1133
      %v1143 = vpack.c.b16 %v1136, %v1135
      %v1144 = vpack.c.b16 %v1138, %v1137
      %1151 = vmatpush.bf16.msra.mxu0 0
      %1152 = vmatpush.bf16.msra.mxu0 0
      %1153 = vmatpush.bf16.msra.mxu0 %v1144
      %1154 = vmatpush.bf16.msra.mxu0 %v1143
      %1155 = vmatpush.bf16.msra.mxu0 %v1142
      %1156 = vmatpush.bf16.msra.mxu0 %v1141
      %1157 = vmatpush.bf16.msra.mxu0 %v1140
      %1158 = vmatpush.bf16.msra.mxu0 %v1139
      %1159 = vmatmul.bf16.gmra.mxu0 %v963
      %v1160 = vpop.f32.mrf.mxu0
      %v1161 = vadd.f32 %v1113, %v1160
      %v1162 = vpop.f32.mrf.mxu0
      %v1163 = vadd.f32 %v1113, %v1162
      %1164 = vmatmul.bf16.gmra.mxu0 %v966
      %v1165 = vpop.f32.mrf.mxu0
      %v1166 = vadd.f32 %v1113, %v1165
      %v1167 = vpop.f32.mrf.mxu0
      %v1168 = vadd.f32 %v1113, %v1167
      %1169 = vmatmul.bf16.gmra.mxu0 %v969
      %v1170 = vpop.f32.mrf.mxu0
      %v1171 = vadd.f32 %v1113, %v1170
      %v1172 = vpop.f32.mrf.mxu0
      %v1173 = vadd.f32 %v1113, %v1172
      %1174 = vmatmul.bf16.gmra.mxu0 %v972
      %v1175 = vpop.f32.mrf.mxu0
      %v1176 = vadd.f32 %v1113, %v1175
      %v1177 = vpop.f32.mrf.mxu0
      %v1178 = vadd.f32 %v1113, %v1177
      %1179 = vmatmul.bf16.gmra.mxu0 %v975
      %v1180 = vpop.f32.mrf.mxu0
      %v1181 = vadd.f32 %v1113, %v1180
      %v1182 = vpop.f32.mrf.mxu0
      %v1183 = vadd.f32 %v1113, %v1182
      %1184 = vmatmul.bf16.gmra.mxu0 %v978
      %v1185 = vpop.f32.mrf.mxu0
      %v1186 = vadd.f32 %v1113, %v1185
      %v1187 = vpop.f32.mrf.mxu0
      %v1188 = vadd.f32 %v1113, %v1187
      %1189 = vmatmul.bf16.gmra.mxu0 %v981
      %v1190 = vpop.f32.mrf.mxu0
      %v1191 = vadd.f32 %v1113, %v1190
      %v1192 = vpop.f32.mrf.mxu0
      %v1193 = vadd.f32 %v1113, %v1192
      %1194 = vmatmul.bf16.gmra.mxu0 %v984
      %v1195 = vpop.f32.mrf.mxu0
      %v1196 = vadd.f32 %v1113, %v1195
      %v1197 = vpop.f32.mrf.mxu0
      %v1198 = vadd.f32 %v1113, %v1197
      %1199 = vmatmul.bf16.gmra.mxu0 %v987
      %v1200 = vpop.f32.mrf.mxu0
      %v1201 = vadd.f32 %v1113, %v1200
      %v1202 = vpop.f32.mrf.mxu0
      %v1203 = vadd.f32 %v1113, %v1202
      %1204 = vmatmul.bf16.gmra.mxu0 %v990
      %v1205 = vpop.f32.mrf.mxu0
      %v1206 = vadd.f32 %v1113, %v1205
      %v1207 = vpop.f32.mrf.mxu0
      %v1208 = vadd.f32 %v1113, %v1207
      %1209 = vmatmul.bf16.gmra.mxu0 %v993
      %v1210 = vpop.f32.mrf.mxu0
      %v1211 = vadd.f32 %v1113, %v1210
      %v1212 = vpop.f32.mrf.mxu0
      %v1213 = vadd.f32 %v1113, %v1212
      %1214 = vmatmul.bf16.gmra.mxu0 %v996
      %v1215 = vpop.f32.mrf.mxu0
      %v1216 = vadd.f32 %v1113, %v1215
      %v1217 = vpop.f32.mrf.mxu0
      %v1218 = vadd.f32 %v1113, %v1217
      %1219 = vmatmul.bf16.gmra.mxu0 %v999
      %v1220 = vpop.f32.mrf.mxu0
      %v1221 = vadd.f32 %v1113, %v1220
      %v1222 = vpop.f32.mrf.mxu0
      %v1223 = vadd.f32 %v1113, %v1222
      %1224 = vmatmul.bf16.gmra.mxu0 %v1002
      %v1225 = vpop.f32.mrf.mxu0
      %v1226 = vadd.f32 %v1113, %v1225
      %v1227 = vpop.f32.mrf.mxu0
      %v1228 = vadd.f32 %v1113, %v1227
      %1229 = vmatmul.bf16.gmra.mxu0 %v1005
      %v1230 = vpop.f32.mrf.mxu0
      %v1231 = vadd.f32 %v1113, %v1230
      %v1232 = vpop.f32.mrf.mxu0
      %v1233 = vadd.f32 %v1113, %v1232
      %1234 = vmatmul.bf16.gmra.mxu0 %v1008
      %v1235 = vpop.f32.mrf.mxu0
      %v1236 = vadd.f32 %v1113, %v1235
      %v1237 = vpop.f32.mrf.mxu0
      %v1238 = vadd.f32 %v1113, %v1237
      %1239 = vdwg.mxu0
      %v1240 = vld [vmem:[%s4] sm:$0xf]
      %v1241 = vld [vmem:[%s4 + $0x4] sm:$0xf]
      %v1242 = vld [vmem:[%s4 + $0x8] sm:$0xf]
      %v1243 = vld [vmem:[%s4 + $0xc] sm:$0xf]
      %v1244 = vld [vmem:[%s4 + $0x10] sm:$0xf]
      %v1245 = vld [vmem:[%s4 + $0x14] sm:$0xf]
      %v1246 = vld [vmem:[%s4 + $0x18] sm:$0xf]
      %v1247 = vld [vmem:[%s4 + $0x1c] sm:$0xf]
      %v1248 = vld [vmem:[%s4 + $0x20] sm:$0xf]
      %v1249 = vld [vmem:[%s4 + $0x24] sm:$0xf]
      %v1250 = vld [vmem:[%s4 + $0x28] sm:$0xf]
      %v1251 = vld [vmem:[%s4 + $0x2c] sm:$0xf]
      %v1252 = vld [vmem:[%s5] sm:$0x1]
      %v1254 = vperm.slane %v1252, 0
      %v1288 = vunpack.c.l.b16 %v877
      %v1289 = vunpack.c.l.b16 %v878
      %v1290 = vunpack.c.l.b16 %v879
      %v1291 = vunpack.c.l.b16 %v880
      %v1292 = vunpack.c.l.b16 %v881
      %v1293 = vunpack.c.l.b16 %v882
      %v1294 = vunpack.c.l.b16 %v883
      %v1295 = vunpack.c.l.b16 %v884
      %v1296 = vunpack.c.l.b16 %v885
      %v1297 = vunpack.c.l.b16 %v886
      %v1298 = vunpack.c.l.b16 %v887
      %v1299 = vunpack.c.l.b16 %v888
      %v1300 = vunpack.c.l.b16 %v889
      %v1301 = vunpack.c.l.b16 %v890
      %v1302 = vunpack.c.l.b16 %v891
      %v1303 = vunpack.c.l.b16 %v892
      %v1304 = vunpack.c.l.b16 %v893
      %v1305 = vunpack.c.l.b16 %v894
      %v1306 = vunpack.c.l.b16 %v895
      %v1307 = vunpack.c.l.b16 %v896
      %v1308 = vunpack.c.l.b16 %v897
      %v1309 = vunpack.c.l.b16 %v898
      %v1310 = vunpack.c.l.b16 %v899
      %v1311 = vunpack.c.l.b16 %v900
      %v1312 = vunpack.c.l.b16 %v901
      %v1313 = vunpack.c.l.b16 %v902
      %v1314 = vunpack.c.l.b16 %v903
      %v1315 = vunpack.c.l.b16 %v904
      %v1316 = vunpack.c.l.b16 %v905
      %v1317 = vunpack.c.l.b16 %v906
      %v1318 = vunpack.c.l.b16 %v907
      %v1319 = vunpack.c.l.b16 %v908
      %v1320 = vrot.slane %v1289, 7
      %vm1321 = vcmask 1041409
      %v1322 = vsel %vm1321, %v1320, %v1288
      %v1323 = vrot.slane %v1290, 6
      %vm1324 = vcmask 1042434
      %v1325 = vsel %vm1324, %v1323, %v1322
      %v1326 = vrot.slane %v1291, 5
      %vm1327 = vcmask 1043459
      %v1328 = vsel %vm1327, %v1326, %v1325
      %v1329 = vrot.slane %v1292, 4
      %vm1330 = vcmask 1044484
      %v1331 = vsel %vm1330, %v1329, %v1328
      %v1332 = vrot.slane %v1293, 3
      %vm1333 = vcmask 1045509
      %v1334 = vsel %vm1333, %v1332, %v1331
      %v1335 = vrot.slane %v1294, 2
      %vm1336 = vcmask 1046534
      %v1337 = vsel %vm1336, %v1335, %v1334
      %v1338 = vrot.slane %v1295, 1
      %vm1339 = vcmask 1047559
      %v1340 = vsel %vm1339, %v1338, %v1337
      %v1341 = vrot.slane %v1297, 7
      %v1342 = vsel %vm1321, %v1341, %v1296
      %v1343 = vrot.slane %v1298, 6
      %v1344 = vsel %vm1324, %v1343, %v1342
      %v1345 = vrot.slane %v1299, 5
      %v1346 = vsel %vm1327, %v1345, %v1344
      %v1347 = vrot.slane %v1300, 4
      %v1348 = vsel %vm1330, %v1347, %v1346
      %v1349 = vrot.slane %v1301, 3
      %v1350 = vsel %vm1333, %v1349, %v1348
      %v1351 = vrot.slane %v1302, 2
      %v1352 = vsel %vm1336, %v1351, %v1350
      %v1353 = vrot.slane %v1303, 1
      %v1354 = vsel %vm1339, %v1353, %v1352
      %v1355 = vrot.slane %v1305, 7
      %v1356 = vsel %vm1321, %v1355, %v1304
      %v1357 = vrot.slane %v1306, 6
      %v1358 = vsel %vm1324, %v1357, %v1356
      %v1359 = vrot.slane %v1307, 5
      %v1360 = vsel %vm1327, %v1359, %v1358
      %v1361 = vrot.slane %v1308, 4
      %v1362 = vsel %vm1330, %v1361, %v1360
      %v1363 = vrot.slane %v1309, 3
      %v1364 = vsel %vm1333, %v1363, %v1362
      %v1365 = vrot.slane %v1310, 2
      %v1366 = vsel %vm1336, %v1365, %v1364
      %v1367 = vrot.slane %v1311, 1
      %v1368 = vsel %vm1339, %v1367, %v1366
      %v1369 = vrot.slane %v1313, 7
      %v1370 = vsel %vm1321, %v1369, %v1312
      %v1371 = vrot.slane %v1314, 6
      %v1372 = vsel %vm1324, %v1371, %v1370
      %v1373 = vrot.slane %v1315, 5
      %v1374 = vsel %vm1327, %v1373, %v1372
      %v1375 = vrot.slane %v1316, 4
      %v1376 = vsel %vm1330, %v1375, %v1374
      %v1377 = vrot.slane %v1317, 3
      %v1378 = vsel %vm1333, %v1377, %v1376
      %v1379 = vrot.slane %v1318, 2
      %v1380 = vsel %vm1336, %v1379, %v1378
      %v1381 = vrot.slane %v1319, 1
      %v1382 = vsel %vm1339, %v1381, %v1380
      %v1383 = vpack.c.b16 %v1354, %v1340
      %v1384 = vpack.c.b16 %v1382, %v1368
      %v1397 = vunpack.c.l.b16 %v1240
      %v1398 = vunpack.c.l.b16 %v1241
      %v1399 = vunpack.c.l.b16 %v1242
      %v1400 = vunpack.c.l.b16 %v1243
      %v1401 = vunpack.c.l.b16 %v1244
      %v1402 = vunpack.c.l.b16 %v1245
      %v1403 = vunpack.c.l.b16 %v1246
      %v1404 = vunpack.c.l.b16 %v1247
      %v1405 = vunpack.c.l.b16 %v1248
      %v1406 = vunpack.c.l.b16 %v1249
      %v1407 = vunpack.c.l.b16 %v1250
      %v1408 = vunpack.c.l.b16 %v1251
      %v1409 = vpack.c.b16 %v1398, %v1397
      %v1410 = vpack.c.b16 %v1400, %v1399
      %v1411 = vpack.c.b16 %v1402, %v1401
      %v1412 = vpack.c.b16 %v1404, %v1403
      %v1413 = vpack.c.b16 %v1406, %v1405
      %v1414 = vpack.c.b16 %v1408, %v1407
      %v1422 = vsel %vm961, %v1383, 0
      %v1425 = vsel %vm961, %v1384, 0
      %1427 = vmatpush.bf16.msra.mxu0 0
      %1428 = vmatpush.bf16.msra.mxu0 0
      %1429 = vmatpush.bf16.msra.mxu0 %v1414
      %1430 = vmatpush.bf16.msra.mxu0 %v1413
      %1431 = vmatpush.bf16.msra.mxu0 %v1412
      %1432 = vmatpush.bf16.msra.mxu0 %v1411
      %1433 = vmatpush.bf16.msra.mxu0 %v1410
      %1434 = vmatpush.bf16.msra.mxu0 %v1409
      %1435 = vmatmul.bf16.gmra.mxu0 %v1422
      %v1436 = vpop.f32.mrf.mxu0
      %v1437 = vadd.f32 %v1254, %v1436
      %v1438 = vpop.f32.mrf.mxu0
      %v1439 = vadd.f32 %v1254, %v1438
      %1440 = vmatmul.bf16.gmra.mxu0 %v1425
      %v1441 = vpop.f32.mrf.mxu0
      %v1442 = vadd.f32 %v1254, %v1441
      %v1443 = vpop.f32.mrf.mxu0
      %v1444 = vadd.f32 %v1254, %v1443
      %1445 = vdwg.mxu0
      %v1450 = vrot.slane %v1437, 1
      %v1451 = vrot.slane %v1437, 2
      %v1452 = vrot.slane %v1437, 3
      %v1453 = vrot.slane %v1437, 4
      %v1454 = vrot.slane %v1437, 5
      %v1455 = vrot.slane %v1437, 6
      %v1456 = vrot.slane %v1437, 7
      %v1457 = vrot.slane %v1439, 1
      %v1458 = vrot.slane %v1439, 2
      %v1459 = vrot.slane %v1439, 3
      %v1460 = vrot.slane %v1439, 4
      %v1461 = vrot.slane %v1439, 5
      %v1462 = vrot.slane %v1439, 6
      %v1463 = vrot.slane %v1439, 7
      %v1464 = vrot.slane %v1442, 1
      %v1465 = vrot.slane %v1442, 2
      %v1466 = vrot.slane %v1442, 3
      %v1467 = vrot.slane %v1442, 4
      %v1468 = vrot.slane %v1442, 5
      %v1469 = vrot.slane %v1442, 6
      %v1470 = vrot.slane %v1442, 7
      %v1471 = vrot.slane %v1444, 1
      %v1472 = vrot.slane %v1444, 2
      %v1473 = vrot.slane %v1444, 3
      %v1474 = vrot.slane %v1444, 4
      %v1475 = vrot.slane %v1444, 5
      %v1476 = vrot.slane %v1444, 6
      %v1477 = vrot.slane %v1444, 7
      %v1478 = vperm.slane %v1437, 0
      %v1479 = vperm.slane %v1450, 0
      %v1480 = vperm.slane %v1451, 0
      %v1481 = vperm.slane %v1452, 0
      %v1482 = vperm.slane %v1453, 0
      %v1483 = vperm.slane %v1454, 0
      %v1484 = vperm.slane %v1455, 0
      %v1485 = vperm.slane %v1456, 0
      %v1486 = vperm.slane %v1439, 0
      %v1487 = vperm.slane %v1457, 0
      %v1488 = vperm.slane %v1458, 0
      %v1489 = vperm.slane %v1459, 0
      %v1490 = vperm.slane %v1460, 0
      %v1491 = vperm.slane %v1461, 0
      %v1492 = vperm.slane %v1462, 0
      %v1493 = vperm.slane %v1463, 0
      %v1494 = vperm.slane %v1442, 0
      %v1495 = vperm.slane %v1464, 0
      %v1496 = vperm.slane %v1465, 0
      %v1497 = vperm.slane %v1466, 0
      %v1498 = vperm.slane %v1467, 0
      %v1499 = vperm.slane %v1468, 0
      %v1500 = vperm.slane %v1469, 0
      %v1501 = vperm.slane %v1470, 0
      %v1502 = vperm.slane %v1444, 0
      %v1503 = vperm.slane %v1471, 0
      %v1504 = vperm.slane %v1472, 0
      %v1505 = vperm.slane %v1473, 0
      %v1506 = vperm.slane %v1474, 0
      %v1507 = vperm.slane %v1475, 0
      %v1508 = vperm.slane %v1476, 0
      %v1509 = vperm.slane %v1477, 0
      %v1542 = vmul.f32 %v1478, %v1020
      %v1543 = vmul.f32 %v1479, %v1022
      %v1544 = vmul.f32 %v1480, %v1025
      %v1545 = vmul.f32 %v1481, %v1027
      %v1546 = vmul.f32 %v1482, %v1030
      %v1547 = vmul.f32 %v1483, %v1032
      %v1548 = vmul.f32 %v1484, %v1035
      %v1549 = vmul.f32 %v1485, %v1037
      %v1550 = vmul.f32 %v1486, %v1040
      %v1551 = vmul.f32 %v1487, %v1042
      %v1552 = vmul.f32 %v1488, %v1045
      %v1553 = vmul.f32 %v1489, %v1047
      %v1554 = vmul.f32 %v1490, %v1050
      %v1555 = vmul.f32 %v1491, %v1052
      %v1556 = vmul.f32 %v1492, %v1055
      %v1557 = vmul.f32 %v1493, %v1057
      %v1558 = vmul.f32 %v1494, %v1060
      %v1559 = vmul.f32 %v1495, %v1062
      %v1560 = vmul.f32 %v1496, %v1065
      %v1561 = vmul.f32 %v1497, %v1067
      %v1562 = vmul.f32 %v1498, %v1070
      %v1563 = vmul.f32 %v1499, %v1072
      %v1564 = vmul.f32 %v1500, %v1075
      %v1565 = vmul.f32 %v1501, %v1077
      %v1566 = vmul.f32 %v1502, %v1080
      %v1567 = vmul.f32 %v1503, %v1082
      %v1568 = vmul.f32 %v1504, %v1085
      %v1569 = vmul.f32 %v1505, %v1087
      %v1570 = vmul.f32 %v1506, %v1090
      %v1571 = vmul.f32 %v1507, %v1092
      %v1572 = vmul.f32 %v1508, %v1095
      %v1573 = vmul.f32 %v1509, %v1097
      %v1574 = vld [vmem:[%s2] sm:$0xff]
      %v1575 = vld [vmem:[%s2 + $0x8] sm:$0xff]
      %v1576 = vld [vmem:[%s2 + $0x10] sm:$0xff]
      %v1577 = vld [vmem:[%s2 + $0x18] sm:$0xff]
      %v1578 = vld [vmem:[%s2 + $0x20] sm:$0xff]
      %v1579 = vld [vmem:[%s2 + $0x28] sm:$0xff]
      %v1580 = vld [vmem:[%s2 + $0x30] sm:$0xff]
      %v1581 = vld [vmem:[%s2 + $0x38] sm:$0xff]
      %v1582 = vld [vmem:[%s2 + $0x40] sm:$0xff]
      %v1583 = vld [vmem:[%s2 + $0x48] sm:$0xff]
      %v1584 = vld [vmem:[%s2 + $0x50] sm:$0xff]
      %v1585 = vld [vmem:[%s2 + $0x58] sm:$0xff]
      %v1587 = vsel %vm961, %v1542, 0
      %v1590 = vsel %vm961, %v1543, 0
      %v1593 = vsel %vm961, %v1544, 0
      %v1596 = vsel %vm961, %v1545, 0
      %v1599 = vsel %vm961, %v1546, 0
      %v1602 = vsel %vm961, %v1547, 0
      %v1605 = vsel %vm961, %v1548, 0
      %v1608 = vsel %vm961, %v1549, 0
      %v1611 = vsel %vm961, %v1550, 0
      %v1614 = vsel %vm961, %v1551, 0
      %v1617 = vsel %vm961, %v1552, 0
      %v1620 = vsel %vm961, %v1553, 0
      %v1623 = vsel %vm961, %v1554, 0
      %v1626 = vsel %vm961, %v1555, 0
      %v1629 = vsel %vm961, %v1556, 0
      %v1632 = vsel %vm961, %v1557, 0
      %v1635 = vsel %vm961, %v1558, 0
      %v1638 = vsel %vm961, %v1559, 0
      %v1641 = vsel %vm961, %v1560, 0
      %v1644 = vsel %vm961, %v1561, 0
      %v1647 = vsel %vm961, %v1562, 0
      %v1650 = vsel %vm961, %v1563, 0
      %v1653 = vsel %vm961, %v1564, 0
      %v1656 = vsel %vm961, %v1565, 0
      %v1659 = vsel %vm961, %v1566, 0
      %v1662 = vsel %vm961, %v1567, 0
      %v1665 = vsel %vm961, %v1568, 0
      %v1668 = vsel %vm961, %v1569, 0
      %v1671 = vsel %vm961, %v1570, 0
      %v1674 = vsel %vm961, %v1571, 0
      %v1677 = vsel %vm961, %v1572, 0
      %v1680 = vsel %vm961, %v1573, 0
      %1682 = vmatpush.msra.mxu0 0.0
      %1683 = vmatpush.msra.mxu0 0.0
      %1684 = vmatpush.msra.mxu0 0.0
      %1685 = vmatpush.msra.mxu0 0.0
      %1686 = vmatpush.msra.mxu0 %v1585
      %1687 = vmatpush.msra.mxu0 %v1584
      %1688 = vmatpush.msra.mxu0 %v1583
      %1689 = vmatpush.msra.mxu0 %v1582
      %1690 = vmatpush.msra.mxu0 %v1581
      %1691 = vmatpush.msra.mxu0 %v1580
      %1692 = vmatpush.msra.mxu0 %v1579
      %1693 = vmatpush.msra.mxu0 %v1578
      %1694 = vmatpush.msra.mxu0 %v1577
      %1695 = vmatpush.msra.mxu0 %v1576
      %1696 = vmatpush.msra.mxu0 %v1575
      %1697 = vmatpush.msra.mxu0 %v1574
      %1698 = vmatmul.f32.gmra.mxu0 %v1587
      %v1699 = vpop.f32.mrf.mxu0
      %v1700 = vadd.f32 0.0, %v1699
      %1701 = vmatmul.f32.gmra.mxu0 %v1590
      %v1702 = vpop.f32.mrf.mxu0
      %v1703 = vadd.f32 0.0, %v1702
      %1704 = vmatmul.f32.gmra.mxu0 %v1593
      %v1705 = vpop.f32.mrf.mxu0
      %v1706 = vadd.f32 0.0, %v1705
      %1707 = vmatmul.f32.gmra.mxu0 %v1596
      %v1708 = vpop.f32.mrf.mxu0
      %v1709 = vadd.f32 0.0, %v1708
      %1710 = vmatmul.f32.gmra.mxu0 %v1599
      %v1711 = vpop.f32.mrf.mxu0
      %v1712 = vadd.f32 0.0, %v1711
      %1713 = vmatmul.f32.gmra.mxu0 %v1602
      %v1714 = vpop.f32.mrf.mxu0
      %v1715 = vadd.f32 0.0, %v1714
      %1716 = vmatmul.f32.gmra.mxu0 %v1605
      %v1717 = vpop.f32.mrf.mxu0
      %v1718 = vadd.f32 0.0, %v1717
      %1719 = vmatmul.f32.gmra.mxu0 %v1608
      %v1720 = vpop.f32.mrf.mxu0
      %v1721 = vadd.f32 0.0, %v1720
      %1722 = vmatmul.f32.gmra.mxu0 %v1611
      %v1723 = vpop.f32.mrf.mxu0
      %v1724 = vadd.f32 0.0, %v1723
      %1725 = vmatmul.f32.gmra.mxu0 %v1614
      %v1726 = vpop.f32.mrf.mxu0
      %v1727 = vadd.f32 0.0, %v1726
      %1728 = vmatmul.f32.gmra.mxu0 %v1617
      %v1729 = vpop.f32.mrf.mxu0
      %v1730 = vadd.f32 0.0, %v1729
      %1731 = vmatmul.f32.gmra.mxu0 %v1620
      %v1732 = vpop.f32.mrf.mxu0
      %v1733 = vadd.f32 0.0, %v1732
      %1734 = vmatmul.f32.gmra.mxu0 %v1623
      %v1735 = vpop.f32.mrf.mxu0
      %v1736 = vadd.f32 0.0, %v1735
      %1737 = vmatmul.f32.gmra.mxu0 %v1626
      %v1738 = vpop.f32.mrf.mxu0
      %v1739 = vadd.f32 0.0, %v1738
      %1740 = vmatmul.f32.gmra.mxu0 %v1629
      %v1741 = vpop.f32.mrf.mxu0
      %v1742 = vadd.f32 0.0, %v1741
      %1743 = vmatmul.f32.gmra.mxu0 %v1632
      %v1744 = vpop.f32.mrf.mxu0
      %v1745 = vadd.f32 0.0, %v1744
      %1746 = vmatmul.f32.gmra.mxu0 %v1635
      %v1747 = vpop.f32.mrf.mxu0
      %v1748 = vadd.f32 0.0, %v1747
      %1749 = vmatmul.f32.gmra.mxu0 %v1638
      %v1750 = vpop.f32.mrf.mxu0
      %v1751 = vadd.f32 0.0, %v1750
      %1752 = vmatmul.f32.gmra.mxu0 %v1641
      %v1753 = vpop.f32.mrf.mxu0
      %v1754 = vadd.f32 0.0, %v1753
      %1755 = vmatmul.f32.gmra.mxu0 %v1644
      %v1756 = vpop.f32.mrf.mxu0
      %v1757 = vadd.f32 0.0, %v1756
      %1758 = vmatmul.f32.gmra.mxu0 %v1647
      %v1759 = vpop.f32.mrf.mxu0
      %v1760 = vadd.f32 0.0, %v1759
      %1761 = vmatmul.f32.gmra.mxu0 %v1650
      %v1762 = vpop.f32.mrf.mxu0
      %v1763 = vadd.f32 0.0, %v1762
      %1764 = vmatmul.f32.gmra.mxu0 %v1653
      %v1765 = vpop.f32.mrf.mxu0
      %v1766 = vadd.f32 0.0, %v1765
      %1767 = vmatmul.f32.gmra.mxu0 %v1656
      %v1768 = vpop.f32.mrf.mxu0
      %v1769 = vadd.f32 0.0, %v1768
      %1770 = vmatmul.f32.gmra.mxu0 %v1659
      %v1771 = vpop.f32.mrf.mxu0
      %v1772 = vadd.f32 0.0, %v1771
      %1773 = vmatmul.f32.gmra.mxu0 %v1662
      %v1774 = vpop.f32.mrf.mxu0
      %v1775 = vadd.f32 0.0, %v1774
      %1776 = vmatmul.f32.gmra.mxu0 %v1665
      %v1777 = vpop.f32.mrf.mxu0
      %v1778 = vadd.f32 0.0, %v1777
      %1779 = vmatmul.f32.gmra.mxu0 %v1668
      %v1780 = vpop.f32.mrf.mxu0
      %v1781 = vadd.f32 0.0, %v1780
      %1782 = vmatmul.f32.gmra.mxu0 %v1671
      %v1783 = vpop.f32.mrf.mxu0
      %v1784 = vadd.f32 0.0, %v1783
      %1785 = vmatmul.f32.gmra.mxu0 %v1674
      %v1786 = vpop.f32.mrf.mxu0
      %v1787 = vadd.f32 0.0, %v1786
      %1788 = vmatmul.f32.gmra.mxu0 %v1677
      %v1789 = vpop.f32.mrf.mxu0
      %v1790 = vadd.f32 0.0, %v1789
      %1791 = vmatmul.f32.gmra.mxu0 %v1680
      %v1792 = vpop.f32.mrf.mxu0
      %v1793 = vadd.f32 0.0, %v1792
      %1794 = vdwg.mxu0
      %vm1795 = vcmask 48128
      %v1796 = vsel %vm1795, %v1700, -inf
      %v1797 = vrot.slane %v1796, 4
      %v1798 = vmax.f32 %v1796, %v1797
      %v1799 = vrot.slane %v1798, 2
      %v1800 = vmax.f32 %v1798, %v1799
      %v1801 = vrot.slane %v1800, 1
      %v1802 = vmax.f32 %v1800, %v1801
      %v1803 = vsel %vm1795, %v1703, -inf
      %v1804 = vrot.slane %v1803, 4
      %v1805 = vmax.f32 %v1803, %v1804
      %v1806 = vrot.slane %v1805, 2
      %v1807 = vmax.f32 %v1805, %v1806
      %v1808 = vrot.slane %v1807, 1
      %v1809 = vmax.f32 %v1807, %v1808
      %v1810 = vsel %vm1795, %v1706, -inf
      %v1811 = vrot.slane %v1810, 4
      %v1812 = vmax.f32 %v1810, %v1811
      %v1813 = vrot.slane %v1812, 2
      %v1814 = vmax.f32 %v1812, %v1813
      %v1815 = vrot.slane %v1814, 1
      %v1816 = vmax.f32 %v1814, %v1815
      %v1817 = vsel %vm1795, %v1709, -inf
      %v1818 = vrot.slane %v1817, 4
      %v1819 = vmax.f32 %v1817, %v1818
      %v1820 = vrot.slane %v1819, 2
      %v1821 = vmax.f32 %v1819, %v1820
      %v1822 = vrot.slane %v1821, 1
      %v1823 = vmax.f32 %v1821, %v1822
      %v1824 = vsel %vm1795, %v1712, -inf
      %v1825 = vrot.slane %v1824, 4
      %v1826 = vmax.f32 %v1824, %v1825
      %v1827 = vrot.slane %v1826, 2
      %v1828 = vmax.f32 %v1826, %v1827
      %v1829 = vrot.slane %v1828, 1
      %v1830 = vmax.f32 %v1828, %v1829
      %v1831 = vsel %vm1795, %v1715, -inf
      %v1832 = vrot.slane %v1831, 4
      %v1833 = vmax.f32 %v1831, %v1832
      %v1834 = vrot.slane %v1833, 2
      %v1835 = vmax.f32 %v1833, %v1834
      %v1836 = vrot.slane %v1835, 1
      %v1837 = vmax.f32 %v1835, %v1836
      %v1838 = vsel %vm1795, %v1718, -inf
      %v1839 = vrot.slane %v1838, 4
      %v1840 = vmax.f32 %v1838, %v1839
      %v1841 = vrot.slane %v1840, 2
      %v1842 = vmax.f32 %v1840, %v1841
      %v1843 = vrot.slane %v1842, 1
      %v1844 = vmax.f32 %v1842, %v1843
      %v1845 = vsel %vm1795, %v1721, -inf
      %v1846 = vrot.slane %v1845, 4
      %v1847 = vmax.f32 %v1845, %v1846
      %v1848 = vrot.slane %v1847, 2
      %v1849 = vmax.f32 %v1847, %v1848
      %v1850 = vrot.slane %v1849, 1
      %v1851 = vmax.f32 %v1849, %v1850
      %v1852 = vsel %vm1795, %v1724, -inf
      %v1853 = vrot.slane %v1852, 4
      %v1854 = vmax.f32 %v1852, %v1853
      %v1855 = vrot.slane %v1854, 2
      %v1856 = vmax.f32 %v1854, %v1855
      %v1857 = vrot.slane %v1856, 1
      %v1858 = vmax.f32 %v1856, %v1857
      %v1859 = vsel %vm1795, %v1727, -inf
      %v1860 = vrot.slane %v1859, 4
      %v1861 = vmax.f32 %v1859, %v1860
      %v1862 = vrot.slane %v1861, 2
      %v1863 = vmax.f32 %v1861, %v1862
      %v1864 = vrot.slane %v1863, 1
      %v1865 = vmax.f32 %v1863, %v1864
      %v1866 = vsel %vm1795, %v1730, -inf
      %v1867 = vrot.slane %v1866, 4
      %v1868 = vmax.f32 %v1866, %v1867
      %v1869 = vrot.slane %v1868, 2
      %v1870 = vmax.f32 %v1868, %v1869
      %v1871 = vrot.slane %v1870, 1
      %v1872 = vmax.f32 %v1870, %v1871
      %v1873 = vsel %vm1795, %v1733, -inf
      %v1874 = vrot.slane %v1873, 4
      %v1875 = vmax.f32 %v1873, %v1874
      %v1876 = vrot.slane %v1875, 2
      %v1877 = vmax.f32 %v1875, %v1876
      %v1878 = vrot.slane %v1877, 1
      %v1879 = vmax.f32 %v1877, %v1878
      %v1880 = vsel %vm1795, %v1736, -inf
      %v1881 = vrot.slane %v1880, 4
      %v1882 = vmax.f32 %v1880, %v1881
      %v1883 = vrot.slane %v1882, 2
      %v1884 = vmax.f32 %v1882, %v1883
      %v1885 = vrot.slane %v1884, 1
      %v1886 = vmax.f32 %v1884, %v1885
      %v1887 = vsel %vm1795, %v1739, -inf
      %v1888 = vrot.slane %v1887, 4
      %v1889 = vmax.f32 %v1887, %v1888
      %v1890 = vrot.slane %v1889, 2
      %v1891 = vmax.f32 %v1889, %v1890
      %v1892 = vrot.slane %v1891, 1
      %v1893 = vmax.f32 %v1891, %v1892
      %v1894 = vsel %vm1795, %v1742, -inf
      %v1895 = vrot.slane %v1894, 4
      %v1896 = vmax.f32 %v1894, %v1895
      %v1897 = vrot.slane %v1896, 2
      %v1898 = vmax.f32 %v1896, %v1897
      %v1899 = vrot.slane %v1898, 1
      %v1900 = vmax.f32 %v1898, %v1899
      %v1901 = vsel %vm1795, %v1745, -inf
      %v1902 = vrot.slane %v1901, 4
      %v1903 = vmax.f32 %v1901, %v1902
      %v1904 = vrot.slane %v1903, 2
      %v1905 = vmax.f32 %v1903, %v1904
      %v1906 = vrot.slane %v1905, 1
      %v1907 = vmax.f32 %v1905, %v1906
      %v1908 = vsel %vm1795, %v1748, -inf
      %v1909 = vrot.slane %v1908, 4
      %v1910 = vmax.f32 %v1908, %v1909
      %v1911 = vrot.slane %v1910, 2
      %v1912 = vmax.f32 %v1910, %v1911
      %v1913 = vrot.slane %v1912, 1
      %v1914 = vmax.f32 %v1912, %v1913
      %v1915 = vsel %vm1795, %v1751, -inf
      %v1916 = vrot.slane %v1915, 4
      %v1917 = vmax.f32 %v1915, %v1916
      %v1918 = vrot.slane %v1917, 2
      %v1919 = vmax.f32 %v1917, %v1918
      %v1920 = vrot.slane %v1919, 1
      %v1921 = vmax.f32 %v1919, %v1920
      %v1922 = vsel %vm1795, %v1754, -inf
      %v1923 = vrot.slane %v1922, 4
      %v1924 = vmax.f32 %v1922, %v1923
      %v1925 = vrot.slane %v1924, 2
      %v1926 = vmax.f32 %v1924, %v1925
      %v1927 = vrot.slane %v1926, 1
      %v1928 = vmax.f32 %v1926, %v1927
      %v1929 = vsel %vm1795, %v1757, -inf
      %v1930 = vrot.slane %v1929, 4
      %v1931 = vmax.f32 %v1929, %v1930
      %v1932 = vrot.slane %v1931, 2
      %v1933 = vmax.f32 %v1931, %v1932
      %v1934 = vrot.slane %v1933, 1
      %v1935 = vmax.f32 %v1933, %v1934
      %v1936 = vsel %vm1795, %v1760, -inf
      %v1937 = vrot.slane %v1936, 4
      %v1938 = vmax.f32 %v1936, %v1937
      %v1939 = vrot.slane %v1938, 2
      %v1940 = vmax.f32 %v1938, %v1939
      %v1941 = vrot.slane %v1940, 1
      %v1942 = vmax.f32 %v1940, %v1941
      %v1943 = vsel %vm1795, %v1763, -inf
      %v1944 = vrot.slane %v1943, 4
      %v1945 = vmax.f32 %v1943, %v1944
      %v1946 = vrot.slane %v1945, 2
      %v1947 = vmax.f32 %v1945, %v1946
      %v1948 = vrot.slane %v1947, 1
      %v1949 = vmax.f32 %v1947, %v1948
      %v1950 = vsel %vm1795, %v1766, -inf
      %v1951 = vrot.slane %v1950, 4
      %v1952 = vmax.f32 %v1950, %v1951
      %v1953 = vrot.slane %v1952, 2
      %v1954 = vmax.f32 %v1952, %v1953
      %v1955 = vrot.slane %v1954, 1
      %v1956 = vmax.f32 %v1954, %v1955
      %v1957 = vsel %vm1795, %v1769, -inf
      %v1958 = vrot.slane %v1957, 4
      %v1959 = vmax.f32 %v1957, %v1958
      %v1960 = vrot.slane %v1959, 2
      %v1961 = vmax.f32 %v1959, %v1960
      %v1962 = vrot.slane %v1961, 1
      %v1963 = vmax.f32 %v1961, %v1962
      %v1964 = vsel %vm1795, %v1772, -inf
      %v1965 = vrot.slane %v1964, 4
      %v1966 = vmax.f32 %v1964, %v1965
      %v1967 = vrot.slane %v1966, 2
      %v1968 = vmax.f32 %v1966, %v1967
      %v1969 = vrot.slane %v1968, 1
      %v1970 = vmax.f32 %v1968, %v1969
      %v1971 = vsel %vm1795, %v1775, -inf
      %v1972 = vrot.slane %v1971, 4
      %v1973 = vmax.f32 %v1971, %v1972
      %v1974 = vrot.slane %v1973, 2
      %v1975 = vmax.f32 %v1973, %v1974
      %v1976 = vrot.slane %v1975, 1
      %v1977 = vmax.f32 %v1975, %v1976
      %v1978 = vsel %vm1795, %v1778, -inf
      %v1979 = vrot.slane %v1978, 4
      %v1980 = vmax.f32 %v1978, %v1979
      %v1981 = vrot.slane %v1980, 2
      %v1982 = vmax.f32 %v1980, %v1981
      %v1983 = vrot.slane %v1982, 1
      %v1984 = vmax.f32 %v1982, %v1983
      %v1985 = vsel %vm1795, %v1781, -inf
      %v1986 = vrot.slane %v1985, 4
      %v1987 = vmax.f32 %v1985, %v1986
      %v1988 = vrot.slane %v1987, 2
      %v1989 = vmax.f32 %v1987, %v1988
      %v1990 = vrot.slane %v1989, 1
      %v1991 = vmax.f32 %v1989, %v1990
      %v1992 = vsel %vm1795, %v1784, -inf
      %v1993 = vrot.slane %v1992, 4
      %v1994 = vmax.f32 %v1992, %v1993
      %v1995 = vrot.slane %v1994, 2
      %v1996 = vmax.f32 %v1994, %v1995
      %v1997 = vrot.slane %v1996, 1
      %v1998 = vmax.f32 %v1996, %v1997
      %v1999 = vsel %vm1795, %v1787, -inf
      %v2000 = vrot.slane %v1999, 4
      %v2001 = vmax.f32 %v1999, %v2000
      %v2002 = vrot.slane %v2001, 2
      %v2003 = vmax.f32 %v2001, %v2002
      %v2004 = vrot.slane %v2003, 1
      %v2005 = vmax.f32 %v2003, %v2004
      %v2006 = vsel %vm1795, %v1790, -inf
      %v2007 = vrot.slane %v2006, 4
      %v2008 = vmax.f32 %v2006, %v2007
      %v2009 = vrot.slane %v2008, 2
      %v2010 = vmax.f32 %v2008, %v2009
      %v2011 = vrot.slane %v2010, 1
      %v2012 = vmax.f32 %v2010, %v2011
      %v2013 = vsel %vm1795, %v1793, -inf
      %v2014 = vrot.slane %v2013, 4
      %v2015 = vmax.f32 %v2013, %v2014
      %v2016 = vrot.slane %v2015, 2
      %v2017 = vmax.f32 %v2015, %v2016
      %v2018 = vrot.slane %v2017, 1
      %v2019 = vmax.f32 %v2017, %v2018
      %v2020 = vsub.f32 %v1700, %v1802
      %v2021 = vsub.f32 %v1703, %v1809
      %v2022 = vsub.f32 %v1706, %v1816
      %v2023 = vsub.f32 %v1709, %v1823
      %v2024 = vsub.f32 %v1712, %v1830
      %v2025 = vsub.f32 %v1715, %v1837
      %v2026 = vsub.f32 %v1718, %v1844
      %v2027 = vsub.f32 %v1721, %v1851
      %v2028 = vsub.f32 %v1724, %v1858
      %v2029 = vsub.f32 %v1727, %v1865
      %v2030 = vsub.f32 %v1730, %v1872
      %v2031 = vsub.f32 %v1733, %v1879
      %v2032 = vsub.f32 %v1736, %v1886
      %v2033 = vsub.f32 %v1739, %v1893
      %v2034 = vsub.f32 %v1742, %v1900
      %v2035 = vsub.f32 %v1745, %v1907
      %v2036 = vsub.f32 %v1748, %v1914
      %v2037 = vsub.f32 %v1751, %v1921
      %v2038 = vsub.f32 %v1754, %v1928
      %v2039 = vsub.f32 %v1757, %v1935
      %v2040 = vsub.f32 %v1760, %v1942
      %v2041 = vsub.f32 %v1763, %v1949
      %v2042 = vsub.f32 %v1766, %v1956
      %v2043 = vsub.f32 %v1769, %v1963
      %v2044 = vsub.f32 %v1772, %v1970
      %v2045 = vsub.f32 %v1775, %v1977
      %v2046 = vsub.f32 %v1778, %v1984
      %v2047 = vsub.f32 %v1781, %v1991
      %v2048 = vsub.f32 %v1784, %v1998
      %v2049 = vsub.f32 %v1787, %v2005
      %v2050 = vsub.f32 %v1790, %v2012
      %v2051 = vsub.f32 %v1793, %v2019
      %v2052 = vmul.f32 %v2020, 1.442695
      %v2053 = vpow.pop %v2052
      %v2054 = vmul.f32 %v2021, 1.442695
      %v2055 = vpow.pop %v2054
      %v2056 = vmul.f32 %v2022, 1.442695
      %v2057 = vpow.pop %v2056
      %v2058 = vmul.f32 %v2023, 1.442695
      %v2059 = vpow.pop %v2058
      %v2060 = vmul.f32 %v2024, 1.442695
      %v2061 = vpow.pop %v2060
      %v2062 = vmul.f32 %v2025, 1.442695
      %v2063 = vpow.pop %v2062
      %v2064 = vmul.f32 %v2026, 1.442695
      %v2065 = vpow.pop %v2064
      %v2066 = vmul.f32 %v2027, 1.442695
      %v2067 = vpow.pop %v2066
      %v2068 = vmul.f32 %v2028, 1.442695
      %v2069 = vpow.pop %v2068
      %v2070 = vmul.f32 %v2029, 1.442695
      %v2071 = vpow.pop %v2070
      %v2072 = vmul.f32 %v2030, 1.442695
      %v2073 = vpow.pop %v2072
      %v2074 = vmul.f32 %v2031, 1.442695
      %v2075 = vpow.pop %v2074
      %v2076 = vmul.f32 %v2032, 1.442695
      %v2077 = vpow.pop %v2076
      %v2078 = vmul.f32 %v2033, 1.442695
      %v2079 = vpow.pop %v2078
      %v2080 = vmul.f32 %v2034, 1.442695
      %v2081 = vpow.pop %v2080
      %v2082 = vmul.f32 %v2035, 1.442695
      %v2083 = vpow.pop %v2082
      %v2084 = vmul.f32 %v2036, 1.442695
      %v2085 = vpow.pop %v2084
      %v2086 = vmul.f32 %v2037, 1.442695
      %v2087 = vpow.pop %v2086
      %v2088 = vmul.f32 %v2038, 1.442695
      %v2089 = vpow.pop %v2088
      %v2090 = vmul.f32 %v2039, 1.442695
      %v2091 = vpow.pop %v2090
      %v2092 = vmul.f32 %v2040, 1.442695
      %v2093 = vpow.pop %v2092
      %v2094 = vmul.f32 %v2041, 1.442695
      %v2095 = vpow.pop %v2094
      %v2096 = vmul.f32 %v2042, 1.442695
      %v2097 = vpow.pop %v2096
      %v2098 = vmul.f32 %v2043, 1.442695
      %v2099 = vpow.pop %v2098
      %v2100 = vmul.f32 %v2044, 1.442695
      %v2101 = vpow.pop %v2100
      %v2102 = vmul.f32 %v2045, 1.442695
      %v2103 = vpow.pop %v2102
      %v2104 = vmul.f32 %v2046, 1.442695
      %v2105 = vpow.pop %v2104
      %v2106 = vmul.f32 %v2047, 1.442695
      %v2107 = vpow.pop %v2106
      %v2108 = vmul.f32 %v2048, 1.442695
      %v2109 = vpow.pop %v2108
      %v2110 = vmul.f32 %v2049, 1.442695
      %v2111 = vpow.pop %v2110
      %v2112 = vmul.f32 %v2050, 1.442695
      %v2113 = vpow.pop %v2112
      %v2114 = vmul.f32 %v2051, 1.442695
      %v2115 = vpow.pop %v2114
      %v2116 = vsel %vm1795, %v2053, 0.0
      %v2117 = vrot.slane %v2116, 4
      %v2118 = vadd.f32 %v2116, %v2117
      %v2119 = vrot.slane %v2118, 2
      %v2120 = vadd.f32 %v2118, %v2119
      %v2121 = vrot.slane %v2120, 1
      %v2122 = vadd.f32 %v2120, %v2121
      %v2123 = vsel %vm1795, %v2055, 0.0
      %v2124 = vrot.slane %v2123, 4
      %v2125 = vadd.f32 %v2123, %v2124
      %v2126 = vrot.slane %v2125, 2
      %v2127 = vadd.f32 %v2125, %v2126
      %v2128 = vrot.slane %v2127, 1
      %v2129 = vadd.f32 %v2127, %v2128
      %v2130 = vsel %vm1795, %v2057, 0.0
      %v2131 = vrot.slane %v2130, 4
      %v2132 = vadd.f32 %v2130, %v2131
      %v2133 = vrot.slane %v2132, 2
      %v2134 = vadd.f32 %v2132, %v2133
      %v2135 = vrot.slane %v2134, 1
      %v2136 = vadd.f32 %v2134, %v2135
      %v2137 = vsel %vm1795, %v2059, 0.0
      %v2138 = vrot.slane %v2137, 4
      %v2139 = vadd.f32 %v2137, %v2138
      %v2140 = vrot.slane %v2139, 2
      %v2141 = vadd.f32 %v2139, %v2140
      %v2142 = vrot.slane %v2141, 1
      %v2143 = vadd.f32 %v2141, %v2142
      %v2144 = vsel %vm1795, %v2061, 0.0
      %v2145 = vrot.slane %v2144, 4
      %v2146 = vadd.f32 %v2144, %v2145
      %v2147 = vrot.slane %v2146, 2
      %v2148 = vadd.f32 %v2146, %v2147
      %v2149 = vrot.slane %v2148, 1
      %v2150 = vadd.f32 %v2148, %v2149
      %v2151 = vsel %vm1795, %v2063, 0.0
      %v2152 = vrot.slane %v2151, 4
      %v2153 = vadd.f32 %v2151, %v2152
      %v2154 = vrot.slane %v2153, 2
      %v2155 = vadd.f32 %v2153, %v2154
      %v2156 = vrot.slane %v2155, 1
      %v2157 = vadd.f32 %v2155, %v2156
      %v2158 = vsel %vm1795, %v2065, 0.0
      %v2159 = vrot.slane %v2158, 4
      %v2160 = vadd.f32 %v2158, %v2159
      %v2161 = vrot.slane %v2160, 2
      %v2162 = vadd.f32 %v2160, %v2161
      %v2163 = vrot.slane %v2162, 1
      %v2164 = vadd.f32 %v2162, %v2163
      %v2165 = vsel %vm1795, %v2067, 0.0
      %v2166 = vrot.slane %v2165, 4
      %v2167 = vadd.f32 %v2165, %v2166
      %v2168 = vrot.slane %v2167, 2
      %v2169 = vadd.f32 %v2167, %v2168
      %v2170 = vrot.slane %v2169, 1
      %v2171 = vadd.f32 %v2169, %v2170
      %v2172 = vsel %vm1795, %v2069, 0.0
      %v2173 = vrot.slane %v2172, 4
      %v2174 = vadd.f32 %v2172, %v2173
      %v2175 = vrot.slane %v2174, 2
      %v2176 = vadd.f32 %v2174, %v2175
      %v2177 = vrot.slane %v2176, 1
      %v2178 = vadd.f32 %v2176, %v2177
      %v2179 = vsel %vm1795, %v2071, 0.0
      %v2180 = vrot.slane %v2179, 4
      %v2181 = vadd.f32 %v2179, %v2180
      %v2182 = vrot.slane %v2181, 2
      %v2183 = vadd.f32 %v2181, %v2182
      %v2184 = vrot.slane %v2183, 1
      %v2185 = vadd.f32 %v2183, %v2184
      %v2186 = vsel %vm1795, %v2073, 0.0
      %v2187 = vrot.slane %v2186, 4
      %v2188 = vadd.f32 %v2186, %v2187
      %v2189 = vrot.slane %v2188, 2
      %v2190 = vadd.f32 %v2188, %v2189
      %v2191 = vrot.slane %v2190, 1
      %v2192 = vadd.f32 %v2190, %v2191
      %v2193 = vsel %vm1795, %v2075, 0.0
      %v2194 = vrot.slane %v2193, 4
      %v2195 = vadd.f32 %v2193, %v2194
      %v2196 = vrot.slane %v2195, 2
      %v2197 = vadd.f32 %v2195, %v2196
      %v2198 = vrot.slane %v2197, 1
      %v2199 = vadd.f32 %v2197, %v2198
      %v2200 = vsel %vm1795, %v2077, 0.0
      %v2201 = vrot.slane %v2200, 4
      %v2202 = vadd.f32 %v2200, %v2201
      %v2203 = vrot.slane %v2202, 2
      %v2204 = vadd.f32 %v2202, %v2203
      %v2205 = vrot.slane %v2204, 1
      %v2206 = vadd.f32 %v2204, %v2205
      %v2207 = vsel %vm1795, %v2079, 0.0
      %v2208 = vrot.slane %v2207, 4
      %v2209 = vadd.f32 %v2207, %v2208
      %v2210 = vrot.slane %v2209, 2
      %v2211 = vadd.f32 %v2209, %v2210
      %v2212 = vrot.slane %v2211, 1
      %v2213 = vadd.f32 %v2211, %v2212
      %v2214 = vsel %vm1795, %v2081, 0.0
      %v2215 = vrot.slane %v2214, 4
      %v2216 = vadd.f32 %v2214, %v2215
      %v2217 = vrot.slane %v2216, 2
      %v2218 = vadd.f32 %v2216, %v2217
      %v2219 = vrot.slane %v2218, 1
      %v2220 = vadd.f32 %v2218, %v2219
      %v2221 = vsel %vm1795, %v2083, 0.0
      %v2222 = vrot.slane %v2221, 4
      %v2223 = vadd.f32 %v2221, %v2222
      %v2224 = vrot.slane %v2223, 2
      %v2225 = vadd.f32 %v2223, %v2224
      %v2226 = vrot.slane %v2225, 1
      %v2227 = vadd.f32 %v2225, %v2226
      %v2228 = vsel %vm1795, %v2085, 0.0
      %v2229 = vrot.slane %v2228, 4
      %v2230 = vadd.f32 %v2228, %v2229
      %v2231 = vrot.slane %v2230, 2
      %v2232 = vadd.f32 %v2230, %v2231
      %v2233 = vrot.slane %v2232, 1
      %v2234 = vadd.f32 %v2232, %v2233
      %v2235 = vsel %vm1795, %v2087, 0.0
      %v2236 = vrot.slane %v2235, 4
      %v2237 = vadd.f32 %v2235, %v2236
      %v2238 = vrot.slane %v2237, 2
      %v2239 = vadd.f32 %v2237, %v2238
      %v2240 = vrot.slane %v2239, 1
      %v2241 = vadd.f32 %v2239, %v2240
      %v2242 = vsel %vm1795, %v2089, 0.0
      %v2243 = vrot.slane %v2242, 4
      %v2244 = vadd.f32 %v2242, %v2243
      %v2245 = vrot.slane %v2244, 2
      %v2246 = vadd.f32 %v2244, %v2245
      %v2247 = vrot.slane %v2246, 1
      %v2248 = vadd.f32 %v2246, %v2247
      %v2249 = vsel %vm1795, %v2091, 0.0
      %v2250 = vrot.slane %v2249, 4
      %v2251 = vadd.f32 %v2249, %v2250
      %v2252 = vrot.slane %v2251, 2
      %v2253 = vadd.f32 %v2251, %v2252
      %v2254 = vrot.slane %v2253, 1
      %v2255 = vadd.f32 %v2253, %v2254
      %v2256 = vsel %vm1795, %v2093, 0.0
      %v2257 = vrot.slane %v2256, 4
      %v2258 = vadd.f32 %v2256, %v2257
      %v2259 = vrot.slane %v2258, 2
      %v2260 = vadd.f32 %v2258, %v2259
      %v2261 = vrot.slane %v2260, 1
      %v2262 = vadd.f32 %v2260, %v2261
      %v2263 = vsel %vm1795, %v2095, 0.0
      %v2264 = vrot.slane %v2263, 4
      %v2265 = vadd.f32 %v2263, %v2264
      %v2266 = vrot.slane %v2265, 2
      %v2267 = vadd.f32 %v2265, %v2266
      %v2268 = vrot.slane %v2267, 1
      %v2269 = vadd.f32 %v2267, %v2268
      %v2270 = vsel %vm1795, %v2097, 0.0
      %v2271 = vrot.slane %v2270, 4
      %v2272 = vadd.f32 %v2270, %v2271
      %v2273 = vrot.slane %v2272, 2
      %v2274 = vadd.f32 %v2272, %v2273
      %v2275 = vrot.slane %v2274, 1
      %v2276 = vadd.f32 %v2274, %v2275
      %v2277 = vsel %vm1795, %v2099, 0.0
      %v2278 = vrot.slane %v2277, 4
      %v2279 = vadd.f32 %v2277, %v2278
      %v2280 = vrot.slane %v2279, 2
      %v2281 = vadd.f32 %v2279, %v2280
      %v2282 = vrot.slane %v2281, 1
      %v2283 = vadd.f32 %v2281, %v2282
      %v2284 = vsel %vm1795, %v2101, 0.0
      %v2285 = vrot.slane %v2284, 4
      %v2286 = vadd.f32 %v2284, %v2285
      %v2287 = vrot.slane %v2286, 2
      %v2288 = vadd.f32 %v2286, %v2287
      %v2289 = vrot.slane %v2288, 1
      %v2290 = vadd.f32 %v2288, %v2289
      %v2291 = vsel %vm1795, %v2103, 0.0
      %v2292 = vrot.slane %v2291, 4
      %v2293 = vadd.f32 %v2291, %v2292
      %v2294 = vrot.slane %v2293, 2
      %v2295 = vadd.f32 %v2293, %v2294
      %v2296 = vrot.slane %v2295, 1
      %v2297 = vadd.f32 %v2295, %v2296
      %v2298 = vsel %vm1795, %v2105, 0.0
      %v2299 = vrot.slane %v2298, 4
      %v2300 = vadd.f32 %v2298, %v2299
      %v2301 = vrot.slane %v2300, 2
      %v2302 = vadd.f32 %v2300, %v2301
      %v2303 = vrot.slane %v2302, 1
      %v2304 = vadd.f32 %v2302, %v2303
      %v2305 = vsel %vm1795, %v2107, 0.0
      %v2306 = vrot.slane %v2305, 4
      %v2307 = vadd.f32 %v2305, %v2306
      %v2308 = vrot.slane %v2307, 2
      %v2309 = vadd.f32 %v2307, %v2308
      %v2310 = vrot.slane %v2309, 1
      %v2311 = vadd.f32 %v2309, %v2310
      %v2312 = vsel %vm1795, %v2109, 0.0
      %v2313 = vrot.slane %v2312, 4
      %v2314 = vadd.f32 %v2312, %v2313
      %v2315 = vrot.slane %v2314, 2
      %v2316 = vadd.f32 %v2314, %v2315
      %v2317 = vrot.slane %v2316, 1
      %v2318 = vadd.f32 %v2316, %v2317
      %v2319 = vsel %vm1795, %v2111, 0.0
      %v2320 = vrot.slane %v2319, 4
      %v2321 = vadd.f32 %v2319, %v2320
      %v2322 = vrot.slane %v2321, 2
      %v2323 = vadd.f32 %v2321, %v2322
      %v2324 = vrot.slane %v2323, 1
      %v2325 = vadd.f32 %v2323, %v2324
      %v2326 = vsel %vm1795, %v2113, 0.0
      %v2327 = vrot.slane %v2326, 4
      %v2328 = vadd.f32 %v2326, %v2327
      %v2329 = vrot.slane %v2328, 2
      %v2330 = vadd.f32 %v2328, %v2329
      %v2331 = vrot.slane %v2330, 1
      %v2332 = vadd.f32 %v2330, %v2331
      %v2333 = vsel %vm1795, %v2115, 0.0
      %v2334 = vrot.slane %v2333, 4
      %v2335 = vadd.f32 %v2333, %v2334
      %v2336 = vrot.slane %v2335, 2
      %v2337 = vadd.f32 %v2335, %v2336
      %v2338 = vrot.slane %v2337, 1
      %v2339 = vadd.f32 %v2337, %v2338
      %v2340 = vrcp.pop %v2122
      %v2341 = vrcp.pop %v2129
      %v2342 = vrcp.pop %v2136
      %v2343 = vrcp.pop %v2143
      %v2344 = vrcp.pop %v2150
      %v2345 = vrcp.pop %v2157
      %v2346 = vrcp.pop %v2164
      %v2347 = vrcp.pop %v2171
      %v2348 = vrcp.pop %v2178
      %v2349 = vrcp.pop %v2185
      %v2350 = vrcp.pop %v2192
      %v2351 = vrcp.pop %v2199
      %v2352 = vrcp.pop %v2206
      %v2353 = vrcp.pop %v2213
      %v2354 = vrcp.pop %v2220
      %v2355 = vrcp.pop %v2227
      %v2356 = vrcp.pop %v2234
      %v2357 = vrcp.pop %v2241
      %v2358 = vrcp.pop %v2248
      %v2359 = vrcp.pop %v2255
      %v2360 = vrcp.pop %v2262
      %v2361 = vrcp.pop %v2269
      %v2362 = vrcp.pop %v2276
      %v2363 = vrcp.pop %v2283
      %v2364 = vrcp.pop %v2290
      %v2365 = vrcp.pop %v2297
      %v2366 = vrcp.pop %v2304
      %v2367 = vrcp.pop %v2311
      %v2368 = vrcp.pop %v2318
      %v2369 = vrcp.pop %v2325
      %v2370 = vrcp.pop %v2332
      %v2371 = vrcp.pop %v2339
      %v2372 = vmul.f32 %v2053, %v2340
      %v2373 = vmul.f32 %v2055, %v2341
      %v2374 = vmul.f32 %v2057, %v2342
      %v2375 = vmul.f32 %v2059, %v2343
      %v2376 = vmul.f32 %v2061, %v2344
      %v2377 = vmul.f32 %v2063, %v2345
      %v2378 = vmul.f32 %v2065, %v2346
      %v2379 = vmul.f32 %v2067, %v2347
      %v2380 = vmul.f32 %v2069, %v2348
      %v2381 = vmul.f32 %v2071, %v2349
      %v2382 = vmul.f32 %v2073, %v2350
      %v2383 = vmul.f32 %v2075, %v2351
      %v2384 = vmul.f32 %v2077, %v2352
      %v2385 = vmul.f32 %v2079, %v2353
      %v2386 = vmul.f32 %v2081, %v2354
      %v2387 = vmul.f32 %v2083, %v2355
      %v2388 = vmul.f32 %v2085, %v2356
      %v2389 = vmul.f32 %v2087, %v2357
      %v2390 = vmul.f32 %v2089, %v2358
      %v2391 = vmul.f32 %v2091, %v2359
      %v2392 = vmul.f32 %v2093, %v2360
      %v2393 = vmul.f32 %v2095, %v2361
      %v2394 = vmul.f32 %v2097, %v2362
      %v2395 = vmul.f32 %v2099, %v2363
      %v2396 = vmul.f32 %v2101, %v2364
      %v2397 = vmul.f32 %v2103, %v2365
      %v2398 = vmul.f32 %v2105, %v2366
      %v2399 = vmul.f32 %v2107, %v2367
      %v2400 = vmul.f32 %v2109, %v2368
      %v2401 = vmul.f32 %v2111, %v2369
      %v2402 = vmul.f32 %v2113, %v2370
      %v2403 = vmul.f32 %v2115, %v2371
      %v2404 = vld [vmem:[%s3] sm:$0x3f]
      %v2406 = vsel %vm1795, %v2372, 0
      %v2409 = vsel %vm1795, %v2373, 0
      %v2412 = vsel %vm1795, %v2374, 0
      %v2415 = vsel %vm1795, %v2375, 0
      %v2418 = vsel %vm1795, %v2376, 0
      %v2421 = vsel %vm1795, %v2377, 0
      %v2424 = vsel %vm1795, %v2378, 0
      %v2427 = vsel %vm1795, %v2379, 0
      %v2430 = vsel %vm1795, %v2380, 0
      %v2433 = vsel %vm1795, %v2381, 0
      %v2436 = vsel %vm1795, %v2382, 0
      %v2439 = vsel %vm1795, %v2383, 0
      %v2442 = vsel %vm1795, %v2384, 0
      %v2445 = vsel %vm1795, %v2385, 0
      %v2448 = vsel %vm1795, %v2386, 0
      %v2451 = vsel %vm1795, %v2387, 0
      %v2454 = vsel %vm1795, %v2388, 0
      %v2457 = vsel %vm1795, %v2389, 0
      %v2460 = vsel %vm1795, %v2390, 0
      %v2463 = vsel %vm1795, %v2391, 0
      %v2466 = vsel %vm1795, %v2392, 0
      %v2469 = vsel %vm1795, %v2393, 0
      %v2472 = vsel %vm1795, %v2394, 0
      %v2475 = vsel %vm1795, %v2395, 0
      %v2478 = vsel %vm1795, %v2396, 0
      %v2481 = vsel %vm1795, %v2397, 0
      %v2484 = vsel %vm1795, %v2398, 0
      %v2487 = vsel %vm1795, %v2399, 0
      %v2490 = vsel %vm1795, %v2400, 0
      %v2493 = vsel %vm1795, %v2401, 0
      %v2496 = vsel %vm1795, %v2402, 0
      %v2499 = vsel %vm1795, %v2403, 0
      %vm2501 = vcmask 1045504
      %v2503 = vsel %vm2501, %v2404, 0
      %2505 = vmatpush.msra.mxu0 0.0
      %2506 = vmatpush.msra.mxu0 0.0
      %2507 = vmatpush.msra.mxu0 0.0
      %2508 = vmatpush.msra.mxu0 0.0
      %2509 = vmatpush.msra.mxu0 0.0
      %2510 = vmatpush.msra.mxu0 0.0
      %2511 = vmatpush.msra.mxu0 0.0
      %2512 = vmatpush.msra.mxu0 0.0
      %2513 = vmatpush.msra.mxu0 0.0
      %2514 = vmatpush.msra.mxu0 0.0
      %2515 = vmatpush.msra.mxu0 0.0
      %2516 = vmatpush.msra.mxu0 0.0
      %2517 = vmatpush.msra.mxu0 0.0
      %2518 = vmatpush.msra.mxu0 0.0
      %2519 = vmatpush.msra.mxu0 0.0
      %2520 = vmatpush.msra.mxu0 %v2503
      %2521 = vmatmul.f32.gmra.mxu0 %v2406
      %v2522 = vpop.f32.mrf.mxu0
      %v2523 = vadd.f32 0.0, %v2522
      %2524 = vmatmul.f32.gmra.mxu0 %v2409
      %v2525 = vpop.f32.mrf.mxu0
      %v2526 = vadd.f32 0.0, %v2525
      %2527 = vmatmul.f32.gmra.mxu0 %v2412
      %v2528 = vpop.f32.mrf.mxu0
      %v2529 = vadd.f32 0.0, %v2528
      %2530 = vmatmul.f32.gmra.mxu0 %v2415
      %v2531 = vpop.f32.mrf.mxu0
      %v2532 = vadd.f32 0.0, %v2531
      %2533 = vmatmul.f32.gmra.mxu0 %v2418
      %v2534 = vpop.f32.mrf.mxu0
      %v2535 = vadd.f32 0.0, %v2534
      %2536 = vmatmul.f32.gmra.mxu0 %v2421
      %v2537 = vpop.f32.mrf.mxu0
      %v2538 = vadd.f32 0.0, %v2537
      %2539 = vmatmul.f32.gmra.mxu0 %v2424
      %v2540 = vpop.f32.mrf.mxu0
      %v2541 = vadd.f32 0.0, %v2540
      %2542 = vmatmul.f32.gmra.mxu0 %v2427
      %v2543 = vpop.f32.mrf.mxu0
      %v2544 = vadd.f32 0.0, %v2543
      %2545 = vmatmul.f32.gmra.mxu0 %v2430
      %v2546 = vpop.f32.mrf.mxu0
      %v2547 = vadd.f32 0.0, %v2546
      %2548 = vmatmul.f32.gmra.mxu0 %v2433
      %v2549 = vpop.f32.mrf.mxu0
      %v2550 = vadd.f32 0.0, %v2549
      %2551 = vmatmul.f32.gmra.mxu0 %v2436
      %v2552 = vpop.f32.mrf.mxu0
      %v2553 = vadd.f32 0.0, %v2552
      %2554 = vmatmul.f32.gmra.mxu0 %v2439
      %v2555 = vpop.f32.mrf.mxu0
      %v2556 = vadd.f32 0.0, %v2555
      %2557 = vmatmul.f32.gmra.mxu0 %v2442
      %v2558 = vpop.f32.mrf.mxu0
      %v2559 = vadd.f32 0.0, %v2558
      %2560 = vmatmul.f32.gmra.mxu0 %v2445
      %v2561 = vpop.f32.mrf.mxu0
      %v2562 = vadd.f32 0.0, %v2561
      %2563 = vmatmul.f32.gmra.mxu0 %v2448
      %v2564 = vpop.f32.mrf.mxu0
      %v2565 = vadd.f32 0.0, %v2564
      %2566 = vmatmul.f32.gmra.mxu0 %v2451
      %v2567 = vpop.f32.mrf.mxu0
      %v2568 = vadd.f32 0.0, %v2567
      %2569 = vmatmul.f32.gmra.mxu0 %v2454
      %v2570 = vpop.f32.mrf.mxu0
      %v2571 = vadd.f32 0.0, %v2570
      %2572 = vmatmul.f32.gmra.mxu0 %v2457
      %v2573 = vpop.f32.mrf.mxu0
      %v2574 = vadd.f32 0.0, %v2573
      %2575 = vmatmul.f32.gmra.mxu0 %v2460
      %v2576 = vpop.f32.mrf.mxu0
      %v2577 = vadd.f32 0.0, %v2576
      %2578 = vmatmul.f32.gmra.mxu0 %v2463
      %v2579 = vpop.f32.mrf.mxu0
      %v2580 = vadd.f32 0.0, %v2579
      %2581 = vmatmul.f32.gmra.mxu0 %v2466
      %v2582 = vpop.f32.mrf.mxu0
      %v2583 = vadd.f32 0.0, %v2582
      %2584 = vmatmul.f32.gmra.mxu0 %v2469
      %v2585 = vpop.f32.mrf.mxu0
      %v2586 = vadd.f32 0.0, %v2585
      %2587 = vmatmul.f32.gmra.mxu0 %v2472
      %v2588 = vpop.f32.mrf.mxu0
      %v2589 = vadd.f32 0.0, %v2588
      %2590 = vmatmul.f32.gmra.mxu0 %v2475
      %v2591 = vpop.f32.mrf.mxu0
      %v2592 = vadd.f32 0.0, %v2591
      %2593 = vmatmul.f32.gmra.mxu0 %v2478
      %v2594 = vpop.f32.mrf.mxu0
      %v2595 = vadd.f32 0.0, %v2594
      %2596 = vmatmul.f32.gmra.mxu0 %v2481
      %v2597 = vpop.f32.mrf.mxu0
      %v2598 = vadd.f32 0.0, %v2597
      %2599 = vmatmul.f32.gmra.mxu0 %v2484
      %v2600 = vpop.f32.mrf.mxu0
      %v2601 = vadd.f32 0.0, %v2600
      %2602 = vmatmul.f32.gmra.mxu0 %v2487
      %v2603 = vpop.f32.mrf.mxu0
      %v2604 = vadd.f32 0.0, %v2603
      %2605 = vmatmul.f32.gmra.mxu0 %v2490
      %v2606 = vpop.f32.mrf.mxu0
      %v2607 = vadd.f32 0.0, %v2606
      %2608 = vmatmul.f32.gmra.mxu0 %v2493
      %v2609 = vpop.f32.mrf.mxu0
      %v2610 = vadd.f32 0.0, %v2609
      %2611 = vmatmul.f32.gmra.mxu0 %v2496
      %v2612 = vpop.f32.mrf.mxu0
      %v2613 = vadd.f32 0.0, %v2612
      %2614 = vmatmul.f32.gmra.mxu0 %v2499
      %v2615 = vpop.f32.mrf.mxu0
      %v2616 = vadd.f32 0.0, %v2615
      %2617 = vdwg.mxu0
      %v2618 = vmul.f32 %v2523, %v1161
      %v2619 = vmul.f32 %v2526, %v1163
      %v2620 = vmul.f32 %v2529, %v1166
      %v2621 = vmul.f32 %v2532, %v1168
      %v2622 = vmul.f32 %v2535, %v1171
      %v2623 = vmul.f32 %v2538, %v1173
      %v2624 = vmul.f32 %v2541, %v1176
      %v2625 = vmul.f32 %v2544, %v1178
      %v2626 = vmul.f32 %v2547, %v1181
      %v2627 = vmul.f32 %v2550, %v1183
      %v2628 = vmul.f32 %v2553, %v1186
      %v2629 = vmul.f32 %v2556, %v1188
      %v2630 = vmul.f32 %v2559, %v1191
      %v2631 = vmul.f32 %v2562, %v1193
      %v2632 = vmul.f32 %v2565, %v1196
      %v2633 = vmul.f32 %v2568, %v1198
      %v2634 = vmul.f32 %v2571, %v1201
      %v2635 = vmul.f32 %v2574, %v1203
      %v2636 = vmul.f32 %v2577, %v1206
      %v2637 = vmul.f32 %v2580, %v1208
      %v2638 = vmul.f32 %v2583, %v1211
      %v2639 = vmul.f32 %v2586, %v1213
      %v2640 = vmul.f32 %v2589, %v1216
      %v2641 = vmul.f32 %v2592, %v1218
      %v2642 = vmul.f32 %v2595, %v1221
      %v2643 = vmul.f32 %v2598, %v1223
      %v2644 = vmul.f32 %v2601, %v1226
      %v2645 = vmul.f32 %v2604, %v1228
      %v2646 = vmul.f32 %v2607, %v1231
      %v2647 = vmul.f32 %v2610, %v1233
      %v2648 = vmul.f32 %v2613, %v1236
      %v2649 = vmul.f32 %v2616, %v1238
      %v2650 = vsel %vm961, %v2618, 0.0
      %v2651 = vrot.slane %v2650, 4
      %v2652 = vadd.f32 %v2650, %v2651
      %v2653 = vrot.slane %v2652, 2
      %v2654 = vadd.f32 %v2652, %v2653
      %v2655 = vrot.slane %v2654, 1
      %v2656 = vadd.f32 %v2654, %v2655
      %v2657 = vsel %vm961, %v2619, 0.0
      %v2658 = vrot.slane %v2657, 4
      %v2659 = vadd.f32 %v2657, %v2658
      %v2660 = vrot.slane %v2659, 2
      %v2661 = vadd.f32 %v2659, %v2660
      %v2662 = vrot.slane %v2661, 1
      %v2663 = vadd.f32 %v2661, %v2662
      %v2664 = vsel %vm961, %v2620, 0.0
      %v2665 = vrot.slane %v2664, 4
      %v2666 = vadd.f32 %v2664, %v2665
      %v2667 = vrot.slane %v2666, 2
      %v2668 = vadd.f32 %v2666, %v2667
      %v2669 = vrot.slane %v2668, 1
      %v2670 = vadd.f32 %v2668, %v2669
      %v2671 = vsel %vm961, %v2621, 0.0
      %v2672 = vrot.slane %v2671, 4
      %v2673 = vadd.f32 %v2671, %v2672
      %v2674 = vrot.slane %v2673, 2
      %v2675 = vadd.f32 %v2673, %v2674
      %v2676 = vrot.slane %v2675, 1
      %v2677 = vadd.f32 %v2675, %v2676
      %v2678 = vsel %vm961, %v2622, 0.0
      %v2679 = vrot.slane %v2678, 4
      %v2680 = vadd.f32 %v2678, %v2679
      %v2681 = vrot.slane %v2680, 2
      %v2682 = vadd.f32 %v2680, %v2681
      %v2683 = vrot.slane %v2682, 1
      %v2684 = vadd.f32 %v2682, %v2683
      %v2685 = vsel %vm961, %v2623, 0.0
      %v2686 = vrot.slane %v2685, 4
      %v2687 = vadd.f32 %v2685, %v2686
      %v2688 = vrot.slane %v2687, 2
      %v2689 = vadd.f32 %v2687, %v2688
      %v2690 = vrot.slane %v2689, 1
      %v2691 = vadd.f32 %v2689, %v2690
      %v2692 = vsel %vm961, %v2624, 0.0
      %v2693 = vrot.slane %v2692, 4
      %v2694 = vadd.f32 %v2692, %v2693
      %v2695 = vrot.slane %v2694, 2
      %v2696 = vadd.f32 %v2694, %v2695
      %v2697 = vrot.slane %v2696, 1
      %v2698 = vadd.f32 %v2696, %v2697
      %v2699 = vsel %vm961, %v2625, 0.0
      %v2700 = vrot.slane %v2699, 4
      %v2701 = vadd.f32 %v2699, %v2700
      %v2702 = vrot.slane %v2701, 2
      %v2703 = vadd.f32 %v2701, %v2702
      %v2704 = vrot.slane %v2703, 1
      %v2705 = vadd.f32 %v2703, %v2704
      %v2706 = vsel %vm961, %v2626, 0.0
      %v2707 = vrot.slane %v2706, 4
      %v2708 = vadd.f32 %v2706, %v2707
      %v2709 = vrot.slane %v2708, 2
      %v2710 = vadd.f32 %v2708, %v2709
      %v2711 = vrot.slane %v2710, 1
      %v2712 = vadd.f32 %v2710, %v2711
      %v2713 = vsel %vm961, %v2627, 0.0
      %v2714 = vrot.slane %v2713, 4
      %v2715 = vadd.f32 %v2713, %v2714
      %v2716 = vrot.slane %v2715, 2
      %v2717 = vadd.f32 %v2715, %v2716
      %v2718 = vrot.slane %v2717, 1
      %v2719 = vadd.f32 %v2717, %v2718
      %v2720 = vsel %vm961, %v2628, 0.0
      %v2721 = vrot.slane %v2720, 4
      %v2722 = vadd.f32 %v2720, %v2721
      %v2723 = vrot.slane %v2722, 2
      %v2724 = vadd.f32 %v2722, %v2723
      %v2725 = vrot.slane %v2724, 1
      %v2726 = vadd.f32 %v2724, %v2725
      %v2727 = vsel %vm961, %v2629, 0.0
      %v2728 = vrot.slane %v2727, 4
      %v2729 = vadd.f32 %v2727, %v2728
      %v2730 = vrot.slane %v2729, 2
      %v2731 = vadd.f32 %v2729, %v2730
      %v2732 = vrot.slane %v2731, 1
      %v2733 = vadd.f32 %v2731, %v2732
      %v2734 = vsel %vm961, %v2630, 0.0
      %v2735 = vrot.slane %v2734, 4
      %v2736 = vadd.f32 %v2734, %v2735
      %v2737 = vrot.slane %v2736, 2
      %v2738 = vadd.f32 %v2736, %v2737
      %v2739 = vrot.slane %v2738, 1
      %v2740 = vadd.f32 %v2738, %v2739
      %v2741 = vsel %vm961, %v2631, 0.0
      %v2742 = vrot.slane %v2741, 4
      %v2743 = vadd.f32 %v2741, %v2742
      %v2744 = vrot.slane %v2743, 2
      %v2745 = vadd.f32 %v2743, %v2744
      %v2746 = vrot.slane %v2745, 1
      %v2747 = vadd.f32 %v2745, %v2746
      %v2748 = vsel %vm961, %v2632, 0.0
      %v2749 = vrot.slane %v2748, 4
      %v2750 = vadd.f32 %v2748, %v2749
      %v2751 = vrot.slane %v2750, 2
      %v2752 = vadd.f32 %v2750, %v2751
      %v2753 = vrot.slane %v2752, 1
      %v2754 = vadd.f32 %v2752, %v2753
      %v2755 = vsel %vm961, %v2633, 0.0
      %v2756 = vrot.slane %v2755, 4
      %v2757 = vadd.f32 %v2755, %v2756
      %v2758 = vrot.slane %v2757, 2
      %v2759 = vadd.f32 %v2757, %v2758
      %v2760 = vrot.slane %v2759, 1
      %v2761 = vadd.f32 %v2759, %v2760
      %v2762 = vsel %vm961, %v2634, 0.0
      %v2763 = vrot.slane %v2762, 4
      %v2764 = vadd.f32 %v2762, %v2763
      %v2765 = vrot.slane %v2764, 2
      %v2766 = vadd.f32 %v2764, %v2765
      %v2767 = vrot.slane %v2766, 1
      %v2768 = vadd.f32 %v2766, %v2767
      %v2769 = vsel %vm961, %v2635, 0.0
      %v2770 = vrot.slane %v2769, 4
      %v2771 = vadd.f32 %v2769, %v2770
      %v2772 = vrot.slane %v2771, 2
      %v2773 = vadd.f32 %v2771, %v2772
      %v2774 = vrot.slane %v2773, 1
      %v2775 = vadd.f32 %v2773, %v2774
      %v2776 = vsel %vm961, %v2636, 0.0
      %v2777 = vrot.slane %v2776, 4
      %v2778 = vadd.f32 %v2776, %v2777
      %v2779 = vrot.slane %v2778, 2
      %v2780 = vadd.f32 %v2778, %v2779
      %v2781 = vrot.slane %v2780, 1
      %v2782 = vadd.f32 %v2780, %v2781
      %v2783 = vsel %vm961, %v2637, 0.0
      %v2784 = vrot.slane %v2783, 4
      %v2785 = vadd.f32 %v2783, %v2784
      %v2786 = vrot.slane %v2785, 2
      %v2787 = vadd.f32 %v2785, %v2786
      %v2788 = vrot.slane %v2787, 1
      %v2789 = vadd.f32 %v2787, %v2788
      %v2790 = vsel %vm961, %v2638, 0.0
      %v2791 = vrot.slane %v2790, 4
      %v2792 = vadd.f32 %v2790, %v2791
      %v2793 = vrot.slane %v2792, 2
      %v2794 = vadd.f32 %v2792, %v2793
      %v2795 = vrot.slane %v2794, 1
      %v2796 = vadd.f32 %v2794, %v2795
      %v2797 = vsel %vm961, %v2639, 0.0
      %v2798 = vrot.slane %v2797, 4
      %v2799 = vadd.f32 %v2797, %v2798
      %v2800 = vrot.slane %v2799, 2
      %v2801 = vadd.f32 %v2799, %v2800
      %v2802 = vrot.slane %v2801, 1
      %v2803 = vadd.f32 %v2801, %v2802
      %v2804 = vsel %vm961, %v2640, 0.0
      %v2805 = vrot.slane %v2804, 4
      %v2806 = vadd.f32 %v2804, %v2805
      %v2807 = vrot.slane %v2806, 2
      %v2808 = vadd.f32 %v2806, %v2807
      %v2809 = vrot.slane %v2808, 1
      %v2810 = vadd.f32 %v2808, %v2809
      %v2811 = vsel %vm961, %v2641, 0.0
      %v2812 = vrot.slane %v2811, 4
      %v2813 = vadd.f32 %v2811, %v2812
      %v2814 = vrot.slane %v2813, 2
      %v2815 = vadd.f32 %v2813, %v2814
      %v2816 = vrot.slane %v2815, 1
      %v2817 = vadd.f32 %v2815, %v2816
      %v2818 = vsel %vm961, %v2642, 0.0
      %v2819 = vrot.slane %v2818, 4
      %v2820 = vadd.f32 %v2818, %v2819
      %v2821 = vrot.slane %v2820, 2
      %v2822 = vadd.f32 %v2820, %v2821
      %v2823 = vrot.slane %v2822, 1
      %v2824 = vadd.f32 %v2822, %v2823
      %v2825 = vsel %vm961, %v2643, 0.0
      %v2826 = vrot.slane %v2825, 4
      %v2827 = vadd.f32 %v2825, %v2826
      %v2828 = vrot.slane %v2827, 2
      %v2829 = vadd.f32 %v2827, %v2828
      %v2830 = vrot.slane %v2829, 1
      %v2831 = vadd.f32 %v2829, %v2830
      %v2832 = vsel %vm961, %v2644, 0.0
      %v2833 = vrot.slane %v2832, 4
      %v2834 = vadd.f32 %v2832, %v2833
      %v2835 = vrot.slane %v2834, 2
      %v2836 = vadd.f32 %v2834, %v2835
      %v2837 = vrot.slane %v2836, 1
      %v2838 = vadd.f32 %v2836, %v2837
      %v2839 = vsel %vm961, %v2645, 0.0
      %v2840 = vrot.slane %v2839, 4
      %v2841 = vadd.f32 %v2839, %v2840
      %v2842 = vrot.slane %v2841, 2
      %v2843 = vadd.f32 %v2841, %v2842
      %v2844 = vrot.slane %v2843, 1
      %v2845 = vadd.f32 %v2843, %v2844
      %v2846 = vsel %vm961, %v2646, 0.0
      %v2847 = vrot.slane %v2846, 4
      %v2848 = vadd.f32 %v2846, %v2847
      %v2849 = vrot.slane %v2848, 2
      %v2850 = vadd.f32 %v2848, %v2849
      %v2851 = vrot.slane %v2850, 1
      %v2852 = vadd.f32 %v2850, %v2851
      %v2853 = vsel %vm961, %v2647, 0.0
      %v2854 = vrot.slane %v2853, 4
      %v2855 = vadd.f32 %v2853, %v2854
      %v2856 = vrot.slane %v2855, 2
      %v2857 = vadd.f32 %v2855, %v2856
      %v2858 = vrot.slane %v2857, 1
      %v2859 = vadd.f32 %v2857, %v2858
      %v2860 = vsel %vm961, %v2648, 0.0
      %v2861 = vrot.slane %v2860, 4
      %v2862 = vadd.f32 %v2860, %v2861
      %v2863 = vrot.slane %v2862, 2
      %v2864 = vadd.f32 %v2862, %v2863
      %v2865 = vrot.slane %v2864, 1
      %v2866 = vadd.f32 %v2864, %v2865
      %v2867 = vsel %vm961, %v2649, 0.0
      %v2868 = vrot.slane %v2867, 4
      %v2869 = vadd.f32 %v2867, %v2868
      %v2870 = vrot.slane %v2869, 2
      %v2871 = vadd.f32 %v2869, %v2870
      %v2872 = vrot.slane %v2871, 1
      %v2873 = vadd.f32 %v2871, %v2872
      %v2874 = vpack.c.bf16 %v2656, %v2656
      %v2875 = vpack.c.bf16 %v2663, %v2663
      %v2876 = vpack.c.bf16 %v2670, %v2670
      %v2877 = vpack.c.bf16 %v2677, %v2677
      %v2878 = vpack.c.bf16 %v2684, %v2684
      %v2879 = vpack.c.bf16 %v2691, %v2691
      %v2880 = vpack.c.bf16 %v2698, %v2698
      %v2881 = vpack.c.bf16 %v2705, %v2705
      %v2882 = vpack.c.bf16 %v2712, %v2712
      %v2883 = vpack.c.bf16 %v2719, %v2719
      %v2884 = vpack.c.bf16 %v2726, %v2726
      %v2885 = vpack.c.bf16 %v2733, %v2733
      %v2886 = vpack.c.bf16 %v2740, %v2740
      %v2887 = vpack.c.bf16 %v2747, %v2747
      %v2888 = vpack.c.bf16 %v2754, %v2754
      %v2889 = vpack.c.bf16 %v2761, %v2761
      %v2890 = vpack.c.bf16 %v2768, %v2768
      %v2891 = vpack.c.bf16 %v2775, %v2775
      %v2892 = vpack.c.bf16 %v2782, %v2782
      %v2893 = vpack.c.bf16 %v2789, %v2789
      %v2894 = vpack.c.bf16 %v2796, %v2796
      %v2895 = vpack.c.bf16 %v2803, %v2803
      %v2896 = vpack.c.bf16 %v2810, %v2810
      %v2897 = vpack.c.bf16 %v2817, %v2817
      %v2898 = vpack.c.bf16 %v2824, %v2824
      %v2899 = vpack.c.bf16 %v2831, %v2831
      %v2900 = vpack.c.bf16 %v2838, %v2838
      %v2901 = vpack.c.bf16 %v2845, %v2845
      %v2902 = vpack.c.bf16 %v2852, %v2852
      %v2903 = vpack.c.bf16 %v2859, %v2859
      %v2904 = vpack.c.bf16 %v2866, %v2866
      %v2905 = vpack.c.bf16 %v2873, %v2873
      %v2906 = vld [vmem:[%s10] sm:$0xf]
      %v2907 = vld [vmem:[%s10 + $0x4] sm:$0xf]
      %v2908 = vld [vmem:[%s10 + $0x8] sm:$0xf]
      %v2909 = vld [vmem:[%s10 + $0xc] sm:$0xf]
      %v2910 = vld [vmem:[%s10 + $0x10] sm:$0xf]
      %v2911 = vld [vmem:[%s10 + $0x14] sm:$0xf]
      %v2912 = vld [vmem:[%s10 + $0x18] sm:$0xf]
      %v2913 = vld [vmem:[%s10 + $0x1c] sm:$0xf]
      %v2914 = vld [vmem:[%s10 + $0x20] sm:$0xf]
      %v2915 = vld [vmem:[%s10 + $0x24] sm:$0xf]
      %v2916 = vld [vmem:[%s10 + $0x28] sm:$0xf]
      %v2917 = vld [vmem:[%s10 + $0x2c] sm:$0xf]
      %v2918 = vld [vmem:[%s11] sm:$0x1]
      %v2920 = vperm.slane %v2918, 0
      %v2954 = vunpack.c.l.b16 %v2874
      %v2955 = vunpack.c.l.b16 %v2875
      %v2956 = vunpack.c.l.b16 %v2876
      %v2957 = vunpack.c.l.b16 %v2877
      %v2958 = vunpack.c.l.b16 %v2878
      %v2959 = vunpack.c.l.b16 %v2879
      %v2960 = vunpack.c.l.b16 %v2880
      %v2961 = vunpack.c.l.b16 %v2881
      %v2962 = vunpack.c.l.b16 %v2882
      %v2963 = vunpack.c.l.b16 %v2883
      %v2964 = vunpack.c.l.b16 %v2884
      %v2965 = vunpack.c.l.b16 %v2885
      %v2966 = vunpack.c.l.b16 %v2886
      %v2967 = vunpack.c.l.b16 %v2887
      %v2968 = vunpack.c.l.b16 %v2888
      %v2969 = vunpack.c.l.b16 %v2889
      %v2970 = vunpack.c.l.b16 %v2890
      %v2971 = vunpack.c.l.b16 %v2891
      %v2972 = vunpack.c.l.b16 %v2892
      %v2973 = vunpack.c.l.b16 %v2893
      %v2974 = vunpack.c.l.b16 %v2894
      %v2975 = vunpack.c.l.b16 %v2895
      %v2976 = vunpack.c.l.b16 %v2896
      %v2977 = vunpack.c.l.b16 %v2897
      %v2978 = vunpack.c.l.b16 %v2898
      %v2979 = vunpack.c.l.b16 %v2899
      %v2980 = vunpack.c.l.b16 %v2900
      %v2981 = vunpack.c.l.b16 %v2901
      %v2982 = vunpack.c.l.b16 %v2902
      %v2983 = vunpack.c.l.b16 %v2903
      %v2984 = vunpack.c.l.b16 %v2904
      %v2985 = vunpack.c.l.b16 %v2905
      %v2986 = vsel %vm1321, %v2955, %v2954
      %v2987 = vsel %vm1324, %v2956, %v2986
      %v2988 = vsel %vm1327, %v2957, %v2987
      %v2989 = vsel %vm1330, %v2958, %v2988
      %v2990 = vsel %vm1333, %v2959, %v2989
      %v2991 = vsel %vm1336, %v2960, %v2990
      %v2992 = vsel %vm1339, %v2961, %v2991
      %v2993 = vsel %vm1321, %v2963, %v2962
      %v2994 = vsel %vm1324, %v2964, %v2993
      %v2995 = vsel %vm1327, %v2965, %v2994
      %v2996 = vsel %vm1330, %v2966, %v2995
      %v2997 = vsel %vm1333, %v2967, %v2996
      %v2998 = vsel %vm1336, %v2968, %v2997
      %v2999 = vsel %vm1339, %v2969, %v2998
      %v3000 = vsel %vm1321, %v2971, %v2970
      %v3001 = vsel %vm1324, %v2972, %v3000
      %v3002 = vsel %vm1327, %v2973, %v3001
      %v3003 = vsel %vm1330, %v2974, %v3002
      %v3004 = vsel %vm1333, %v2975, %v3003
      %v3005 = vsel %vm1336, %v2976, %v3004
      %v3006 = vsel %vm1339, %v2977, %v3005
      %v3007 = vsel %vm1321, %v2979, %v2978
      %v3008 = vsel %vm1324, %v2980, %v3007
      %v3009 = vsel %vm1327, %v2981, %v3008
      %v3010 = vsel %vm1330, %v2982, %v3009
      %v3011 = vsel %vm1333, %v2983, %v3010
      %v3012 = vsel %vm1336, %v2984, %v3011
      %v3013 = vsel %vm1339, %v2985, %v3012
      %v3014 = vpack.c.b16 %v2999, %v2992
      %v3015 = vpack.c.b16 %v3013, %v3006
      %v3028 = vunpack.c.l.b16 %v2906
      %v3029 = vunpack.c.l.b16 %v2907
      %v3030 = vunpack.c.l.b16 %v2908
      %v3031 = vunpack.c.l.b16 %v2909
      %v3032 = vunpack.c.l.b16 %v2910
      %v3033 = vunpack.c.l.b16 %v2911
      %v3034 = vunpack.c.l.b16 %v2912
      %v3035 = vunpack.c.l.b16 %v2913
      %v3036 = vunpack.c.l.b16 %v2914
      %v3037 = vunpack.c.l.b16 %v2915
      %v3038 = vunpack.c.l.b16 %v2916
      %v3039 = vunpack.c.l.b16 %v2917
      %v3040 = vpack.c.b16 %v3029, %v3028
      %v3041 = vpack.c.b16 %v3031, %v3030
      %v3042 = vpack.c.b16 %v3033, %v3032
      %v3043 = vpack.c.b16 %v3035, %v3034
      %v3044 = vpack.c.b16 %v3037, %v3036
      %v3045 = vpack.c.b16 %v3039, %v3038
      %v3053 = vsel %vm961, %v3014, 0
      %v3056 = vsel %vm961, %v3015, 0
      %3058 = vmatpush.bf16.msra.mxu0 0
      %3059 = vmatpush.bf16.msra.mxu0 0
      %3060 = vmatpush.bf16.msra.mxu0 %v3045
      %3061 = vmatpush.bf16.msra.mxu0 %v3044
      %3062 = vmatpush.bf16.msra.mxu0 %v3043
      %3063 = vmatpush.bf16.msra.mxu0 %v3042
      %3064 = vmatpush.bf16.msra.mxu0 %v3041
      %3065 = vmatpush.bf16.msra.mxu0 %v3040
      %3066 = vmatmul.bf16.gmra.mxu0 %v3053
      %v3067 = vpop.f32.mrf.mxu0
      %v3068 = vadd.f32 %v2920, %v3067
      %v3069 = vpop.f32.mrf.mxu0
      %v3070 = vadd.f32 %v2920, %v3069
      %3071 = vmatmul.bf16.gmra.mxu0 %v3056
      %v3072 = vpop.f32.mrf.mxu0
      %v3073 = vadd.f32 %v2920, %v3072
      %v3074 = vpop.f32.mrf.mxu0
      %v3075 = vadd.f32 %v2920, %v3074
      %3076 = vdwg.mxu0
      %v3081 = vrot.slane %v3068, 1
      %v3082 = vrot.slane %v3068, 2
      %v3083 = vrot.slane %v3068, 3
      %v3084 = vrot.slane %v3068, 4
      %v3085 = vrot.slane %v3068, 5
      %v3086 = vrot.slane %v3068, 6
      %v3087 = vrot.slane %v3068, 7
      %v3088 = vrot.slane %v3070, 1
      %v3089 = vrot.slane %v3070, 2
      %v3090 = vrot.slane %v3070, 3
      %v3091 = vrot.slane %v3070, 4
      %v3092 = vrot.slane %v3070, 5
      %v3093 = vrot.slane %v3070, 6
      %v3094 = vrot.slane %v3070, 7
      %v3095 = vrot.slane %v3073, 1
      %v3096 = vrot.slane %v3073, 2
      %v3097 = vrot.slane %v3073, 3
      %v3098 = vrot.slane %v3073, 4
      %v3099 = vrot.slane %v3073, 5
      %v3100 = vrot.slane %v3073, 6
      %v3101 = vrot.slane %v3073, 7
      %v3102 = vrot.slane %v3075, 1
      %v3103 = vrot.slane %v3075, 2
      %v3104 = vrot.slane %v3075, 3
      %v3105 = vrot.slane %v3075, 4
      %v3106 = vrot.slane %v3075, 5
      %v3107 = vrot.slane %v3075, 6
      %v3108 = vrot.slane %v3075, 7
      %v3141 = vadd.f32 %v829, %v3068
      %v3142 = vadd.f32 %v830, %v3081
      %v3143 = vadd.f32 %v831, %v3082
      %v3144 = vadd.f32 %v832, %v3083
      %v3145 = vadd.f32 %v833, %v3084
      %v3146 = vadd.f32 %v834, %v3085
      %v3147 = vadd.f32 %v835, %v3086
      %v3148 = vadd.f32 %v836, %v3087
      %v3149 = vadd.f32 %v837, %v3070
      %v3150 = vadd.f32 %v838, %v3088
      %v3151 = vadd.f32 %v839, %v3089
      %v3152 = vadd.f32 %v840, %v3090
      %v3153 = vadd.f32 %v841, %v3091
      %v3154 = vadd.f32 %v842, %v3092
      %v3155 = vadd.f32 %v843, %v3093
      %v3156 = vadd.f32 %v844, %v3094
      %v3157 = vadd.f32 %v845, %v3073
      %v3158 = vadd.f32 %v846, %v3095
      %v3159 = vadd.f32 %v847, %v3096
      %v3160 = vadd.f32 %v848, %v3097
      %v3161 = vadd.f32 %v849, %v3098
      %v3162 = vadd.f32 %v850, %v3099
      %v3163 = vadd.f32 %v851, %v3100
      %v3164 = vadd.f32 %v852, %v3101
      %v3165 = vadd.f32 %v853, %v3075
      %v3166 = vadd.f32 %v854, %v3102
      %v3167 = vadd.f32 %v855, %v3103
      %v3168 = vadd.f32 %v856, %v3104
      %v3169 = vadd.f32 %v857, %v3105
      %v3170 = vadd.f32 %v858, %v3106
      %v3171 = vadd.f32 %v859, %v3107
      %v3172 = vadd.f32 %v860, %v3108
      %v3173 = vld [vmem:[%s12] sm:$0x1]
      %v3174 = vld [vmem:[%s13] sm:$0x1]
      %v3207 = vrot.slane %v3142, 7
      %v3208 = vsel %vm1321, %v3207, %v3141
      %v3209 = vrot.slane %v3143, 6
      %v3210 = vsel %vm1324, %v3209, %v3208
      %v3211 = vrot.slane %v3144, 5
      %v3212 = vsel %vm1327, %v3211, %v3210
      %v3213 = vrot.slane %v3145, 4
      %v3214 = vsel %vm1330, %v3213, %v3212
      %v3215 = vrot.slane %v3146, 3
      %v3216 = vsel %vm1333, %v3215, %v3214
      %v3217 = vrot.slane %v3147, 2
      %v3218 = vsel %vm1336, %v3217, %v3216
      %v3219 = vrot.slane %v3148, 1
      %v3220 = vsel %vm1339, %v3219, %v3218
      %v3221 = vrot.slane %v3150, 7
      %v3222 = vsel %vm1321, %v3221, %v3149
      %v3223 = vrot.slane %v3151, 6
      %v3224 = vsel %vm1324, %v3223, %v3222
      %v3225 = vrot.slane %v3152, 5
      %v3226 = vsel %vm1327, %v3225, %v3224
      %v3227 = vrot.slane %v3153, 4
      %v3228 = vsel %vm1330, %v3227, %v3226
      %v3229 = vrot.slane %v3154, 3
      %v3230 = vsel %vm1333, %v3229, %v3228
      %v3231 = vrot.slane %v3155, 2
      %v3232 = vsel %vm1336, %v3231, %v3230
      %v3233 = vrot.slane %v3156, 1
      %v3234 = vsel %vm1339, %v3233, %v3232
      %v3235 = vrot.slane %v3158, 7
      %v3236 = vsel %vm1321, %v3235, %v3157
      %v3237 = vrot.slane %v3159, 6
      %v3238 = vsel %vm1324, %v3237, %v3236
      %v3239 = vrot.slane %v3160, 5
      %v3240 = vsel %vm1327, %v3239, %v3238
      %v3241 = vrot.slane %v3161, 4
      %v3242 = vsel %vm1330, %v3241, %v3240
      %v3243 = vrot.slane %v3162, 3
      %v3244 = vsel %vm1333, %v3243, %v3242
      %v3245 = vrot.slane %v3163, 2
      %v3246 = vsel %vm1336, %v3245, %v3244
      %v3247 = vrot.slane %v3164, 1
      %v3248 = vsel %vm1339, %v3247, %v3246
      %v3249 = vrot.slane %v3166, 7
      %v3250 = vsel %vm1321, %v3249, %v3165
      %v3251 = vrot.slane %v3167, 6
      %v3252 = vsel %vm1324, %v3251, %v3250
      %v3253 = vrot.slane %v3168, 5
      %v3254 = vsel %vm1327, %v3253, %v3252
      %v3255 = vrot.slane %v3169, 4
      %v3256 = vsel %vm1330, %v3255, %v3254
      %v3257 = vrot.slane %v3170, 3
      %v3258 = vsel %vm1333, %v3257, %v3256
      %v3259 = vrot.slane %v3171, 2
      %v3260 = vsel %vm1336, %v3259, %v3258
      %v3261 = vrot.slane %v3172, 1
      %v3262 = vsel %vm1339, %v3261, %v3260
      %v3267 = vsel %vm961, %v3220, 0.0
      %3268 = vadd.xlane.f32.xlu0 %v3267
      %v3269 = vpop.xlane.xlu0 %3268
      %v3270 = vsel %vm961, %v3234, 0.0
      %3271 = vadd.xlane.f32.xlu0 %v3270
      %v3272 = vpop.xlane.xlu0 %3271
      %v3273 = vsel %vm961, %v3248, 0.0
      %3274 = vadd.xlane.f32.xlu0 %v3273
      %v3275 = vpop.xlane.xlu0 %3274
      %v3276 = vsel %vm961, %v3262, 0.0
      %3277 = vadd.xlane.f32.xlu0 %v3276
      %v3278 = vpop.xlane.xlu0 %3277
      %v3279 = vrcp.pop 96.0
      %v3280 = vmul.f32 96.0, %v3279
      %v3281 = vsub.f32 1.0, %v3280
      %v3282 = vmul.f32 %v3279, %v3281
      %v3283 = vadd.f32 %v3279, %v3282
      %vm3284 = vweird.f32 %v3279
      %v3285 = vsel %vm3284, %v3279, %v3283
      %v3286 = vmul.f32 %v3269, %v3285
      %v3287 = vmul.f32 %v3272, %v3285
      %v3288 = vmul.f32 %v3275, %v3285
      %v3289 = vmul.f32 %v3278, %v3285
      %v3294 = vrot.slane %v3286, 1
      %v3295 = vrot.slane %v3286, 2
      %v3296 = vrot.slane %v3286, 3
      %v3297 = vrot.slane %v3286, 4
      %v3298 = vrot.slane %v3286, 5
      %v3299 = vrot.slane %v3286, 6
      %v3300 = vrot.slane %v3286, 7
      %v3301 = vrot.slane %v3287, 1
      %v3302 = vrot.slane %v3287, 2
      %v3303 = vrot.slane %v3287, 3
      %v3304 = vrot.slane %v3287, 4
      %v3305 = vrot.slane %v3287, 5
      %v3306 = vrot.slane %v3287, 6
      %v3307 = vrot.slane %v3287, 7
      %v3308 = vrot.slane %v3288, 1
      %v3309 = vrot.slane %v3288, 2
      %v3310 = vrot.slane %v3288, 3
      %v3311 = vrot.slane %v3288, 4
      %v3312 = vrot.slane %v3288, 5
      %v3313 = vrot.slane %v3288, 6
      %v3314 = vrot.slane %v3288, 7
      %v3315 = vrot.slane %v3289, 1
      %v3316 = vrot.slane %v3289, 2
      %v3317 = vrot.slane %v3289, 3
      %v3318 = vrot.slane %v3289, 4
      %v3319 = vrot.slane %v3289, 5
      %v3320 = vrot.slane %v3289, 6
      %v3321 = vrot.slane %v3289, 7
      %v3354 = vsub.f32 %v3141, %v3286
      %v3355 = vsub.f32 %v3142, %v3294
      %v3356 = vsub.f32 %v3143, %v3295
      %v3357 = vsub.f32 %v3144, %v3296
      %v3358 = vsub.f32 %v3145, %v3297
      %v3359 = vsub.f32 %v3146, %v3298
      %v3360 = vsub.f32 %v3147, %v3299
      %v3361 = vsub.f32 %v3148, %v3300
      %v3362 = vsub.f32 %v3149, %v3287
      %v3363 = vsub.f32 %v3150, %v3301
      %v3364 = vsub.f32 %v3151, %v3302
      %v3365 = vsub.f32 %v3152, %v3303
      %v3366 = vsub.f32 %v3153, %v3304
      %v3367 = vsub.f32 %v3154, %v3305
      %v3368 = vsub.f32 %v3155, %v3306
      %v3369 = vsub.f32 %v3156, %v3307
      %v3370 = vsub.f32 %v3157, %v3288
      %v3371 = vsub.f32 %v3158, %v3308
      %v3372 = vsub.f32 %v3159, %v3309
      %v3373 = vsub.f32 %v3160, %v3310
      %v3374 = vsub.f32 %v3161, %v3311
      %v3375 = vsub.f32 %v3162, %v3312
      %v3376 = vsub.f32 %v3163, %v3313
      %v3377 = vsub.f32 %v3164, %v3314
      %v3378 = vsub.f32 %v3165, %v3289
      %v3379 = vsub.f32 %v3166, %v3315
      %v3380 = vsub.f32 %v3167, %v3316
      %v3381 = vsub.f32 %v3168, %v3317
      %v3382 = vsub.f32 %v3169, %v3318
      %v3383 = vsub.f32 %v3170, %v3319
      %v3384 = vsub.f32 %v3171, %v3320
      %v3385 = vsub.f32 %v3172, %v3321
      %v3386 = vmul.f32 %v3354, %v3354
      %v3387 = vmul.f32 %v3355, %v3355
      %v3388 = vmul.f32 %v3356, %v3356
      %v3389 = vmul.f32 %v3357, %v3357
      %v3390 = vmul.f32 %v3358, %v3358
      %v3391 = vmul.f32 %v3359, %v3359
      %v3392 = vmul.f32 %v3360, %v3360
      %v3393 = vmul.f32 %v3361, %v3361
      %v3394 = vmul.f32 %v3362, %v3362
      %v3395 = vmul.f32 %v3363, %v3363
      %v3396 = vmul.f32 %v3364, %v3364
      %v3397 = vmul.f32 %v3365, %v3365
      %v3398 = vmul.f32 %v3366, %v3366
      %v3399 = vmul.f32 %v3367, %v3367
      %v3400 = vmul.f32 %v3368, %v3368
      %v3401 = vmul.f32 %v3369, %v3369
      %v3402 = vmul.f32 %v3370, %v3370
      %v3403 = vmul.f32 %v3371, %v3371
      %v3404 = vmul.f32 %v3372, %v3372
      %v3405 = vmul.f32 %v3373, %v3373
      %v3406 = vmul.f32 %v3374, %v3374
      %v3407 = vmul.f32 %v3375, %v3375
      %v3408 = vmul.f32 %v3376, %v3376
      %v3409 = vmul.f32 %v3377, %v3377
      %v3410 = vmul.f32 %v3378, %v3378
      %v3411 = vmul.f32 %v3379, %v3379
      %v3412 = vmul.f32 %v3380, %v3380
      %v3413 = vmul.f32 %v3381, %v3381
      %v3414 = vmul.f32 %v3382, %v3382
      %v3415 = vmul.f32 %v3383, %v3383
      %v3416 = vmul.f32 %v3384, %v3384
      %v3417 = vmul.f32 %v3385, %v3385
      %v3450 = vrot.slane %v3387, 7
      %v3451 = vsel %vm1321, %v3450, %v3386
      %v3452 = vrot.slane %v3388, 6
      %v3453 = vsel %vm1324, %v3452, %v3451
      %v3454 = vrot.slane %v3389, 5
      %v3455 = vsel %vm1327, %v3454, %v3453
      %v3456 = vrot.slane %v3390, 4
      %v3457 = vsel %vm1330, %v3456, %v3455
      %v3458 = vrot.slane %v3391, 3
      %v3459 = vsel %vm1333, %v3458, %v3457
      %v3460 = vrot.slane %v3392, 2
      %v3461 = vsel %vm1336, %v3460, %v3459
      %v3462 = vrot.slane %v3393, 1
      %v3463 = vsel %vm1339, %v3462, %v3461
      %v3464 = vrot.slane %v3395, 7
      %v3465 = vsel %vm1321, %v3464, %v3394
      %v3466 = vrot.slane %v3396, 6
      %v3467 = vsel %vm1324, %v3466, %v3465
      %v3468 = vrot.slane %v3397, 5
      %v3469 = vsel %vm1327, %v3468, %v3467
      %v3470 = vrot.slane %v3398, 4
      %v3471 = vsel %vm1330, %v3470, %v3469
      %v3472 = vrot.slane %v3399, 3
      %v3473 = vsel %vm1333, %v3472, %v3471
      %v3474 = vrot.slane %v3400, 2
      %v3475 = vsel %vm1336, %v3474, %v3473
      %v3476 = vrot.slane %v3401, 1
      %v3477 = vsel %vm1339, %v3476, %v3475
      %v3478 = vrot.slane %v3403, 7
      %v3479 = vsel %vm1321, %v3478, %v3402
      %v3480 = vrot.slane %v3404, 6
      %v3481 = vsel %vm1324, %v3480, %v3479
      %v3482 = vrot.slane %v3405, 5
      %v3483 = vsel %vm1327, %v3482, %v3481
      %v3484 = vrot.slane %v3406, 4
      %v3485 = vsel %vm1330, %v3484, %v3483
      %v3486 = vrot.slane %v3407, 3
      %v3487 = vsel %vm1333, %v3486, %v3485
      %v3488 = vrot.slane %v3408, 2
      %v3489 = vsel %vm1336, %v3488, %v3487
      %v3490 = vrot.slane %v3409, 1
      %v3491 = vsel %vm1339, %v3490, %v3489
      %v3492 = vrot.slane %v3411, 7
      %v3493 = vsel %vm1321, %v3492, %v3410
      %v3494 = vrot.slane %v3412, 6
      %v3495 = vsel %vm1324, %v3494, %v3493
      %v3496 = vrot.slane %v3413, 5
      %v3497 = vsel %vm1327, %v3496, %v3495
      %v3498 = vrot.slane %v3414, 4
      %v3499 = vsel %vm1330, %v3498, %v3497
      %v3500 = vrot.slane %v3415, 3
      %v3501 = vsel %vm1333, %v3500, %v3499
      %v3502 = vrot.slane %v3416, 2
      %v3503 = vsel %vm1336, %v3502, %v3501
      %v3504 = vrot.slane %v3417, 1
      %v3505 = vsel %vm1339, %v3504, %v3503
      %v3510 = vsel %vm961, %v3463, 0.0
      %3511 = vadd.xlane.f32.xlu0 %v3510
      %v3512 = vpop.xlane.xlu0 %3511
      %v3513 = vsel %vm961, %v3477, 0.0
      %3514 = vadd.xlane.f32.xlu0 %v3513
      %v3515 = vpop.xlane.xlu0 %3514
      %v3516 = vsel %vm961, %v3491, 0.0
      %3517 = vadd.xlane.f32.xlu0 %v3516
      %v3518 = vpop.xlane.xlu0 %3517
      %v3519 = vsel %vm961, %v3505, 0.0
      %3520 = vadd.xlane.f32.xlu0 %v3519
      %v3521 = vpop.xlane.xlu0 %3520
      %v3522 = vmul.f32 %v3512, %v3285
      %v3523 = vmul.f32 %v3515, %v3285
      %v3524 = vmul.f32 %v3518, %v3285
      %v3525 = vmul.f32 %v3521, %v3285
      %v3526 = vadd.f32 %v3522, 1e-05
      %v3527 = vadd.f32 %v3523, 1e-05
      %v3528 = vadd.f32 %v3524, 1e-05
      %v3529 = vadd.f32 %v3525, 1e-05
      %v3530 = vrsqrt.pop %v3526
      %v3531 = vmul.f32 %v3530, %v3526
      %v3532 = vmul.f32 %v3531, %v3530
      %v3533 = vmul.f32 0.5, %v3532
      %v3534 = vsub.f32 1.5, %v3533
      %v3535 = vmul.f32 %v3530, %v3534
      %vm3536 = vweird.f32 %v3526
      %vm3537 = vweird.f32 %v3530
      %vm3538 = vmor %vm3536, %vm3537
      %v3539 = vsel %vm3538, %v3530, %v3535
      %v3540 = vrsqrt.pop %v3527
      %v3541 = vmul.f32 %v3540, %v3527
      %v3542 = vmul.f32 %v3541, %v3540
      %v3543 = vmul.f32 0.5, %v3542
      %v3544 = vsub.f32 1.5, %v3543
      %v3545 = vmul.f32 %v3540, %v3544
      %vm3546 = vweird.f32 %v3527
      %vm3547 = vweird.f32 %v3540
      %vm3548 = vmor %vm3546, %vm3547
      %v3549 = vsel %vm3548, %v3540, %v3545
      %v3550 = vrsqrt.pop %v3528
      %v3551 = vmul.f32 %v3550, %v3528
      %v3552 = vmul.f32 %v3551, %v3550
      %v3553 = vmul.f32 0.5, %v3552
      %v3554 = vsub.f32 1.5, %v3553
      %v3555 = vmul.f32 %v3550, %v3554
      %vm3556 = vweird.f32 %v3528
      %vm3557 = vweird.f32 %v3550
      %vm3558 = vmor %vm3556, %vm3557
      %v3559 = vsel %vm3558, %v3550, %v3555
      %v3560 = vrsqrt.pop %v3529
      %v3561 = vmul.f32 %v3560, %v3529
      %v3562 = vmul.f32 %v3561, %v3560
      %v3563 = vmul.f32 0.5, %v3562
      %v3564 = vsub.f32 1.5, %v3563
      %v3565 = vmul.f32 %v3560, %v3564
      %vm3566 = vweird.f32 %v3529
      %vm3567 = vweird.f32 %v3560
      %vm3568 = vmor %vm3566, %vm3567
      %v3569 = vsel %vm3568, %v3560, %v3565
      %v3574 = vrot.slane %v3539, 1
      %v3575 = vrot.slane %v3539, 2
      %v3576 = vrot.slane %v3539, 3
      %v3577 = vrot.slane %v3539, 4
      %v3578 = vrot.slane %v3539, 5
      %v3579 = vrot.slane %v3539, 6
      %v3580 = vrot.slane %v3539, 7
      %v3581 = vrot.slane %v3549, 1
      %v3582 = vrot.slane %v3549, 2
      %v3583 = vrot.slane %v3549, 3
      %v3584 = vrot.slane %v3549, 4
      %v3585 = vrot.slane %v3549, 5
      %v3586 = vrot.slane %v3549, 6
      %v3587 = vrot.slane %v3549, 7
      %v3588 = vrot.slane %v3559, 1
      %v3589 = vrot.slane %v3559, 2
      %v3590 = vrot.slane %v3559, 3
      %v3591 = vrot.slane %v3559, 4
      %v3592 = vrot.slane %v3559, 5
      %v3593 = vrot.slane %v3559, 6
      %v3594 = vrot.slane %v3559, 7
      %v3595 = vrot.slane %v3569, 1
      %v3596 = vrot.slane %v3569, 2
      %v3597 = vrot.slane %v3569, 3
      %v3598 = vrot.slane %v3569, 4
      %v3599 = vrot.slane %v3569, 5
      %v3600 = vrot.slane %v3569, 6
      %v3601 = vrot.slane %v3569, 7
      %v3634 = vmul.f32 %v3354, %v3539
      %v3635 = vmul.f32 %v3355, %v3574
      %v3636 = vmul.f32 %v3356, %v3575
      %v3637 = vmul.f32 %v3357, %v3576
      %v3638 = vmul.f32 %v3358, %v3577
      %v3639 = vmul.f32 %v3359, %v3578
      %v3640 = vmul.f32 %v3360, %v3579
      %v3641 = vmul.f32 %v3361, %v3580
      %v3642 = vmul.f32 %v3362, %v3549
      %v3643 = vmul.f32 %v3363, %v3581
      %v3644 = vmul.f32 %v3364, %v3582
      %v3645 = vmul.f32 %v3365, %v3583
      %v3646 = vmul.f32 %v3366, %v3584
      %v3647 = vmul.f32 %v3367, %v3585
      %v3648 = vmul.f32 %v3368, %v3586
      %v3649 = vmul.f32 %v3369, %v3587
      %v3650 = vmul.f32 %v3370, %v3559
      %v3651 = vmul.f32 %v3371, %v3588
      %v3652 = vmul.f32 %v3372, %v3589
      %v3653 = vmul.f32 %v3373, %v3590
      %v3654 = vmul.f32 %v3374, %v3591
      %v3655 = vmul.f32 %v3375, %v3592
      %v3656 = vmul.f32 %v3376, %v3593
      %v3657 = vmul.f32 %v3377, %v3594
      %v3658 = vmul.f32 %v3378, %v3569
      %v3659 = vmul.f32 %v3379, %v3595
      %v3660 = vmul.f32 %v3380, %v3596
      %v3661 = vmul.f32 %v3381, %v3597
      %v3662 = vmul.f32 %v3382, %v3598
      %v3663 = vmul.f32 %v3383, %v3599
      %v3664 = vmul.f32 %v3384, %v3600
      %v3665 = vmul.f32 %v3385, %v3601
      %v3667 = vperm.slane %v3173, 0
      %v3669 = vmul.f32 %v3634, %v3667
      %v3670 = vmul.f32 %v3635, %v3667
      %v3671 = vmul.f32 %v3636, %v3667
      %v3672 = vmul.f32 %v3637, %v3667
      %v3673 = vmul.f32 %v3638, %v3667
      %v3674 = vmul.f32 %v3639, %v3667
      %v3675 = vmul.f32 %v3640, %v3667
      %v3676 = vmul.f32 %v3641, %v3667
      %v3677 = vmul.f32 %v3642, %v3667
      %v3678 = vmul.f32 %v3643, %v3667
      %v3679 = vmul.f32 %v3644, %v3667
      %v3680 = vmul.f32 %v3645, %v3667
      %v3681 = vmul.f32 %v3646, %v3667
      %v3682 = vmul.f32 %v3647, %v3667
      %v3683 = vmul.f32 %v3648, %v3667
      %v3684 = vmul.f32 %v3649, %v3667
      %v3685 = vmul.f32 %v3650, %v3667
      %v3686 = vmul.f32 %v3651, %v3667
      %v3687 = vmul.f32 %v3652, %v3667
      %v3688 = vmul.f32 %v3653, %v3667
      %v3689 = vmul.f32 %v3654, %v3667
      %v3690 = vmul.f32 %v3655, %v3667
      %v3691 = vmul.f32 %v3656, %v3667
      %v3692 = vmul.f32 %v3657, %v3667
      %v3693 = vmul.f32 %v3658, %v3667
      %v3694 = vmul.f32 %v3659, %v3667
      %v3695 = vmul.f32 %v3660, %v3667
      %v3696 = vmul.f32 %v3661, %v3667
      %v3697 = vmul.f32 %v3662, %v3667
      %v3698 = vmul.f32 %v3663, %v3667
      %v3699 = vmul.f32 %v3664, %v3667
      %v3700 = vmul.f32 %v3665, %v3667
      %v3702 = vperm.slane %v3174, 0
      %v3704 = vadd.f32 %v3669, %v3702
      %v3705 = vadd.f32 %v3670, %v3702
      %v3706 = vadd.f32 %v3671, %v3702
      %v3707 = vadd.f32 %v3672, %v3702
      %v3708 = vadd.f32 %v3673, %v3702
      %v3709 = vadd.f32 %v3674, %v3702
      %v3710 = vadd.f32 %v3675, %v3702
      %v3711 = vadd.f32 %v3676, %v3702
      %v3712 = vadd.f32 %v3677, %v3702
      %v3713 = vadd.f32 %v3678, %v3702
      %v3714 = vadd.f32 %v3679, %v3702
      %v3715 = vadd.f32 %v3680, %v3702
      %v3716 = vadd.f32 %v3681, %v3702
      %v3717 = vadd.f32 %v3682, %v3702
      %v3718 = vadd.f32 %v3683, %v3702
      %v3719 = vadd.f32 %v3684, %v3702
      %v3720 = vadd.f32 %v3685, %v3702
      %v3721 = vadd.f32 %v3686, %v3702
      %v3722 = vadd.f32 %v3687, %v3702
      %v3723 = vadd.f32 %v3688, %v3702
      %v3724 = vadd.f32 %v3689, %v3702
      %v3725 = vadd.f32 %v3690, %v3702
      %v3726 = vadd.f32 %v3691, %v3702
      %v3727 = vadd.f32 %v3692, %v3702
      %v3728 = vadd.f32 %v3693, %v3702
      %v3729 = vadd.f32 %v3694, %v3702
      %v3730 = vadd.f32 %v3695, %v3702
      %v3731 = vadd.f32 %v3696, %v3702
      %v3732 = vadd.f32 %v3697, %v3702
      %v3733 = vadd.f32 %v3698, %v3702
      %v3734 = vadd.f32 %v3699, %v3702
      %v3735 = vadd.f32 %v3700, %v3702
      %v3736 = vpack.c.bf16 %v3704, %v3704
      %v3737 = vpack.c.bf16 %v3705, %v3705
      %v3738 = vpack.c.bf16 %v3706, %v3706
      %v3739 = vpack.c.bf16 %v3707, %v3707
      %v3740 = vpack.c.bf16 %v3708, %v3708
      %v3741 = vpack.c.bf16 %v3709, %v3709
      %v3742 = vpack.c.bf16 %v3710, %v3710
      %v3743 = vpack.c.bf16 %v3711, %v3711
      %v3744 = vpack.c.bf16 %v3712, %v3712
      %v3745 = vpack.c.bf16 %v3713, %v3713
      %v3746 = vpack.c.bf16 %v3714, %v3714
      %v3747 = vpack.c.bf16 %v3715, %v3715
      %v3748 = vpack.c.bf16 %v3716, %v3716
      %v3749 = vpack.c.bf16 %v3717, %v3717
      %v3750 = vpack.c.bf16 %v3718, %v3718
      %v3751 = vpack.c.bf16 %v3719, %v3719
      %v3752 = vpack.c.bf16 %v3720, %v3720
      %v3753 = vpack.c.bf16 %v3721, %v3721
      %v3754 = vpack.c.bf16 %v3722, %v3722
      %v3755 = vpack.c.bf16 %v3723, %v3723
      %v3756 = vpack.c.bf16 %v3724, %v3724
      %v3757 = vpack.c.bf16 %v3725, %v3725
      %v3758 = vpack.c.bf16 %v3726, %v3726
      %v3759 = vpack.c.bf16 %v3727, %v3727
      %v3760 = vpack.c.bf16 %v3728, %v3728
      %v3761 = vpack.c.bf16 %v3729, %v3729
      %v3762 = vpack.c.bf16 %v3730, %v3730
      %v3763 = vpack.c.bf16 %v3731, %v3731
      %v3764 = vpack.c.bf16 %v3732, %v3732
      %v3765 = vpack.c.bf16 %v3733, %v3733
      %v3766 = vpack.c.bf16 %v3734, %v3734
      %v3767 = vpack.c.bf16 %v3735, %v3735
      %v3768 = vld [vmem:[%s14] sm:$0xff]
      %v3769 = vld [vmem:[%s14 + $0x8] sm:$0xff]
      %v3770 = vld [vmem:[%s14 + $0x10] sm:$0xff]
      %v3771 = vld [vmem:[%s14 + $0x18] sm:$0xff]
      %v3772 = vld [vmem:[%s14 + $0x20] sm:$0xff]
      %v3773 = vld [vmem:[%s14 + $0x28] sm:$0xff]
      %v3774 = vld [vmem:[%s14 + $0x30] sm:$0xff]
      %v3775 = vld [vmem:[%s14 + $0x38] sm:$0xff]
      %v3776 = vld [vmem:[%s14 + $0x40] sm:$0xff]
      %v3777 = vld [vmem:[%s14 + $0x48] sm:$0xff]
      %v3778 = vld [vmem:[%s14 + $0x50] sm:$0xff]
      %v3779 = vld [vmem:[%s14 + $0x58] sm:$0xff]
      %v3780 = vld [vmem:[%s14 + $0x60] sm:$0xff]
      %v3781 = vld [vmem:[%s14 + $0x68] sm:$0xff]
      %v3782 = vld [vmem:[%s14 + $0x70] sm:$0xff]
      %v3783 = vld [vmem:[%s14 + $0x78] sm:$0xff]
      %v3784 = vld [vmem:[%s14 + $0x80] sm:$0xff]
      %v3785 = vld [vmem:[%s14 + $0x88] sm:$0xff]
      %v3786 = vld [vmem:[%s14 + $0x90] sm:$0xff]
      %v3787 = vld [vmem:[%s14 + $0x98] sm:$0xff]
      %v3788 = vld [vmem:[%s14 + $0xa0] sm:$0xff]
      %v3789 = vld [vmem:[%s14 + $0xa8] sm:$0xff]
      %v3790 = vld [vmem:[%s14 + $0xb0] sm:$0xff]
      %v3791 = vld [vmem:[%s14 + $0xb8] sm:$0xff]
      %v3792 = vld [vmem:[%s15] sm:$0xf]
      %v3794 = vperm.slane %v3792, 0
      %v3795 = vperm.slane %v3792, 1
      %v3796 = vperm.slane %v3792, 2
      %v3797 = vperm.slane %v3792, 3
      %v3834 = vunpack.c.l.b16 %v3736
      %v3835 = vunpack.c.l.b16 %v3737
      %v3836 = vunpack.c.l.b16 %v3738
      %v3837 = vunpack.c.l.b16 %v3739
      %v3838 = vunpack.c.l.b16 %v3740
      %v3839 = vunpack.c.l.b16 %v3741
      %v3840 = vunpack.c.l.b16 %v3742
      %v3841 = vunpack.c.l.b16 %v3743
      %v3842 = vunpack.c.l.b16 %v3744
      %v3843 = vunpack.c.l.b16 %v3745
      %v3844 = vunpack.c.l.b16 %v3746
      %v3845 = vunpack.c.l.b16 %v3747
      %v3846 = vunpack.c.l.b16 %v3748
      %v3847 = vunpack.c.l.b16 %v3749
      %v3848 = vunpack.c.l.b16 %v3750
      %v3849 = vunpack.c.l.b16 %v3751
      %v3850 = vunpack.c.l.b16 %v3752
      %v3851 = vunpack.c.l.b16 %v3753
      %v3852 = vunpack.c.l.b16 %v3754
      %v3853 = vunpack.c.l.b16 %v3755
      %v3854 = vunpack.c.l.b16 %v3756
      %v3855 = vunpack.c.l.b16 %v3757
      %v3856 = vunpack.c.l.b16 %v3758
      %v3857 = vunpack.c.l.b16 %v3759
      %v3858 = vunpack.c.l.b16 %v3760
      %v3859 = vunpack.c.l.b16 %v3761
      %v3860 = vunpack.c.l.b16 %v3762
      %v3861 = vunpack.c.l.b16 %v3763
      %v3862 = vunpack.c.l.b16 %v3764
      %v3863 = vunpack.c.l.b16 %v3765
      %v3864 = vunpack.c.l.b16 %v3766
      %v3865 = vunpack.c.l.b16 %v3767
      %v3866 = vrot.slane %v3835, 7
      %v3867 = vsel %vm1321, %v3866, %v3834
      %v3868 = vrot.slane %v3836, 6
      %v3869 = vsel %vm1324, %v3868, %v3867
      %v3870 = vrot.slane %v3837, 5
      %v3871 = vsel %vm1327, %v3870, %v3869
      %v3872 = vrot.slane %v3838, 4
      %v3873 = vsel %vm1330, %v3872, %v3871
      %v3874 = vrot.slane %v3839, 3
      %v3875 = vsel %vm1333, %v3874, %v3873
      %v3876 = vrot.slane %v3840, 2
      %v3877 = vsel %vm1336, %v3876, %v3875
      %v3878 = vrot.slane %v3841, 1
      %v3879 = vsel %vm1339, %v3878, %v3877
      %v3880 = vrot.slane %v3843, 7
      %v3881 = vsel %vm1321, %v3880, %v3842
      %v3882 = vrot.slane %v3844, 6
      %v3883 = vsel %vm1324, %v3882, %v3881
      %v3884 = vrot.slane %v3845, 5
      %v3885 = vsel %vm1327, %v3884, %v3883
      %v3886 = vrot.slane %v3846, 4
      %v3887 = vsel %vm1330, %v3886, %v3885
      %v3888 = vrot.slane %v3847, 3
      %v3889 = vsel %vm1333, %v3888, %v3887
      %v3890 = vrot.slane %v3848, 2
      %v3891 = vsel %vm1336, %v3890, %v3889
      %v3892 = vrot.slane %v3849, 1
      %v3893 = vsel %vm1339, %v3892, %v3891
      %v3894 = vrot.slane %v3851, 7
      %v3895 = vsel %vm1321, %v3894, %v3850
      %v3896 = vrot.slane %v3852, 6
      %v3897 = vsel %vm1324, %v3896, %v3895
      %v3898 = vrot.slane %v3853, 5
      %v3899 = vsel %vm1327, %v3898, %v3897
      %v3900 = vrot.slane %v3854, 4
      %v3901 = vsel %vm1330, %v3900, %v3899
      %v3902 = vrot.slane %v3855, 3
      %v3903 = vsel %vm1333, %v3902, %v3901
      %v3904 = vrot.slane %v3856, 2
      %v3905 = vsel %vm1336, %v3904, %v3903
      %v3906 = vrot.slane %v3857, 1
      %v3907 = vsel %vm1339, %v3906, %v3905
      %v3908 = vrot.slane %v3859, 7
      %v3909 = vsel %vm1321, %v3908, %v3858
      %v3910 = vrot.slane %v3860, 6
      %v3911 = vsel %vm1324, %v3910, %v3909
      %v3912 = vrot.slane %v3861, 5
      %v3913 = vsel %vm1327, %v3912, %v3911
      %v3914 = vrot.slane %v3862, 4
      %v3915 = vsel %vm1330, %v3914, %v3913
      %v3916 = vrot.slane %v3863, 3
      %v3917 = vsel %vm1333, %v3916, %v3915
      %v3918 = vrot.slane %v3864, 2
      %v3919 = vsel %vm1336, %v3918, %v3917
      %v3920 = vrot.slane %v3865, 1
      %v3921 = vsel %vm1339, %v3920, %v3919
      %v3922 = vpack.c.b16 %v3893, %v3879
      %v3923 = vpack.c.b16 %v3921, %v3907
      %v3948 = vunpack.c.l.b16 %v3768
      %v3949 = vunpack.c.h.b16 %v3768
      %v3950 = vunpack.c.l.b16 %v3769
      %v3951 = vunpack.c.h.b16 %v3769
      %v3952 = vunpack.c.l.b16 %v3770
      %v3953 = vunpack.c.h.b16 %v3770
      %v3954 = vunpack.c.l.b16 %v3771
      %v3955 = vunpack.c.h.b16 %v3771
      %v3956 = vunpack.c.l.b16 %v3772
      %v3957 = vunpack.c.h.b16 %v3772
      %v3958 = vunpack.c.l.b16 %v3773
      %v3959 = vunpack.c.h.b16 %v3773
      %v3960 = vunpack.c.l.b16 %v3774
      %v3961 = vunpack.c.h.b16 %v3774
      %v3962 = vunpack.c.l.b16 %v3775
      %v3963 = vunpack.c.h.b16 %v3775
      %v3964 = vunpack.c.l.b16 %v3776
      %v3965 = vunpack.c.h.b16 %v3776
      %v3966 = vunpack.c.l.b16 %v3777
      %v3967 = vunpack.c.h.b16 %v3777
      %v3968 = vunpack.c.l.b16 %v3778
      %v3969 = vunpack.c.h.b16 %v3778
      %v3970 = vunpack.c.l.b16 %v3779
      %v3971 = vunpack.c.h.b16 %v3779
      %v3972 = vunpack.c.l.b16 %v3780
      %v3973 = vunpack.c.h.b16 %v3780
      %v3974 = vunpack.c.l.b16 %v3781
      %v3975 = vunpack.c.h.b16 %v3781
      %v3976 = vunpack.c.l.b16 %v3782
      %v3977 = vunpack.c.h.b16 %v3782
      %v3978 = vunpack.c.l.b16 %v3783
      %v3979 = vunpack.c.h.b16 %v3783
      %v3980 = vunpack.c.l.b16 %v3784
      %v3981 = vunpack.c.h.b16 %v3784
      %v3982 = vunpack.c.l.b16 %v3785
      %v3983 = vunpack.c.h.b16 %v3785
      %v3984 = vunpack.c.l.b16 %v3786
      %v3985 = vunpack.c.h.b16 %v3786
      %v3986 = vunpack.c.l.b16 %v3787
      %v3987 = vunpack.c.h.b16 %v3787
      %v3988 = vunpack.c.l.b16 %v3788
      %v3989 = vunpack.c.h.b16 %v3788
      %v3990 = vunpack.c.l.b16 %v3789
      %v3991 = vunpack.c.h.b16 %v3789
      %v3992 = vunpack.c.l.b16 %v3790
      %v3993 = vunpack.c.h.b16 %v3790
      %v3994 = vunpack.c.l.b16 %v3791
      %v3995 = vunpack.c.h.b16 %v3791
      %v3996 = vpack.c.b16 %v3952, %v3948
      %v3997 = vpack.c.b16 %v3953, %v3949
      %v3998 = vpack.c.b16 %v3954, %v3950
      %v3999 = vpack.c.b16 %v3955, %v3951
      %v4000 = vpack.c.b16 %v3960, %v3956
      %v4001 = vpack.c.b16 %v3961, %v3957
      %v4002 = vpack.c.b16 %v3962, %v3958
      %v4003 = vpack.c.b16 %v3963, %v3959
      %v4004 = vpack.c.b16 %v3968, %v3964
      %v4005 = vpack.c.b16 %v3969, %v3965
      %v4006 = vpack.c.b16 %v3970, %v3966
      %v4007 = vpack.c.b16 %v3971, %v3967
      %v4008 = vpack.c.b16 %v3976, %v3972
      %v4009 = vpack.c.b16 %v3977, %v3973
      %v4010 = vpack.c.b16 %v3978, %v3974
      %v4011 = vpack.c.b16 %v3979, %v3975
      %v4012 = vpack.c.b16 %v3984, %v3980
      %v4013 = vpack.c.b16 %v3985, %v3981
      %v4014 = vpack.c.b16 %v3986, %v3982
      %v4015 = vpack.c.b16 %v3987, %v3983
      %v4016 = vpack.c.b16 %v3992, %v3988
      %v4017 = vpack.c.b16 %v3993, %v3989
      %v4018 = vpack.c.b16 %v3994, %v3990
      %v4019 = vpack.c.b16 %v3995, %v3991
      %v4045 = vsel %vm961, %v3922, 0
      %v4048 = vsel %vm961, %v3923, 0
      %4050 = vmatpush.bf16.msra.mxu0 0
      %4051 = vmatpush.bf16.msra.mxu0 0
      %4052 = vmatpush.bf16.msra.mxu0 %v4016
      %4053 = vmatpush.bf16.msra.mxu0 %v4012
      %4054 = vmatpush.bf16.msra.mxu0 %v4008
      %4055 = vmatpush.bf16.msra.mxu0 %v4004
      %4056 = vmatpush.bf16.msra.mxu0 %v4000
      %4057 = vmatpush.bf16.msra.mxu0 %v3996
      %4058 = vmatmul.bf16.gmra.mxu0 %v4045
      %v4059 = vpop.f32.mrf.mxu0
      %v4060 = vadd.f32 %v3794, %v4059
      %v4061 = vpop.f32.mrf.mxu0
      %v4062 = vadd.f32 %v3794, %v4061
      %4063 = vmatmul.bf16.gmra.mxu0 %v4048
      %v4064 = vpop.f32.mrf.mxu0
      %v4065 = vadd.f32 %v3794, %v4064
      %v4066 = vpop.f32.mrf.mxu0
      %v4067 = vadd.f32 %v3794, %v4066
      %4068 = vdwg.mxu0
      %4069 = vmatpush.bf16.msra.mxu0 0
      %4070 = vmatpush.bf16.msra.mxu0 0
      %4071 = vmatpush.bf16.msra.mxu0 %v4017
      %4072 = vmatpush.bf16.msra.mxu0 %v4013
      %4073 = vmatpush.bf16.msra.mxu0 %v4009
      %4074 = vmatpush.bf16.msra.mxu0 %v4005
      %4075 = vmatpush.bf16.msra.mxu0 %v4001
      %4076 = vmatpush.bf16.msra.mxu0 %v3997
      %4077 = vmatmul.bf16.gmra.mxu0 %v4045
      %v4078 = vpop.f32.mrf.mxu0
      %v4079 = vadd.f32 %v3795, %v4078
      %v4080 = vpop.f32.mrf.mxu0
      %v4081 = vadd.f32 %v3795, %v4080
      %4082 = vmatmul.bf16.gmra.mxu0 %v4048
      %v4083 = vpop.f32.mrf.mxu0
      %v4084 = vadd.f32 %v3795, %v4083
      %v4085 = vpop.f32.mrf.mxu0
      %v4086 = vadd.f32 %v3795, %v4085
      %4087 = vdwg.mxu0
      %4088 = vmatpush.bf16.msra.mxu0 0
      %4089 = vmatpush.bf16.msra.mxu0 0
      %4090 = vmatpush.bf16.msra.mxu0 %v4018
      %4091 = vmatpush.bf16.msra.mxu0 %v4014
      %4092 = vmatpush.bf16.msra.mxu0 %v4010
      %4093 = vmatpush.bf16.msra.mxu0 %v4006
      %4094 = vmatpush.bf16.msra.mxu0 %v4002
      %4095 = vmatpush.bf16.msra.mxu0 %v3998
      %4096 = vmatmul.bf16.gmra.mxu0 %v4045
      %v4097 = vpop.f32.mrf.mxu0
      %v4098 = vadd.f32 %v3796, %v4097
      %v4099 = vpop.f32.mrf.mxu0
      %v4100 = vadd.f32 %v3796, %v4099
      %4101 = vmatmul.bf16.gmra.mxu0 %v4048
      %v4102 = vpop.f32.mrf.mxu0
      %v4103 = vadd.f32 %v3796, %v4102
      %v4104 = vpop.f32.mrf.mxu0
      %v4105 = vadd.f32 %v3796, %v4104
      %4106 = vdwg.mxu0
      %4107 = vmatpush.bf16.msra.mxu0 0
      %4108 = vmatpush.bf16.msra.mxu0 0
      %4109 = vmatpush.bf16.msra.mxu0 %v4019
      %4110 = vmatpush.bf16.msra.mxu0 %v4015
      %4111 = vmatpush.bf16.msra.mxu0 %v4011
      %4112 = vmatpush.bf16.msra.mxu0 %v4007
      %4113 = vmatpush.bf16.msra.mxu0 %v4003
      %4114 = vmatpush.bf16.msra.mxu0 %v3999
      %4115 = vmatmul.bf16.gmra.mxu0 %v4045
      %v4116 = vpop.f32.mrf.mxu0
      %v4117 = vadd.f32 %v3797, %v4116
      %v4118 = vpop.f32.mrf.mxu0
      %v4119 = vadd.f32 %v3797, %v4118
      %4120 = vmatmul.bf16.gmra.mxu0 %v4048
      %v4121 = vpop.f32.mrf.mxu0
      %v4122 = vadd.f32 %v3797, %v4121
      %v4123 = vpop.f32.mrf.mxu0
      %v4124 = vadd.f32 %v3797, %v4123
      %4125 = vdwg.mxu0
      %v4126 = vmax.f32 %v4060, 0.0
      %v4127 = vmax.f32 %v4079, 0.0
      %v4128 = vmax.f32 %v4098, 0.0
      %v4129 = vmax.f32 %v4117, 0.0
      %v4130 = vmax.f32 %v4062, 0.0
      %v4131 = vmax.f32 %v4081, 0.0
      %v4132 = vmax.f32 %v4100, 0.0
      %v4133 = vmax.f32 %v4119, 0.0
      %v4134 = vmax.f32 %v4065, 0.0
      %v4135 = vmax.f32 %v4084, 0.0
      %v4136 = vmax.f32 %v4103, 0.0
      %v4137 = vmax.f32 %v4122, 0.0
      %v4138 = vmax.f32 %v4067, 0.0
      %v4139 = vmax.f32 %v4086, 0.0
      %v4140 = vmax.f32 %v4105, 0.0
      %v4141 = vmax.f32 %v4124, 0.0
      %v4142 = vpack.c.bf16 %v4130, %v4126
      %v4143 = vpack.c.bf16 %v4131, %v4127
      %v4144 = vpack.c.bf16 %v4132, %v4128
      %v4145 = vpack.c.bf16 %v4133, %v4129
      %v4146 = vpack.c.bf16 %v4138, %v4134
      %v4147 = vpack.c.bf16 %v4139, %v4135
      %v4148 = vpack.c.bf16 %v4140, %v4136
      %v4149 = vpack.c.bf16 %v4141, %v4137
      %v4150 = vld [vmem:[%s16] sm:$0xf]
      %v4151 = vld [vmem:[%s16 + $0x4] sm:$0xf]
      %v4152 = vld [vmem:[%s16 + $0x8] sm:$0xf]
      %v4153 = vld [vmem:[%s16 + $0xc] sm:$0xf]
      %v4154 = vld [vmem:[%s16 + $0x10] sm:$0xf]
      %v4155 = vld [vmem:[%s16 + $0x14] sm:$0xf]
      %v4156 = vld [vmem:[%s16 + $0x18] sm:$0xf]
      %v4157 = vld [vmem:[%s16 + $0x1c] sm:$0xf]
      %v4158 = vld [vmem:[%s16 + $0x20] sm:$0xf]
      %v4159 = vld [vmem:[%s16 + $0x24] sm:$0xf]
      %v4160 = vld [vmem:[%s16 + $0x28] sm:$0xf]
      %v4161 = vld [vmem:[%s16 + $0x2c] sm:$0xf]
      %v4162 = vld [vmem:[%s16 + $0x30] sm:$0xf]
      %v4163 = vld [vmem:[%s16 + $0x34] sm:$0xf]
      %v4164 = vld [vmem:[%s16 + $0x38] sm:$0xf]
      %v4165 = vld [vmem:[%s16 + $0x3c] sm:$0xf]
      %v4166 = vld [vmem:[%s16 + $0x40] sm:$0xf]
      %v4167 = vld [vmem:[%s16 + $0x44] sm:$0xf]
      %v4168 = vld [vmem:[%s16 + $0x48] sm:$0xf]
      %v4169 = vld [vmem:[%s16 + $0x4c] sm:$0xf]
      %v4170 = vld [vmem:[%s16 + $0x50] sm:$0xf]
      %v4171 = vld [vmem:[%s16 + $0x54] sm:$0xf]
      %v4172 = vld [vmem:[%s16 + $0x58] sm:$0xf]
      %v4173 = vld [vmem:[%s16 + $0x5c] sm:$0xf]
      %v4174 = vld [vmem:[%s16 + $0x60] sm:$0xf]
      %v4175 = vld [vmem:[%s16 + $0x64] sm:$0xf]
      %v4176 = vld [vmem:[%s16 + $0x68] sm:$0xf]
      %v4177 = vld [vmem:[%s16 + $0x6c] sm:$0xf]
      %v4178 = vld [vmem:[%s16 + $0x70] sm:$0xf]
      %v4179 = vld [vmem:[%s16 + $0x74] sm:$0xf]
      %v4180 = vld [vmem:[%s16 + $0x78] sm:$0xf]
      %v4181 = vld [vmem:[%s16 + $0x7c] sm:$0xf]
      %v4182 = vld [vmem:[%s16 + $0x80] sm:$0xf]
      %v4183 = vld [vmem:[%s16 + $0x84] sm:$0xf]
      %v4184 = vld [vmem:[%s16 + $0x88] sm:$0xf]
      %v4185 = vld [vmem:[%s16 + $0x8c] sm:$0xf]
      %v4186 = vld [vmem:[%s16 + $0x90] sm:$0xf]
      %v4187 = vld [vmem:[%s16 + $0x94] sm:$0xf]
      %v4188 = vld [vmem:[%s16 + $0x98] sm:$0xf]
      %v4189 = vld [vmem:[%s16 + $0x9c] sm:$0xf]
      %v4190 = vld [vmem:[%s16 + $0xa0] sm:$0xf]
      %v4191 = vld [vmem:[%s16 + $0xa4] sm:$0xf]
      %v4192 = vld [vmem:[%s16 + $0xa8] sm:$0xf]
      %v4193 = vld [vmem:[%s16 + $0xac] sm:$0xf]
      %v4194 = vld [vmem:[%s16 + $0xb0] sm:$0xf]
      %v4195 = vld [vmem:[%s16 + $0xb4] sm:$0xf]
      %v4196 = vld [vmem:[%s16 + $0xb8] sm:$0xf]
      %v4197 = vld [vmem:[%s16 + $0xbc] sm:$0xf]
      %v4198 = vld [vmem:[%s16 + $0xc0] sm:$0xf]
      %v4199 = vld [vmem:[%s16 + $0xc4] sm:$0xf]
      %v4200 = vld [vmem:[%s16 + $0xc8] sm:$0xf]
      %v4201 = vld [vmem:[%s16 + $0xcc] sm:$0xf]
      %v4202 = vld [vmem:[%s16 + $0xd0] sm:$0xf]
      %v4203 = vld [vmem:[%s16 + $0xd4] sm:$0xf]
      %v4204 = vld [vmem:[%s16 + $0xd8] sm:$0xf]
      %v4205 = vld [vmem:[%s16 + $0xdc] sm:$0xf]
      %v4206 = vld [vmem:[%s16 + $0xe0] sm:$0xf]
      %v4207 = vld [vmem:[%s16 + $0xe4] sm:$0xf]
      %v4208 = vld [vmem:[%s16 + $0xe8] sm:$0xf]
      %v4209 = vld [vmem:[%s16 + $0xec] sm:$0xf]
      %v4210 = vld [vmem:[%s16 + $0xf0] sm:$0xf]
      %v4211 = vld [vmem:[%s16 + $0xf4] sm:$0xf]
      %v4212 = vld [vmem:[%s16 + $0xf8] sm:$0xf]
      %v4213 = vld [vmem:[%s16 + $0xfc] sm:$0xf]
      %v4214 = vld [vmem:[%s17] sm:$0x1]
      %v4216 = vperm.slane %v4214, 0
      %v4282 = vunpack.c.l.b16 %v4150
      %v4283 = vunpack.c.l.b16 %v4151
      %v4284 = vunpack.c.l.b16 %v4152
      %v4285 = vunpack.c.l.b16 %v4153
      %v4286 = vunpack.c.l.b16 %v4154
      %v4287 = vunpack.c.l.b16 %v4155
      %v4288 = vunpack.c.l.b16 %v4156
      %v4289 = vunpack.c.l.b16 %v4157
      %v4290 = vunpack.c.l.b16 %v4158
      %v4291 = vunpack.c.l.b16 %v4159
      %v4292 = vunpack.c.l.b16 %v4160
      %v4293 = vunpack.c.l.b16 %v4161
      %v4294 = vunpack.c.l.b16 %v4162
      %v4295 = vunpack.c.l.b16 %v4163
      %v4296 = vunpack.c.l.b16 %v4164
      %v4297 = vunpack.c.l.b16 %v4165
      %v4298 = vunpack.c.l.b16 %v4166
      %v4299 = vunpack.c.l.b16 %v4167
      %v4300 = vunpack.c.l.b16 %v4168
      %v4301 = vunpack.c.l.b16 %v4169
      %v4302 = vunpack.c.l.b16 %v4170
      %v4303 = vunpack.c.l.b16 %v4171
      %v4304 = vunpack.c.l.b16 %v4172
      %v4305 = vunpack.c.l.b16 %v4173
      %v4306 = vunpack.c.l.b16 %v4174
      %v4307 = vunpack.c.l.b16 %v4175
      %v4308 = vunpack.c.l.b16 %v4176
      %v4309 = vunpack.c.l.b16 %v4177
      %v4310 = vunpack.c.l.b16 %v4178
      %v4311 = vunpack.c.l.b16 %v4179
      %v4312 = vunpack.c.l.b16 %v4180
      %v4313 = vunpack.c.l.b16 %v4181
      %v4314 = vunpack.c.l.b16 %v4182
      %v4315 = vunpack.c.l.b16 %v4183
      %v4316 = vunpack.c.l.b16 %v4184
      %v4317 = vunpack.c.l.b16 %v4185
      %v4318 = vunpack.c.l.b16 %v4186
      %v4319 = vunpack.c.l.b16 %v4187
      %v4320 = vunpack.c.l.b16 %v4188
      %v4321 = vunpack.c.l.b16 %v4189
      %v4322 = vunpack.c.l.b16 %v4190
      %v4323 = vunpack.c.l.b16 %v4191
      %v4324 = vunpack.c.l.b16 %v4192
      %v4325 = vunpack.c.l.b16 %v4193
      %v4326 = vunpack.c.l.b16 %v4194
      %v4327 = vunpack.c.l.b16 %v4195
      %v4328 = vunpack.c.l.b16 %v4196
      %v4329 = vunpack.c.l.b16 %v4197
      %v4330 = vunpack.c.l.b16 %v4198
      %v4331 = vunpack.c.l.b16 %v4199
      %v4332 = vunpack.c.l.b16 %v4200
      %v4333 = vunpack.c.l.b16 %v4201
      %v4334 = vunpack.c.l.b16 %v4202
      %v4335 = vunpack.c.l.b16 %v4203
      %v4336 = vunpack.c.l.b16 %v4204
      %v4337 = vunpack.c.l.b16 %v4205
      %v4338 = vunpack.c.l.b16 %v4206
      %v4339 = vunpack.c.l.b16 %v4207
      %v4340 = vunpack.c.l.b16 %v4208
      %v4341 = vunpack.c.l.b16 %v4209
      %v4342 = vunpack.c.l.b16 %v4210
      %v4343 = vunpack.c.l.b16 %v4211
      %v4344 = vunpack.c.l.b16 %v4212
      %v4345 = vunpack.c.l.b16 %v4213
      %v4346 = vpack.c.b16 %v4283, %v4282
      %v4347 = vpack.c.b16 %v4285, %v4284
      %v4348 = vpack.c.b16 %v4287, %v4286
      %v4349 = vpack.c.b16 %v4289, %v4288
      %v4350 = vpack.c.b16 %v4291, %v4290
      %v4351 = vpack.c.b16 %v4293, %v4292
      %v4352 = vpack.c.b16 %v4295, %v4294
      %v4353 = vpack.c.b16 %v4297, %v4296
      %v4354 = vpack.c.b16 %v4299, %v4298
      %v4355 = vpack.c.b16 %v4301, %v4300
      %v4356 = vpack.c.b16 %v4303, %v4302
      %v4357 = vpack.c.b16 %v4305, %v4304
      %v4358 = vpack.c.b16 %v4307, %v4306
      %v4359 = vpack.c.b16 %v4309, %v4308
      %v4360 = vpack.c.b16 %v4311, %v4310
      %v4361 = vpack.c.b16 %v4313, %v4312
      %v4362 = vpack.c.b16 %v4315, %v4314
      %v4363 = vpack.c.b16 %v4317, %v4316
      %v4364 = vpack.c.b16 %v4319, %v4318
      %v4365 = vpack.c.b16 %v4321, %v4320
      %v4366 = vpack.c.b16 %v4323, %v4322
      %v4367 = vpack.c.b16 %v4325, %v4324
      %v4368 = vpack.c.b16 %v4327, %v4326
      %v4369 = vpack.c.b16 %v4329, %v4328
      %v4370 = vpack.c.b16 %v4331, %v4330
      %v4371 = vpack.c.b16 %v4333, %v4332
      %v4372 = vpack.c.b16 %v4335, %v4334
      %v4373 = vpack.c.b16 %v4337, %v4336
      %v4374 = vpack.c.b16 %v4339, %v4338
      %v4375 = vpack.c.b16 %v4341, %v4340
      %v4376 = vpack.c.b16 %v4343, %v4342
      %v4377 = vpack.c.b16 %v4345, %v4344
      %4410 = vmatpush.bf16.msra.mxu0 %v4353
      %4411 = vmatpush.bf16.msra.mxu0 %v4352
      %4412 = vmatpush.bf16.msra.mxu0 %v4351
      %4413 = vmatpush.bf16.msra.mxu0 %v4350
      %4414 = vmatpush.bf16.msra.mxu0 %v4349
      %4415 = vmatpush.bf16.msra.mxu0 %v4348
      %4416 = vmatpush.bf16.msra.mxu0 %v4347
      %4417 = vmatpush.bf16.msra.mxu0 %v4346
      %4418 = vmatmul.bf16.gmra.mxu0 %v4142
      %v4419 = vpop.f32.mrf.mxu0
      %v4420 = vadd.f32 %v4216, %v4419
      %v4421 = vpop.f32.mrf.mxu0
      %v4422 = vadd.f32 %v4216, %v4421
      %4423 = vmatmul.bf16.gmra.mxu0 %v4146
      %v4424 = vpop.f32.mrf.mxu0
      %v4425 = vadd.f32 %v4216, %v4424
      %v4426 = vpop.f32.mrf.mxu0
      %v4427 = vadd.f32 %v4216, %v4426
      %4428 = vdwg.mxu0
      %4429 = vmatpush.bf16.msra.mxu0 %v4361
      %4430 = vmatpush.bf16.msra.mxu0 %v4360
      %4431 = vmatpush.bf16.msra.mxu0 %v4359
      %4432 = vmatpush.bf16.msra.mxu0 %v4358
      %4433 = vmatpush.bf16.msra.mxu0 %v4357
      %4434 = vmatpush.bf16.msra.mxu0 %v4356
      %4435 = vmatpush.bf16.msra.mxu0 %v4355
      %4436 = vmatpush.bf16.msra.mxu0 %v4354
      %4437 = vmatmul.bf16.gmra.mxu0 %v4143
      %v4438 = vpop.f32.mrf.mxu0
      %v4439 = vadd.f32 %v4420, %v4438
      %v4440 = vpop.f32.mrf.mxu0
      %v4441 = vadd.f32 %v4422, %v4440
      %4442 = vmatmul.bf16.gmra.mxu0 %v4147
      %v4443 = vpop.f32.mrf.mxu0
      %v4444 = vadd.f32 %v4425, %v4443
      %v4445 = vpop.f32.mrf.mxu0
      %v4446 = vadd.f32 %v4427, %v4445
      %4447 = vdwg.mxu0
      %4448 = vmatpush.bf16.msra.mxu0 %v4369
      %4449 = vmatpush.bf16.msra.mxu0 %v4368
      %4450 = vmatpush.bf16.msra.mxu0 %v4367
      %4451 = vmatpush.bf16.msra.mxu0 %v4366
      %4452 = vmatpush.bf16.msra.mxu0 %v4365
      %4453 = vmatpush.bf16.msra.mxu0 %v4364
      %4454 = vmatpush.bf16.msra.mxu0 %v4363
      %4455 = vmatpush.bf16.msra.mxu0 %v4362
      %4456 = vmatmul.bf16.gmra.mxu0 %v4144
      %v4457 = vpop.f32.mrf.mxu0
      %v4458 = vadd.f32 %v4439, %v4457
      %v4459 = vpop.f32.mrf.mxu0
      %v4460 = vadd.f32 %v4441, %v4459
      %4461 = vmatmul.bf16.gmra.mxu0 %v4148
      %v4462 = vpop.f32.mrf.mxu0
      %v4463 = vadd.f32 %v4444, %v4462
      %v4464 = vpop.f32.mrf.mxu0
      %v4465 = vadd.f32 %v4446, %v4464
      %4466 = vdwg.mxu0
      %4467 = vmatpush.bf16.msra.mxu0 %v4377
      %4468 = vmatpush.bf16.msra.mxu0 %v4376
      %4469 = vmatpush.bf16.msra.mxu0 %v4375
      %4470 = vmatpush.bf16.msra.mxu0 %v4374
      %4471 = vmatpush.bf16.msra.mxu0 %v4373
      %4472 = vmatpush.bf16.msra.mxu0 %v4372
      %4473 = vmatpush.bf16.msra.mxu0 %v4371
      %4474 = vmatpush.bf16.msra.mxu0 %v4370
      %4475 = vmatmul.bf16.gmra.mxu0 %v4145
      %v4476 = vpop.f32.mrf.mxu0
      %v4477 = vadd.f32 %v4458, %v4476
      %v4478 = vpop.f32.mrf.mxu0
      %v4479 = vadd.f32 %v4460, %v4478
      %4480 = vmatmul.bf16.gmra.mxu0 %v4149
      %v4481 = vpop.f32.mrf.mxu0
      %v4482 = vadd.f32 %v4463, %v4481
      %v4483 = vpop.f32.mrf.mxu0
      %v4484 = vadd.f32 %v4465, %v4483
      %4485 = vdwg.mxu0
      %v4490 = vrot.slane %v4477, 1
      %v4491 = vrot.slane %v4477, 2
      %v4492 = vrot.slane %v4477, 3
      %v4493 = vrot.slane %v4477, 4
      %v4494 = vrot.slane %v4477, 5
      %v4495 = vrot.slane %v4477, 6
      %v4496 = vrot.slane %v4477, 7
      %v4497 = vrot.slane %v4479, 1
      %v4498 = vrot.slane %v4479, 2
      %v4499 = vrot.slane %v4479, 3
      %v4500 = vrot.slane %v4479, 4
      %v4501 = vrot.slane %v4479, 5
      %v4502 = vrot.slane %v4479, 6
      %v4503 = vrot.slane %v4479, 7
      %v4504 = vrot.slane %v4482, 1
      %v4505 = vrot.slane %v4482, 2
      %v4506 = vrot.slane %v4482, 3
      %v4507 = vrot.slane %v4482, 4
      %v4508 = vrot.slane %v4482, 5
      %v4509 = vrot.slane %v4482, 6
      %v4510 = vrot.slane %v4482, 7
      %v4511 = vrot.slane %v4484, 1
      %v4512 = vrot.slane %v4484, 2
      %v4513 = vrot.slane %v4484, 3
      %v4514 = vrot.slane %v4484, 4
      %v4515 = vrot.slane %v4484, 5
      %v4516 = vrot.slane %v4484, 6
      %v4517 = vrot.slane %v4484, 7
      %v4550 = vadd.f32 %v3704, %v4477
      %v4551 = vadd.f32 %v3705, %v4490
      %v4552 = vadd.f32 %v3706, %v4491
      %v4553 = vadd.f32 %v3707, %v4492
      %v4554 = vadd.f32 %v3708, %v4493
      %v4555 = vadd.f32 %v3709, %v4494
      %v4556 = vadd.f32 %v3710, %v4495
      %v4557 = vadd.f32 %v3711, %v4496
      %v4558 = vadd.f32 %v3712, %v4479
      %v4559 = vadd.f32 %v3713, %v4497
      %v4560 = vadd.f32 %v3714, %v4498
      %v4561 = vadd.f32 %v3715, %v4499
      %v4562 = vadd.f32 %v3716, %v4500
      %v4563 = vadd.f32 %v3717, %v4501
      %v4564 = vadd.f32 %v3718, %v4502
      %v4565 = vadd.f32 %v3719, %v4503
      %v4566 = vadd.f32 %v3720, %v4482
      %v4567 = vadd.f32 %v3721, %v4504
      %v4568 = vadd.f32 %v3722, %v4505
      %v4569 = vadd.f32 %v3723, %v4506
      %v4570 = vadd.f32 %v3724, %v4507
      %v4571 = vadd.f32 %v3725, %v4508
      %v4572 = vadd.f32 %v3726, %v4509
      %v4573 = vadd.f32 %v3727, %v4510
      %v4574 = vadd.f32 %v3728, %v4484
      %v4575 = vadd.f32 %v3729, %v4511
      %v4576 = vadd.f32 %v3730, %v4512
      %v4577 = vadd.f32 %v3731, %v4513
      %v4578 = vadd.f32 %v3732, %v4514
      %v4579 = vadd.f32 %v3733, %v4515
      %v4580 = vadd.f32 %v3734, %v4516
      %v4581 = vadd.f32 %v3735, %v4517
      %v4582 = vld [vmem:[%s18] sm:$0x1]
      %v4583 = vld [vmem:[%s19] sm:$0x1]
      %v4616 = vrot.slane %v4551, 7
      %v4617 = vsel %vm1321, %v4616, %v4550
      %v4618 = vrot.slane %v4552, 6
      %v4619 = vsel %vm1324, %v4618, %v4617
      %v4620 = vrot.slane %v4553, 5
      %v4621 = vsel %vm1327, %v4620, %v4619
      %v4622 = vrot.slane %v4554, 4
      %v4623 = vsel %vm1330, %v4622, %v4621
      %v4624 = vrot.slane %v4555, 3
      %v4625 = vsel %vm1333, %v4624, %v4623
      %v4626 = vrot.slane %v4556, 2
      %v4627 = vsel %vm1336, %v4626, %v4625
      %v4628 = vrot.slane %v4557, 1
      %v4629 = vsel %vm1339, %v4628, %v4627
      %v4630 = vrot.slane %v4559, 7
      %v4631 = vsel %vm1321, %v4630, %v4558
      %v4632 = vrot.slane %v4560, 6
      %v4633 = vsel %vm1324, %v4632, %v4631
      %v4634 = vrot.slane %v4561, 5
      %v4635 = vsel %vm1327, %v4634, %v4633
      %v4636 = vrot.slane %v4562, 4
      %v4637 = vsel %vm1330, %v4636, %v4635
      %v4638 = vrot.slane %v4563, 3
      %v4639 = vsel %vm1333, %v4638, %v4637
      %v4640 = vrot.slane %v4564, 2
      %v4641 = vsel %vm1336, %v4640, %v4639
      %v4642 = vrot.slane %v4565, 1
      %v4643 = vsel %vm1339, %v4642, %v4641
      %v4644 = vrot.slane %v4567, 7
      %v4645 = vsel %vm1321, %v4644, %v4566
      %v4646 = vrot.slane %v4568, 6
      %v4647 = vsel %vm1324, %v4646, %v4645
      %v4648 = vrot.slane %v4569, 5
      %v4649 = vsel %vm1327, %v4648, %v4647
      %v4650 = vrot.slane %v4570, 4
      %v4651 = vsel %vm1330, %v4650, %v4649
      %v4652 = vrot.slane %v4571, 3
      %v4653 = vsel %vm1333, %v4652, %v4651
      %v4654 = vrot.slane %v4572, 2
      %v4655 = vsel %vm1336, %v4654, %v4653
      %v4656 = vrot.slane %v4573, 1
      %v4657 = vsel %vm1339, %v4656, %v4655
      %v4658 = vrot.slane %v4575, 7
      %v4659 = vsel %vm1321, %v4658, %v4574
      %v4660 = vrot.slane %v4576, 6
      %v4661 = vsel %vm1324, %v4660, %v4659
      %v4662 = vrot.slane %v4577, 5
      %v4663 = vsel %vm1327, %v4662, %v4661
      %v4664 = vrot.slane %v4578, 4
      %v4665 = vsel %vm1330, %v4664, %v4663
      %v4666 = vrot.slane %v4579, 3
      %v4667 = vsel %vm1333, %v4666, %v4665
      %v4668 = vrot.slane %v4580, 2
      %v4669 = vsel %vm1336, %v4668, %v4667
      %v4670 = vrot.slane %v4581, 1
      %v4671 = vsel %vm1339, %v4670, %v4669
      %v4676 = vsel %vm961, %v4629, 0.0
      %4677 = vadd.xlane.f32.xlu0 %v4676
      %v4678 = vpop.xlane.xlu0 %4677
      %v4679 = vsel %vm961, %v4643, 0.0
      %4680 = vadd.xlane.f32.xlu0 %v4679
      %v4681 = vpop.xlane.xlu0 %4680
      %v4682 = vsel %vm961, %v4657, 0.0
      %4683 = vadd.xlane.f32.xlu0 %v4682
      %v4684 = vpop.xlane.xlu0 %4683
      %v4685 = vsel %vm961, %v4671, 0.0
      %4686 = vadd.xlane.f32.xlu0 %v4685
      %v4687 = vpop.xlane.xlu0 %4686
      %v4688 = vmul.f32 %v4678, %v3285
      %v4689 = vmul.f32 %v4681, %v3285
      %v4690 = vmul.f32 %v4684, %v3285
      %v4691 = vmul.f32 %v4687, %v3285
      %v4696 = vrot.slane %v4688, 1
      %v4697 = vrot.slane %v4688, 2
      %v4698 = vrot.slane %v4688, 3
      %v4699 = vrot.slane %v4688, 4
      %v4700 = vrot.slane %v4688, 5
      %v4701 = vrot.slane %v4688, 6
      %v4702 = vrot.slane %v4688, 7
      %v4703 = vrot.slane %v4689, 1
      %v4704 = vrot.slane %v4689, 2
      %v4705 = vrot.slane %v4689, 3
      %v4706 = vrot.slane %v4689, 4
      %v4707 = vrot.slane %v4689, 5
      %v4708 = vrot.slane %v4689, 6
      %v4709 = vrot.slane %v4689, 7
      %v4710 = vrot.slane %v4690, 1
      %v4711 = vrot.slane %v4690, 2
      %v4712 = vrot.slane %v4690, 3
      %v4713 = vrot.slane %v4690, 4
      %v4714 = vrot.slane %v4690, 5
      %v4715 = vrot.slane %v4690, 6
      %v4716 = vrot.slane %v4690, 7
      %v4717 = vrot.slane %v4691, 1
      %v4718 = vrot.slane %v4691, 2
      %v4719 = vrot.slane %v4691, 3
      %v4720 = vrot.slane %v4691, 4
      %v4721 = vrot.slane %v4691, 5
      %v4722 = vrot.slane %v4691, 6
      %v4723 = vrot.slane %v4691, 7
      %v4756 = vsub.f32 %v4550, %v4688
      %v4757 = vsub.f32 %v4551, %v4696
      %v4758 = vsub.f32 %v4552, %v4697
      %v4759 = vsub.f32 %v4553, %v4698
      %v4760 = vsub.f32 %v4554, %v4699
      %v4761 = vsub.f32 %v4555, %v4700
      %v4762 = vsub.f32 %v4556, %v4701
      %v4763 = vsub.f32 %v4557, %v4702
      %v4764 = vsub.f32 %v4558, %v4689
      %v4765 = vsub.f32 %v4559, %v4703
      %v4766 = vsub.f32 %v4560, %v4704
      %v4767 = vsub.f32 %v4561, %v4705
      %v4768 = vsub.f32 %v4562, %v4706
      %v4769 = vsub.f32 %v4563, %v4707
      %v4770 = vsub.f32 %v4564, %v4708
      %v4771 = vsub.f32 %v4565, %v4709
      %v4772 = vsub.f32 %v4566, %v4690
      %v4773 = vsub.f32 %v4567, %v4710
      %v4774 = vsub.f32 %v4568, %v4711
      %v4775 = vsub.f32 %v4569, %v4712
      %v4776 = vsub.f32 %v4570, %v4713
      %v4777 = vsub.f32 %v4571, %v4714
      %v4778 = vsub.f32 %v4572, %v4715
      %v4779 = vsub.f32 %v4573, %v4716
      %v4780 = vsub.f32 %v4574, %v4691
      %v4781 = vsub.f32 %v4575, %v4717
      %v4782 = vsub.f32 %v4576, %v4718
      %v4783 = vsub.f32 %v4577, %v4719
      %v4784 = vsub.f32 %v4578, %v4720
      %v4785 = vsub.f32 %v4579, %v4721
      %v4786 = vsub.f32 %v4580, %v4722
      %v4787 = vsub.f32 %v4581, %v4723
      %v4788 = vmul.f32 %v4756, %v4756
      %v4789 = vmul.f32 %v4757, %v4757
      %v4790 = vmul.f32 %v4758, %v4758
      %v4791 = vmul.f32 %v4759, %v4759
      %v4792 = vmul.f32 %v4760, %v4760
      %v4793 = vmul.f32 %v4761, %v4761
      %v4794 = vmul.f32 %v4762, %v4762
      %v4795 = vmul.f32 %v4763, %v4763
      %v4796 = vmul.f32 %v4764, %v4764
      %v4797 = vmul.f32 %v4765, %v4765
      %v4798 = vmul.f32 %v4766, %v4766
      %v4799 = vmul.f32 %v4767, %v4767
      %v4800 = vmul.f32 %v4768, %v4768
      %v4801 = vmul.f32 %v4769, %v4769
      %v4802 = vmul.f32 %v4770, %v4770
      %v4803 = vmul.f32 %v4771, %v4771
      %v4804 = vmul.f32 %v4772, %v4772
      %v4805 = vmul.f32 %v4773, %v4773
      %v4806 = vmul.f32 %v4774, %v4774
      %v4807 = vmul.f32 %v4775, %v4775
      %v4808 = vmul.f32 %v4776, %v4776
      %v4809 = vmul.f32 %v4777, %v4777
      %v4810 = vmul.f32 %v4778, %v4778
      %v4811 = vmul.f32 %v4779, %v4779
      %v4812 = vmul.f32 %v4780, %v4780
      %v4813 = vmul.f32 %v4781, %v4781
      %v4814 = vmul.f32 %v4782, %v4782
      %v4815 = vmul.f32 %v4783, %v4783
      %v4816 = vmul.f32 %v4784, %v4784
      %v4817 = vmul.f32 %v4785, %v4785
      %v4818 = vmul.f32 %v4786, %v4786
      %v4819 = vmul.f32 %v4787, %v4787
      %v4852 = vrot.slane %v4789, 7
      %v4853 = vsel %vm1321, %v4852, %v4788
      %v4854 = vrot.slane %v4790, 6
      %v4855 = vsel %vm1324, %v4854, %v4853
      %v4856 = vrot.slane %v4791, 5
      %v4857 = vsel %vm1327, %v4856, %v4855
      %v4858 = vrot.slane %v4792, 4
      %v4859 = vsel %vm1330, %v4858, %v4857
      %v4860 = vrot.slane %v4793, 3
      %v4861 = vsel %vm1333, %v4860, %v4859
      %v4862 = vrot.slane %v4794, 2
      %v4863 = vsel %vm1336, %v4862, %v4861
      %v4864 = vrot.slane %v4795, 1
      %v4865 = vsel %vm1339, %v4864, %v4863
      %v4866 = vrot.slane %v4797, 7
      %v4867 = vsel %vm1321, %v4866, %v4796
      %v4868 = vrot.slane %v4798, 6
      %v4869 = vsel %vm1324, %v4868, %v4867
      %v4870 = vrot.slane %v4799, 5
      %v4871 = vsel %vm1327, %v4870, %v4869
      %v4872 = vrot.slane %v4800, 4
      %v4873 = vsel %vm1330, %v4872, %v4871
      %v4874 = vrot.slane %v4801, 3
      %v4875 = vsel %vm1333, %v4874, %v4873
      %v4876 = vrot.slane %v4802, 2
      %v4877 = vsel %vm1336, %v4876, %v4875
      %v4878 = vrot.slane %v4803, 1
      %v4879 = vsel %vm1339, %v4878, %v4877
      %v4880 = vrot.slane %v4805, 7
      %v4881 = vsel %vm1321, %v4880, %v4804
      %v4882 = vrot.slane %v4806, 6
      %v4883 = vsel %vm1324, %v4882, %v4881
      %v4884 = vrot.slane %v4807, 5
      %v4885 = vsel %vm1327, %v4884, %v4883
      %v4886 = vrot.slane %v4808, 4
      %v4887 = vsel %vm1330, %v4886, %v4885
      %v4888 = vrot.slane %v4809, 3
      %v4889 = vsel %vm1333, %v4888, %v4887
      %v4890 = vrot.slane %v4810, 2
      %v4891 = vsel %vm1336, %v4890, %v4889
      %v4892 = vrot.slane %v4811, 1
      %v4893 = vsel %vm1339, %v4892, %v4891
      %v4894 = vrot.slane %v4813, 7
      %v4895 = vsel %vm1321, %v4894, %v4812
      %v4896 = vrot.slane %v4814, 6
      %v4897 = vsel %vm1324, %v4896, %v4895
      %v4898 = vrot.slane %v4815, 5
      %v4899 = vsel %vm1327, %v4898, %v4897
      %v4900 = vrot.slane %v4816, 4
      %v4901 = vsel %vm1330, %v4900, %v4899
      %v4902 = vrot.slane %v4817, 3
      %v4903 = vsel %vm1333, %v4902, %v4901
      %v4904 = vrot.slane %v4818, 2
      %v4905 = vsel %vm1336, %v4904, %v4903
      %v4906 = vrot.slane %v4819, 1
      %v4907 = vsel %vm1339, %v4906, %v4905
      %v4912 = vsel %vm961, %v4865, 0.0
      %4913 = vadd.xlane.f32.xlu0 %v4912
      %v4914 = vpop.xlane.xlu0 %4913
      %v4915 = vsel %vm961, %v4879, 0.0
      %4916 = vadd.xlane.f32.xlu0 %v4915
      %v4917 = vpop.xlane.xlu0 %4916
      %v4918 = vsel %vm961, %v4893, 0.0
      %4919 = vadd.xlane.f32.xlu0 %v4918
      %v4920 = vpop.xlane.xlu0 %4919
      %v4921 = vsel %vm961, %v4907, 0.0
      %4922 = vadd.xlane.f32.xlu0 %v4921
      %v4923 = vpop.xlane.xlu0 %4922
      %v4924 = vmul.f32 %v4914, %v3285
      %v4925 = vmul.f32 %v4917, %v3285
      %v4926 = vmul.f32 %v4920, %v3285
      %v4927 = vmul.f32 %v4923, %v3285
      %v4928 = vadd.f32 %v4924, 1e-05
      %v4929 = vadd.f32 %v4925, 1e-05
      %v4930 = vadd.f32 %v4926, 1e-05
      %v4931 = vadd.f32 %v4927, 1e-05
      %v4932 = vrsqrt.pop %v4928
      %v4933 = vmul.f32 %v4932, %v4928
      %v4934 = vmul.f32 %v4933, %v4932
      %v4935 = vmul.f32 0.5, %v4934
      %v4936 = vsub.f32 1.5, %v4935
      %v4937 = vmul.f32 %v4932, %v4936
      %vm4938 = vweird.f32 %v4928
      %vm4939 = vweird.f32 %v4932
      %vm4940 = vmor %vm4938, %vm4939
      %v4941 = vsel %vm4940, %v4932, %v4937
      %v4942 = vrsqrt.pop %v4929
      %v4943 = vmul.f32 %v4942, %v4929
      %v4944 = vmul.f32 %v4943, %v4942
      %v4945 = vmul.f32 0.5, %v4944
      %v4946 = vsub.f32 1.5, %v4945
      %v4947 = vmul.f32 %v4942, %v4946
      %vm4948 = vweird.f32 %v4929
      %vm4949 = vweird.f32 %v4942
      %vm4950 = vmor %vm4948, %vm4949
      %v4951 = vsel %vm4950, %v4942, %v4947
      %v4952 = vrsqrt.pop %v4930
      %v4953 = vmul.f32 %v4952, %v4930
      %v4954 = vmul.f32 %v4953, %v4952
      %v4955 = vmul.f32 0.5, %v4954
      %v4956 = vsub.f32 1.5, %v4955
      %v4957 = vmul.f32 %v4952, %v4956
      %vm4958 = vweird.f32 %v4930
      %vm4959 = vweird.f32 %v4952
      %vm4960 = vmor %vm4958, %vm4959
      %v4961 = vsel %vm4960, %v4952, %v4957
      %v4962 = vrsqrt.pop %v4931
      %v4963 = vmul.f32 %v4962, %v4931
      %v4964 = vmul.f32 %v4963, %v4962
      %v4965 = vmul.f32 0.5, %v4964
      %v4966 = vsub.f32 1.5, %v4965
      %v4967 = vmul.f32 %v4962, %v4966
      %vm4968 = vweird.f32 %v4931
      %vm4969 = vweird.f32 %v4962
      %vm4970 = vmor %vm4968, %vm4969
      %v4971 = vsel %vm4970, %v4962, %v4967
      %v4976 = vrot.slane %v4941, 1
      %v4977 = vrot.slane %v4941, 2
      %v4978 = vrot.slane %v4941, 3
      %v4979 = vrot.slane %v4941, 4
      %v4980 = vrot.slane %v4941, 5
      %v4981 = vrot.slane %v4941, 6
      %v4982 = vrot.slane %v4941, 7
      %v4983 = vrot.slane %v4951, 1
      %v4984 = vrot.slane %v4951, 2
      %v4985 = vrot.slane %v4951, 3
      %v4986 = vrot.slane %v4951, 4
      %v4987 = vrot.slane %v4951, 5
      %v4988 = vrot.slane %v4951, 6
      %v4989 = vrot.slane %v4951, 7
      %v4990 = vrot.slane %v4961, 1
      %v4991 = vrot.slane %v4961, 2
      %v4992 = vrot.slane %v4961, 3
      %v4993 = vrot.slane %v4961, 4
      %v4994 = vrot.slane %v4961, 5
      %v4995 = vrot.slane %v4961, 6
      %v4996 = vrot.slane %v4961, 7
      %v4997 = vrot.slane %v4971, 1
      %v4998 = vrot.slane %v4971, 2
      %v4999 = vrot.slane %v4971, 3
      %v5000 = vrot.slane %v4971, 4
      %v5001 = vrot.slane %v4971, 5
      %v5002 = vrot.slane %v4971, 6
      %v5003 = vrot.slane %v4971, 7
      %v5036 = vmul.f32 %v4756, %v4941
      %v5037 = vmul.f32 %v4757, %v4976
      %v5038 = vmul.f32 %v4758, %v4977
      %v5039 = vmul.f32 %v4759, %v4978
      %v5040 = vmul.f32 %v4760, %v4979
      %v5041 = vmul.f32 %v4761, %v4980
      %v5042 = vmul.f32 %v4762, %v4981
      %v5043 = vmul.f32 %v4763, %v4982
      %v5044 = vmul.f32 %v4764, %v4951
      %v5045 = vmul.f32 %v4765, %v4983
      %v5046 = vmul.f32 %v4766, %v4984
      %v5047 = vmul.f32 %v4767, %v4985
      %v5048 = vmul.f32 %v4768, %v4986
      %v5049 = vmul.f32 %v4769, %v4987
      %v5050 = vmul.f32 %v4770, %v4988
      %v5051 = vmul.f32 %v4771, %v4989
      %v5052 = vmul.f32 %v4772, %v4961
      %v5053 = vmul.f32 %v4773, %v4990
      %v5054 = vmul.f32 %v4774, %v4991
      %v5055 = vmul.f32 %v4775, %v4992
      %v5056 = vmul.f32 %v4776, %v4993
      %v5057 = vmul.f32 %v4777, %v4994
      %v5058 = vmul.f32 %v4778, %v4995
      %v5059 = vmul.f32 %v4779, %v4996
      %v5060 = vmul.f32 %v4780, %v4971
      %v5061 = vmul.f32 %v4781, %v4997
      %v5062 = vmul.f32 %v4782, %v4998
      %v5063 = vmul.f32 %v4783, %v4999
      %v5064 = vmul.f32 %v4784, %v5000
      %v5065 = vmul.f32 %v4785, %v5001
      %v5066 = vmul.f32 %v4786, %v5002
      %v5067 = vmul.f32 %v4787, %v5003
      %v5069 = vperm.slane %v4582, 0
      %v5071 = vmul.f32 %v5036, %v5069
      %v5072 = vmul.f32 %v5037, %v5069
      %v5073 = vmul.f32 %v5038, %v5069
      %v5074 = vmul.f32 %v5039, %v5069
      %v5075 = vmul.f32 %v5040, %v5069
      %v5076 = vmul.f32 %v5041, %v5069
      %v5077 = vmul.f32 %v5042, %v5069
      %v5078 = vmul.f32 %v5043, %v5069
      %v5079 = vmul.f32 %v5044, %v5069
      %v5080 = vmul.f32 %v5045, %v5069
      %v5081 = vmul.f32 %v5046, %v5069
      %v5082 = vmul.f32 %v5047, %v5069
      %v5083 = vmul.f32 %v5048, %v5069
      %v5084 = vmul.f32 %v5049, %v5069
      %v5085 = vmul.f32 %v5050, %v5069
      %v5086 = vmul.f32 %v5051, %v5069
      %v5087 = vmul.f32 %v5052, %v5069
      %v5088 = vmul.f32 %v5053, %v5069
      %v5089 = vmul.f32 %v5054, %v5069
      %v5090 = vmul.f32 %v5055, %v5069
      %v5091 = vmul.f32 %v5056, %v5069
      %v5092 = vmul.f32 %v5057, %v5069
      %v5093 = vmul.f32 %v5058, %v5069
      %v5094 = vmul.f32 %v5059, %v5069
      %v5095 = vmul.f32 %v5060, %v5069
      %v5096 = vmul.f32 %v5061, %v5069
      %v5097 = vmul.f32 %v5062, %v5069
      %v5098 = vmul.f32 %v5063, %v5069
      %v5099 = vmul.f32 %v5064, %v5069
      %v5100 = vmul.f32 %v5065, %v5069
      %v5101 = vmul.f32 %v5066, %v5069
      %v5102 = vmul.f32 %v5067, %v5069
      %v5104 = vperm.slane %v4583, 0
      %v5106 = vadd.f32 %v5071, %v5104
      %v5107 = vadd.f32 %v5072, %v5104
      %v5108 = vadd.f32 %v5073, %v5104
      %v5109 = vadd.f32 %v5074, %v5104
      %v5110 = vadd.f32 %v5075, %v5104
      %v5111 = vadd.f32 %v5076, %v5104
      %v5112 = vadd.f32 %v5077, %v5104
      %v5113 = vadd.f32 %v5078, %v5104
      %v5114 = vadd.f32 %v5079, %v5104
      %v5115 = vadd.f32 %v5080, %v5104
      %v5116 = vadd.f32 %v5081, %v5104
      %v5117 = vadd.f32 %v5082, %v5104
      %v5118 = vadd.f32 %v5083, %v5104
      %v5119 = vadd.f32 %v5084, %v5104
      %v5120 = vadd.f32 %v5085, %v5104
      %v5121 = vadd.f32 %v5086, %v5104
      %v5122 = vadd.f32 %v5087, %v5104
      %v5123 = vadd.f32 %v5088, %v5104
      %v5124 = vadd.f32 %v5089, %v5104
      %v5125 = vadd.f32 %v5090, %v5104
      %v5126 = vadd.f32 %v5091, %v5104
      %v5127 = vadd.f32 %v5092, %v5104
      %v5128 = vadd.f32 %v5093, %v5104
      %v5129 = vadd.f32 %v5094, %v5104
      %v5130 = vadd.f32 %v5095, %v5104
      %v5131 = vadd.f32 %v5096, %v5104
      %v5132 = vadd.f32 %v5097, %v5104
      %v5133 = vadd.f32 %v5098, %v5104
      %v5134 = vadd.f32 %v5099, %v5104
      %v5135 = vadd.f32 %v5100, %v5104
      %v5136 = vadd.f32 %v5101, %v5104
      %v5137 = vadd.f32 %v5102, %v5104
      %v5138 = vpack.c.bf16 %v5106, %v5106
      %v5139 = vpack.c.bf16 %v5107, %v5107
      %v5140 = vpack.c.bf16 %v5108, %v5108
      %v5141 = vpack.c.bf16 %v5109, %v5109
      %v5142 = vpack.c.bf16 %v5110, %v5110
      %v5143 = vpack.c.bf16 %v5111, %v5111
      %v5144 = vpack.c.bf16 %v5112, %v5112
      %v5145 = vpack.c.bf16 %v5113, %v5113
      %v5146 = vpack.c.bf16 %v5114, %v5114
      %v5147 = vpack.c.bf16 %v5115, %v5115
      %v5148 = vpack.c.bf16 %v5116, %v5116
      %v5149 = vpack.c.bf16 %v5117, %v5117
      %v5150 = vpack.c.bf16 %v5118, %v5118
      %v5151 = vpack.c.bf16 %v5119, %v5119
      %v5152 = vpack.c.bf16 %v5120, %v5120
      %v5153 = vpack.c.bf16 %v5121, %v5121
      %v5154 = vpack.c.bf16 %v5122, %v5122
      %v5155 = vpack.c.bf16 %v5123, %v5123
      %v5156 = vpack.c.bf16 %v5124, %v5124
      %v5157 = vpack.c.bf16 %v5125, %v5125
      %v5158 = vpack.c.bf16 %v5126, %v5126
      %v5159 = vpack.c.bf16 %v5127, %v5127
      %v5160 = vpack.c.bf16 %v5128, %v5128
      %v5161 = vpack.c.bf16 %v5129, %v5129
      %v5162 = vpack.c.bf16 %v5130, %v5130
      %v5163 = vpack.c.bf16 %v5131, %v5131
      %v5164 = vpack.c.bf16 %v5132, %v5132
      %v5165 = vpack.c.bf16 %v5133, %v5133
      %v5166 = vpack.c.bf16 %v5134, %v5134
      %v5167 = vpack.c.bf16 %v5135, %v5135
      %v5168 = vpack.c.bf16 %v5136, %v5136
      %v5169 = vpack.c.bf16 %v5137, %v5137
      %v5170 = vld [vmem:[%s20] sm:$0xf]
      %v5171 = vld [vmem:[%s20 + $0x4] sm:$0xf]
      %v5172 = vld [vmem:[%s20 + $0x8] sm:$0xf]
      %v5173 = vld [vmem:[%s20 + $0xc] sm:$0xf]
      %v5174 = vld [vmem:[%s20 + $0x10] sm:$0xf]
      %v5175 = vld [vmem:[%s20 + $0x14] sm:$0xf]
      %v5176 = vld [vmem:[%s20 + $0x18] sm:$0xf]
      %v5177 = vld [vmem:[%s20 + $0x1c] sm:$0xf]
      %v5178 = vld [vmem:[%s20 + $0x20] sm:$0xf]
      %v5179 = vld [vmem:[%s20 + $0x24] sm:$0xf]
      %v5180 = vld [vmem:[%s20 + $0x28] sm:$0xf]
      %v5181 = vld [vmem:[%s20 + $0x2c] sm:$0xf]
      %v5182 = vld [vmem:[%s21] sm:$0x1]
      %v5184 = vperm.slane %v5182, 0
      %v5218 = vunpack.c.l.b16 %v5138
      %v5219 = vunpack.c.l.b16 %v5139
      %v5220 = vunpack.c.l.b16 %v5140
      %v5221 = vunpack.c.l.b16 %v5141
      %v5222 = vunpack.c.l.b16 %v5142
      %v5223 = vunpack.c.l.b16 %v5143
      %v5224 = vunpack.c.l.b16 %v5144
      %v5225 = vunpack.c.l.b16 %v5145
      %v5226 = vunpack.c.l.b16 %v5146
      %v5227 = vunpack.c.l.b16 %v5147
      %v5228 = vunpack.c.l.b16 %v5148
      %v5229 = vunpack.c.l.b16 %v5149
      %v5230 = vunpack.c.l.b16 %v5150
      %v5231 = vunpack.c.l.b16 %v5151
      %v5232 = vunpack.c.l.b16 %v5152
      %v5233 = vunpack.c.l.b16 %v5153
      %v5234 = vunpack.c.l.b16 %v5154
      %v5235 = vunpack.c.l.b16 %v5155
      %v5236 = vunpack.c.l.b16 %v5156
      %v5237 = vunpack.c.l.b16 %v5157
      %v5238 = vunpack.c.l.b16 %v5158
      %v5239 = vunpack.c.l.b16 %v5159
      %v5240 = vunpack.c.l.b16 %v5160
      %v5241 = vunpack.c.l.b16 %v5161
      %v5242 = vunpack.c.l.b16 %v5162
      %v5243 = vunpack.c.l.b16 %v5163
      %v5244 = vunpack.c.l.b16 %v5164
      %v5245 = vunpack.c.l.b16 %v5165
      %v5246 = vunpack.c.l.b16 %v5166
      %v5247 = vunpack.c.l.b16 %v5167
      %v5248 = vunpack.c.l.b16 %v5168
      %v5249 = vunpack.c.l.b16 %v5169
      %v5250 = vrot.slane %v5219, 7
      %v5251 = vsel %vm1321, %v5250, %v5218
      %v5252 = vrot.slane %v5220, 6
      %v5253 = vsel %vm1324, %v5252, %v5251
      %v5254 = vrot.slane %v5221, 5
      %v5255 = vsel %vm1327, %v5254, %v5253
      %v5256 = vrot.slane %v5222, 4
      %v5257 = vsel %vm1330, %v5256, %v5255
      %v5258 = vrot.slane %v5223, 3
      %v5259 = vsel %vm1333, %v5258, %v5257
      %v5260 = vrot.slane %v5224, 2
      %v5261 = vsel %vm1336, %v5260, %v5259
      %v5262 = vrot.slane %v5225, 1
      %v5263 = vsel %vm1339, %v5262, %v5261
      %v5264 = vrot.slane %v5227, 7
      %v5265 = vsel %vm1321, %v5264, %v5226
      %v5266 = vrot.slane %v5228, 6
      %v5267 = vsel %vm1324, %v5266, %v5265
      %v5268 = vrot.slane %v5229, 5
      %v5269 = vsel %vm1327, %v5268, %v5267
      %v5270 = vrot.slane %v5230, 4
      %v5271 = vsel %vm1330, %v5270, %v5269
      %v5272 = vrot.slane %v5231, 3
      %v5273 = vsel %vm1333, %v5272, %v5271
      %v5274 = vrot.slane %v5232, 2
      %v5275 = vsel %vm1336, %v5274, %v5273
      %v5276 = vrot.slane %v5233, 1
      %v5277 = vsel %vm1339, %v5276, %v5275
      %v5278 = vrot.slane %v5235, 7
      %v5279 = vsel %vm1321, %v5278, %v5234
      %v5280 = vrot.slane %v5236, 6
      %v5281 = vsel %vm1324, %v5280, %v5279
      %v5282 = vrot.slane %v5237, 5
      %v5283 = vsel %vm1327, %v5282, %v5281
      %v5284 = vrot.slane %v5238, 4
      %v5285 = vsel %vm1330, %v5284, %v5283
      %v5286 = vrot.slane %v5239, 3
      %v5287 = vsel %vm1333, %v5286, %v5285
      %v5288 = vrot.slane %v5240, 2
      %v5289 = vsel %vm1336, %v5288, %v5287
      %v5290 = vrot.slane %v5241, 1
      %v5291 = vsel %vm1339, %v5290, %v5289
      %v5292 = vrot.slane %v5243, 7
      %v5293 = vsel %vm1321, %v5292, %v5242
      %v5294 = vrot.slane %v5244, 6
      %v5295 = vsel %vm1324, %v5294, %v5293
      %v5296 = vrot.slane %v5245, 5
      %v5297 = vsel %vm1327, %v5296, %v5295
      %v5298 = vrot.slane %v5246, 4
      %v5299 = vsel %vm1330, %v5298, %v5297
      %v5300 = vrot.slane %v5247, 3
      %v5301 = vsel %vm1333, %v5300, %v5299
      %v5302 = vrot.slane %v5248, 2
      %v5303 = vsel %vm1336, %v5302, %v5301
      %v5304 = vrot.slane %v5249, 1
      %v5305 = vsel %vm1339, %v5304, %v5303
      %v5306 = vpack.c.b16 %v5277, %v5263
      %v5307 = vpack.c.b16 %v5305, %v5291
      %v5320 = vunpack.c.l.b16 %v5170
      %v5321 = vunpack.c.l.b16 %v5171
      %v5322 = vunpack.c.l.b16 %v5172
      %v5323 = vunpack.c.l.b16 %v5173
      %v5324 = vunpack.c.l.b16 %v5174
      %v5325 = vunpack.c.l.b16 %v5175
      %v5326 = vunpack.c.l.b16 %v5176
      %v5327 = vunpack.c.l.b16 %v5177
      %v5328 = vunpack.c.l.b16 %v5178
      %v5329 = vunpack.c.l.b16 %v5179
      %v5330 = vunpack.c.l.b16 %v5180
      %v5331 = vunpack.c.l.b16 %v5181
      %v5332 = vpack.c.b16 %v5321, %v5320
      %v5333 = vpack.c.b16 %v5323, %v5322
      %v5334 = vpack.c.b16 %v5325, %v5324
      %v5335 = vpack.c.b16 %v5327, %v5326
      %v5336 = vpack.c.b16 %v5329, %v5328
      %v5337 = vpack.c.b16 %v5331, %v5330
      %v5345 = vsel %vm961, %v5306, 0
      %v5348 = vsel %vm961, %v5307, 0
      %5350 = vmatpush.bf16.msra.mxu0 0
      %5351 = vmatpush.bf16.msra.mxu0 0
      %5352 = vmatpush.bf16.msra.mxu0 %v5337
      %5353 = vmatpush.bf16.msra.mxu0 %v5336
      %5354 = vmatpush.bf16.msra.mxu0 %v5335
      %5355 = vmatpush.bf16.msra.mxu0 %v5334
      %5356 = vmatpush.bf16.msra.mxu0 %v5333
      %5357 = vmatpush.bf16.msra.mxu0 %v5332
      %5358 = vmatmul.bf16.gmra.mxu0 %v5345
      %v5359 = vpop.f32.mrf.mxu0
      %v5360 = vadd.f32 %v5184, %v5359
      %v5361 = vpop.f32.mrf.mxu0
      %v5362 = vadd.f32 %v5184, %v5361
      %5363 = vmatmul.bf16.gmra.mxu0 %v5348
      %v5364 = vpop.f32.mrf.mxu0
      %v5365 = vadd.f32 %v5184, %v5364
      %v5366 = vpop.f32.mrf.mxu0
      %v5367 = vadd.f32 %v5184, %v5366
      %5368 = vdwg.mxu0
      %v5369 = vmax.f32 %v5360, 0.0
      %v5370 = vmax.f32 %v5362, 0.0
      %v5371 = vmax.f32 %v5365, 0.0
      %v5372 = vmax.f32 %v5367, 0.0
      %v5373 = vld [vmem:[%s22] sm:$0xff]
      %v5374 = vld [vmem:[%s22 + $0x8] sm:$0xff]
      %v5375 = vld [vmem:[%s22 + $0x10] sm:$0xff]
      %v5376 = vld [vmem:[%s22 + $0x18] sm:$0xff]
      %v5377 = vld [vmem:[%s22 + $0x20] sm:$0xff]
      %v5378 = vld [vmem:[%s22 + $0x28] sm:$0xff]
      %v5379 = vld [vmem:[%s22 + $0x30] sm:$0xff]
      %v5380 = vld [vmem:[%s22 + $0x38] sm:$0xff]
      %v5381 = vld [vmem:[%s22 + $0x40] sm:$0xff]
      %v5382 = vld [vmem:[%s22 + $0x48] sm:$0xff]
      %v5383 = vld [vmem:[%s22 + $0x50] sm:$0xff]
      %v5384 = vld [vmem:[%s22 + $0x58] sm:$0xff]
      %v5385 = vld [vmem:[%s22 + $0x60] sm:$0xff]
      %v5386 = vld [vmem:[%s22 + $0x68] sm:$0xff]
      %v5387 = vld [vmem:[%s22 + $0x70] sm:$0xff]
      %v5388 = vld [vmem:[%s22 + $0x78] sm:$0xff]
      %v5389 = vld [vmem:[%s23] sm:$0x1]
      %v5391 = vperm.slane %v5389, 0
      %5393 = vmatpush.msra.mxu0 %v5388
      %5394 = vmatpush.msra.mxu0 %v5387
      %5395 = vmatpush.msra.mxu0 %v5386
      %5396 = vmatpush.msra.mxu0 %v5385
      %5397 = vmatpush.msra.mxu0 %v5384
      %5398 = vmatpush.msra.mxu0 %v5383
      %5399 = vmatpush.msra.mxu0 %v5382
      %5400 = vmatpush.msra.mxu0 %v5381
      %5401 = vmatpush.msra.mxu0 %v5380
      %5402 = vmatpush.msra.mxu0 %v5379
      %5403 = vmatpush.msra.mxu0 %v5378
      %5404 = vmatpush.msra.mxu0 %v5377
      %5405 = vmatpush.msra.mxu0 %v5376
      %5406 = vmatpush.msra.mxu0 %v5375
      %5407 = vmatpush.msra.mxu0 %v5374
      %5408 = vmatpush.msra.mxu0 %v5373
      %5409 = vmatmul.f32.gmra.mxu0 %v5369
      %v5410 = vpop.f32.mrf.mxu0
      %v5411 = vadd.f32 %v5391, %v5410
      %5412 = vmatmul.f32.gmra.mxu0 %v5370
      %v5413 = vpop.f32.mrf.mxu0
      %v5414 = vadd.f32 %v5391, %v5413
      %5415 = vmatmul.f32.gmra.mxu0 %v5371
      %v5416 = vpop.f32.mrf.mxu0
      %v5417 = vadd.f32 %v5391, %v5416
      %5418 = vmatmul.f32.gmra.mxu0 %v5372
      %v5419 = vpop.f32.mrf.mxu0
      %v5420 = vadd.f32 %v5391, %v5419
      %5421 = vdwg.mxu0
      %v5422 = vmax.f32 %v5411, 0.0
      %v5423 = vmax.f32 %v5414, 0.0
      %v5424 = vmax.f32 %v5417, 0.0
      %v5425 = vmax.f32 %v5420, 0.0
      %v5426 = vld [vmem:[%s24] sm:$0xff]
      %v5427 = vld [vmem:[%s24 + $0x8] sm:$0xff]
      %v5428 = vld [vmem:[%s24 + $0x10] sm:$0xff]
      %v5429 = vld [vmem:[%s24 + $0x18] sm:$0xff]
      %v5430 = vld [vmem:[%s25] sm:$0x1]
      %v5432 = vperm.slane %v5430, 0
      %vm5434 = vcmask 261120
      %v5436 = vsel %vm5434, %v5422, 0
      %v5439 = vsel %vm5434, %v5423, 0
      %v5442 = vsel %vm5434, %v5424, 0
      %v5445 = vsel %vm5434, %v5425, 0
      %5447 = vmatpush.msra.mxu0 0.0
      %5448 = vmatpush.msra.mxu0 0.0
      %5449 = vmatpush.msra.mxu0 0.0
      %5450 = vmatpush.msra.mxu0 0.0
      %5451 = vmatpush.msra.mxu0 0.0
      %5452 = vmatpush.msra.mxu0 0.0
      %5453 = vmatpush.msra.mxu0 0.0
      %5454 = vmatpush.msra.mxu0 0.0
      %5455 = vmatpush.msra.mxu0 0.0
      %5456 = vmatpush.msra.mxu0 0.0
      %5457 = vmatpush.msra.mxu0 0.0
      %5458 = vmatpush.msra.mxu0 0.0
      %5459 = vmatpush.msra.mxu0 %v5429
      %5460 = vmatpush.msra.mxu0 %v5428
      %5461 = vmatpush.msra.mxu0 %v5427
      %5462 = vmatpush.msra.mxu0 %v5426
      %5463 = vmatmul.f32.gmra.mxu0 %v5436
      %v5464 = vpop.f32.mrf.mxu0
      %v5465 = vadd.f32 %v5432, %v5464
      %5466 = vmatmul.f32.gmra.mxu0 %v5439
      %v5467 = vpop.f32.mrf.mxu0
      %v5468 = vadd.f32 %v5432, %v5467
      %5469 = vmatmul.f32.gmra.mxu0 %v5442
      %v5470 = vpop.f32.mrf.mxu0
      %v5471 = vadd.f32 %v5432, %v5470
      %5472 = vmatmul.f32.gmra.mxu0 %v5445
      %v5473 = vpop.f32.mrf.mxu0
      %v5474 = vadd.f32 %v5432, %v5473
      %5475 = vdwg.mxu0
      %vm5476 = vcmask 23552
      %5477 = vst.msk [vmem:[%s793] sm:$0xff] %vm5476, %v5465
      %5478 = vst.msk [vmem:[%s793 + $0x8] sm:$0xff] %vm5476, %v5468
      %5479 = vst.msk [vmem:[%s793 + $0x10] sm:$0xff] %vm5476, %v5471
      %5480 = vst.msk [vmem:[%s793 + $0x18] sm:$0xff] %vm5476, %v5474
      %s5481 = smul.u32 4, %s37
      %p5482 = scmp.lt.s32.totalorder %s5481, 15
      %s5483 = scalar_select %p5482, %s5481, 15
      %s5484 = smul.addr %s5483, 8
      %s5485 = scalar_lea.vmem %s26, %s5484
      // Predicated region
      $region125: #{tpu_custom_call.1} parent=123 // pred_check
        %p5486 = pneg %p606
      $region126: #{tpu_custom_call.1} parent=123 // pred_check_branch
        %5488 = sbr.rel (%p5486) target = $region128
      $region127: #{tpu_custom_call.1} parent=123 // pred_region
        %s5489 = smul.u32 4, %s37
      $region128: #{tpu_custom_call.1} parent=123 // pred_fallthru
        _
    $region124: #{tpu_custom_call.1} parent=5 // pred_fallthru
      _
    %p5490 = scmp.le.s32.totalorder 2, %s32
    // Predicated region
    $region129: #{tpu_custom_call.1} parent=5 // pred_check
      %p5491 = pneg %p5490
    $region130: #{tpu_custom_call.1} parent=5 // pred_check_branch
      %5493 = sbr.rel (%p5491) target = $region132
    $region131: #{tpu_custom_call.1} parent=5 // pred_region
      %s5494 = ssub.s32 %s32, 2
      // Predicated region
      $region133: #{tpu_custom_call.1} parent=131 // pred_check
        %p5495 = pneg %p612
      $region134: #{tpu_custom_call.1} parent=131 // pred_check_branch
        %5497 = sbr.rel (%p5495) target = $region136
      $region135: #{tpu_custom_call.1} parent=131 // pred_region
        %s5498 = smul.u32 4, %s38
        %p5499 = scmp.lt.s32.totalorder %s5498, 15
        %s5500 = scalar_select %p5499, %s5498, 15
        %s5501 = smul.addr %s5500, 8
        %s5502 = scalar_lea.vmem %s26, %s5501
      $region136: #{tpu_custom_call.1} parent=131 // pred_fallthru
        _
    $region132: #{tpu_custom_call.1} parent=5 // pred_fallthru
      _
  $region6: #{tpu_custom_call.1} parent=0 // loop_footer
    %s36 = sadd.s32 1, %s32
  $region7: #{tpu_custom_call.1} parent=0 // loop_footer_branch
    %31 = sbr.rel target = $region3
  $region8: #{tpu_custom_call.1} parent=0 // loop_exit
    _

</llo_original>
